<compile_context>
chip_gen: v5e
topology: v5e:2x2
jax: 0.10.0
libtpu: 0.0.40
codegen_flags: <defaults>
</compile_context>

<pallas_src>
import functools

import jax
import jax.numpy as jnp
from jax.experimental import pallas as pl
from jax.experimental.pallas import tpu as pltpu


def _round_up(v, m):
    return (v + m - 1) // m * m


def _pad2(a, rows, cols, dtype):
    out = jnp.zeros((rows, cols), dtype)
    return out.at[: a.shape[0], : a.shape[1]].set(a.astype(dtype))


# ---------------------------------------------------------------------------
# Kernel: grid = (phase, graph).  phase 0/1/2 = SAGE layers 1/2/3, phase 3 =
# final Linear + ReLU.  Scratch a1/a2/a3 hold per-graph activations across
# phases; stat holds per-layer sum / sum-of-squares for BatchNorm.
# ---------------------------------------------------------------------------
def _gnn_kernel(x_ref, adj_ref,
                w1r_ref, w1o_ref, b1_ref, g1_ref, be1_ref,
                w2r_ref, w2o_ref, b2_ref, g2_ref, be2_ref,
                w3r_ref, w3o_ref, b3_ref, g3_ref, be3_ref,
                wa_ref, wb_ref, wc_ref, lb_ref,
                o_ref,
                a1_ref, a2_ref, a3_ref, stat_ref,
                *, deg_col_in, deg_col_hid, total_rows, eps):
    p = pl.program_id(0)          # phase
    b = pl.program_id(1)          # graph index

    @pl.when(jnp.logical_and(p == 0, b == 0))
    def _init_stats():
        stat_ref[...] = jnp.zeros_like(stat_ref)

    inv_rows = 1.0 / float(total_rows)

    def set_deg_col(xb, col):
        # Put a constant 1.0 into an (otherwise zero) padding column so the
        # aggregation matmul also produces the node degrees.
        lane = jax.lax.broadcasted_iota(jnp.int32, xb.shape, 1)
        return jnp.where(lane == col, jnp.asarray(1.0, xb.dtype), xb)

    def sage(x_bf, deg_col, wr_ref, wo_ref, bias_ref):
        # x_bf: (N, Cin_pad) bf16 with the 1.0 degree column at `deg_col`.
        adj_b = adj_ref[0]                                           # (N, N) bf16
        agg = jnp.dot(adj_b, x_bf, preferred_element_type=jnp.float32)
        deg = agg[:, deg_col:deg_col + 1]                            # (N, 1) exact
        agg = agg * (1.0 / jnp.maximum(deg, 1.0))                    # exact recip
        pre = (jnp.dot(agg.astype(jnp.bfloat16), wr_ref[...],
                       preferred_element_type=jnp.float32)
               + jnp.dot(x_bf, wo_ref[...],
                         preferred_element_type=jnp.float32)
               + bias_ref[...])
        return jnp.maximum(pre, 0.0)                                 # (N, Cout) f32

    def accum_stats(y, row):
        c = y.shape[1]
        stat_ref[row:row + 1, :c] = (stat_ref[row:row + 1, :c]
                                     + jnp.sum(y, axis=0, keepdims=True))
        stat_ref[row + 1:row + 2, :c] = (stat_ref[row + 1:row + 2, :c]
                                         + jnp.sum(y * y, axis=0, keepdims=True))

    def bn(y, row, g_ref, be_ref):
        c = y.shape[1]
        mean = stat_ref[row:row + 1, :c] * inv_rows                  # (1, C)
        var = jnp.maximum(
            stat_ref[row + 1:row + 2, :c] * inv_rows - mean * mean, 0.0)
        rstd = jax.lax.rsqrt(var + eps)
        return (y - mean) * rstd * g_ref[...] + be_ref[...]

    @pl.when(p == 0)
    def _layer1():
        y1 = sage(x_ref[0], deg_col_in, w1r_ref, w1o_ref, b1_ref)
        a1_ref[b] = y1
        accum_stats(y1, 0)

    @pl.when(p == 1)
    def _layer2():
        x1 = bn(a1_ref[b], 0, g1_ref, be1_ref)
        a1_ref[b] = x1                                   # keep normalized for phase 3
        y2 = sage(set_deg_col(x1.astype(jnp.bfloat16), deg_col_hid),
                  deg_col_hid, w2r_ref, w2o_ref, b2_ref)
        a2_ref[b] = y2
        accum_stats(y2, 2)

    @pl.when(p == 2)
    def _layer3():
        x2 = bn(a2_ref[b], 2, g2_ref, be2_ref)
        a2_ref[b] = x2
        y3 = sage(set_deg_col(x2.astype(jnp.bfloat16), deg_col_hid),
                  deg_col_hid, w3r_ref, w3o_ref, b3_ref)
        a3_ref[b] = y3
        accum_stats(y3, 4)

    @pl.when(p == 3)
    def _final_linear():
        x1 = a1_ref[b].astype(jnp.bfloat16)
        x2 = a2_ref[b].astype(jnp.bfloat16)
        x3 = bn(a3_ref[b], 4, g3_ref, be3_ref).astype(jnp.bfloat16)
        out = (jnp.dot(x1, wa_ref[...], preferred_element_type=jnp.float32)
               + jnp.dot(x2, wb_ref[...], preferred_element_type=jnp.float32)
               + jnp.dot(x3, wc_ref[...], preferred_element_type=jnp.float32)
               + lb_ref[...])
        o_ref[0] = jnp.maximum(out, 0.0)                 # lane-dense 128-wide store


# ---------------------------------------------------------------------------
# Synthetic parameters in the PyTorch module's logical layout.
# ---------------------------------------------------------------------------
def init_params(key, in_channels, hidden_channels, out_channels):
    I, H, O = in_channels, hidden_channels, out_channels
    ks = jax.random.split(key, 7)
    s = 0.1

    def w(k, *shape):
        return jax.random.normal(k, shape, jnp.float32) * s

    return {
        # DenseSAGEConv i: out = lin_rel(agg) + lin_root(x); weights (Cout, Cin).
        "conv1_w_rel": w(ks[0], H, I), "conv1_w_root": w(ks[1], H, I),
        "conv1_b": jnp.zeros((H,), jnp.float32),
        "conv2_w_rel": w(ks[2], H, H), "conv2_w_root": w(ks[3], H, H),
        "conv2_b": jnp.zeros((H,), jnp.float32),
        "conv3_w_rel": w(ks[4], O, H), "conv3_w_root": w(ks[5], O, H),
        "conv3_b": jnp.zeros((O,), jnp.float32),
        # BatchNorm1d affine (PyTorch default init: gamma=1, beta=0).
        "bn1_g": jnp.ones((H,), jnp.float32), "bn1_b": jnp.zeros((H,), jnp.float32),
        "bn2_g": jnp.ones((H,), jnp.float32), "bn2_b": jnp.zeros((H,), jnp.float32),
        "bn3_g": jnp.ones((O,), jnp.float32), "bn3_b": jnp.zeros((O,), jnp.float32),
        # Final Linear(2H + O -> O).
        "lin_w": w(ks[6], O, 2 * H + O),
        "lin_b": jnp.zeros((O,), jnp.float32),
    }


# ---------------------------------------------------------------------------
# Forward wrapper: pad to lane-dense shapes, cast matmul operands to bf16,
# launch the single fused pallas_call, slice the padding back off.
# ---------------------------------------------------------------------------
def gnn_forward(params, x, adj, mask=None):
    # TODO(synk): mask=None path only; a node mask would also have to be
    # excluded from the BatchNorm batch statistics, not just the aggregation.
    assert mask is None
    B, N, I = x.shape
    H = params["conv1_w_rel"].shape[0]
    O = params["conv3_w_rel"].shape[0]
    # TODO(synk): N not a multiple of 8 would need row masking in both the
    # aggregation and the BN statistics; not supported here.
    assert N % 8 == 0

    # Lane-dense channel widths; the +1 reserves a padding column that carries
    # the constant-1 "degree" feature through the aggregation matmul.
    Ip = _round_up(I + 1, 128)
    Hp = _round_up(H + 1, 128)
    Op = _round_up(O, 128)
    Cs = max(Hp, Op)

    f32, bf16 = jnp.float32, jnp.bfloat16

    def wT(name, rows, cols):
        return _pad2(params[name].T, rows, cols, bf16)

    def vec(name, cols):
        return _pad2(params[name][None, :], 1, cols, f32)

    w1r, w1o = wT("conv1_w_rel", Ip, Hp), wT("conv1_w_root", Ip, Hp)
    w2r, w2o = wT("conv2_w_rel", Hp, Hp), wT("conv2_w_root", Hp, Hp)
    w3r, w3o = wT("conv3_w_rel", Hp, Op), wT("conv3_w_root", Hp, Op)
    b1, g1, be1 = vec("conv1_b", Hp), vec("bn1_g", Hp), vec("bn1_b", Hp)
    b2, g2, be2 = vec("conv2_b", Hp), vec("bn2_g", Hp), vec("bn2_b", Hp)
    b3, g3, be3 = vec("conv3_b", Op), vec("bn3_g", Op), vec("bn3_b", Op)
    lw = params["lin_w"]                                   # (O, 2H + O)
    wa = _pad2(lw[:, :H].T, Hp, Op, bf16)
    wb = _pad2(lw[:, H:2 * H].T, Hp, Op, bf16)
    wc = _pad2(lw[:, 2 * H:].T, Op, Op, bf16)
    lb = vec("lin_b", Op)

    # bf16 MXU operands; degree column rides in the channel padding of x0.
    x_p = jnp.zeros((B, N, Ip), bf16).at[:, :, :I].set(x.astype(bf16))
    x_p = x_p.at[:, :, I].set(1.0)
    adj_p = adj.astype(bf16)

    kern = functools.partial(_gnn_kernel, deg_col_in=I, deg_col_hid=H,
                             total_rows=B * N, eps=1e-5)

    n_phases = 4
    # Streamed tensors: fetch a fresh per-graph block only in the phases that
    # read it; pin the block index otherwise so Pallas skips the DMA.
    x_map = lambda p, b: (jnp.where(p == 0, b, B - 1), 0, 0)
    adj_map = lambda p, b: (jnp.where(p == n_phases - 1, B - 1, b), 0, 0)
    out_map = lambda p, b: (jnp.where(p == n_phases - 1, b, 0), 0, 0)
    full = lambda p, b: (0, 0)

    def wspec(arr):
        return pl.BlockSpec(arr.shape, full)

    in_specs = [
        pl.BlockSpec((1, N, Ip), x_map),
        pl.BlockSpec((1, N, N), adj_map),
        wspec(w1r), wspec(w1o), wspec(b1), wspec(g1), wspec(be1),
        wspec(w2r), wspec(w2o), wspec(b2), wspec(g2), wspec(be2),
        wspec(w3r), wspec(w3o), wspec(b3), wspec(g3), wspec(be3),
        wspec(wa), wspec(wb), wspec(wc), wspec(lb),
    ]

    args = (x_p, adj_p, w1r, w1o, b1, g1, be1, w2r, w2o, b2, g2, be2,
            w3r, w3o, b3, g3, be3, wa, wb, wc, lb)

    flops = 0
    for cin, cout in ((Ip, Hp), (Hp, Hp), (Hp, Op)):
        flops += B * (2 * N * N * cin + 2 * 2 * N * cin * cout)
    flops += B * 2 * N * (2 * Hp * Op + Op * Op)
    bytes_accessed = (sum(int(a.size) * a.dtype.itemsize for a in args)
                      + B * N * Op * 4)

    out_p = pl.pallas_call(
        kern,
        out_shape=jax.ShapeDtypeStruct((B, N, Op), f32),
        grid_spec=pltpu.PrefetchScalarGridSpec(
            num_scalar_prefetch=0,
            grid=(n_phases, B),
            in_specs=in_specs,
            out_specs=pl.BlockSpec((1, N, Op), out_map),
            scratch_shapes=[
                pltpu.VMEM((B, N, Hp), f32),   # layer-1 activations (y1 -> x1)
                pltpu.VMEM((B, N, Hp), f32),   # layer-2 activations (y2 -> x2)
                pltpu.VMEM((B, N, Op), f32),   # layer-3 pre-BN activations
                pltpu.VMEM((8, Cs), f32),      # per-layer BN sum / sum-of-squares
            ]),
        compiler_params=pltpu.CompilerParams(
            # BN batch statistics couple every graph and every phase, so both
            # grid axes must stay sequential (no megacore sharding).
            dimension_semantics=("arbitrary", "arbitrary"),
            # Per-step working set here is tiny; at large N keep the per-graph
            # adj block + scratch under ~24-28 MiB for v7x (64 MiB VMEM).
            vmem_limit_bytes=48 * 1024 * 1024),
        cost_estimate=pl.CostEstimate(
            flops=flops,
            transcendentals=3 * B * N + 6 * Cs,
            bytes_accessed=bytes_accessed),
    )(*args)

    return out_p[:, :, :O]


if __name__ == "__main__":
    B, N = 2, 32                    # batch (graphs), nodes per graph
    in_channels = 16
    hidden_channels = 32
    out_channels = 32

    key = jax.random.PRNGKey(0)
    k_x, k_adj, k_params = jax.random.split(key, 3)

    x = jax.random.normal(k_x, (B, N, in_channels), jnp.float32)
    # Symmetric random dense 0/1 adjacency.
    a = (jax.random.uniform(k_adj, (B, N, N)) > 0.5).astype(jnp.float32)
    adj = jnp.maximum(a, jnp.swapaxes(a, 1, 2))

    params = init_params(k_params, in_channels, hidden_channels, out_channels)

    out = gnn_forward(params, x, adj)
    jax.block_until_ready(out)

    assert out.shape == (B, N, out_channels), out.shape
    assert bool(jnp.all(jnp.isfinite(out)))
    print("KERNEL_OK")
</pallas_src>

<mosaic_0001>
module attributes {stable_mosaic.version = 11 : i64} {
  func.func @_gnn_kernel(%arg0: i32, %arg1: i32, %arg2: memref<1x32x128xbf16, #tpu.memory_space<vmem>>, %arg3: memref<1x32x32xbf16, #tpu.memory_space<vmem>>, %arg4: memref<128x128xbf16, #tpu.memory_space<vmem>>, %arg5: memref<128x128xbf16, #tpu.memory_space<vmem>>, %arg6: memref<1x128xf32, #tpu.memory_space<vmem>>, %arg7: memref<1x128xf32, #tpu.memory_space<vmem>>, %arg8: memref<1x128xf32, #tpu.memory_space<vmem>>, %arg9: memref<128x128xbf16, #tpu.memory_space<vmem>>, %arg10: memref<128x128xbf16, #tpu.memory_space<vmem>>, %arg11: memref<1x128xf32, #tpu.memory_space<vmem>>, %arg12: memref<1x128xf32, #tpu.memory_space<vmem>>, %arg13: memref<1x128xf32, #tpu.memory_space<vmem>>, %arg14: memref<128x128xbf16, #tpu.memory_space<vmem>>, %arg15: memref<128x128xbf16, #tpu.memory_space<vmem>>, %arg16: memref<1x128xf32, #tpu.memory_space<vmem>>, %arg17: memref<1x128xf32, #tpu.memory_space<vmem>>, %arg18: memref<1x128xf32, #tpu.memory_space<vmem>>, %arg19: memref<128x128xbf16, #tpu.memory_space<vmem>>, %arg20: memref<128x128xbf16, #tpu.memory_space<vmem>>, %arg21: memref<128x128xbf16, #tpu.memory_space<vmem>>, %arg22: memref<1x128xf32, #tpu.memory_space<vmem>>, %arg23: memref<1x32x128xf32, #tpu.memory_space<vmem>>, %arg24: memref<2x32x128xf32, #tpu.memory_space<vmem>>, %arg25: memref<2x32x128xf32, #tpu.memory_space<vmem>>, %arg26: memref<2x32x128xf32, #tpu.memory_space<vmem>>, %arg27: memref<8x128xf32, #tpu.memory_space<vmem>>) attributes {dimension_semantics = [#tpu.dimension_semantics<arbitrary>, #tpu.dimension_semantics<arbitrary>], iteration_bounds = array<i64: 4, 2>, scalar_prefetch = 0 : i64, scratch_operands = 4 : i64, tpu.core_type = #tpu.core_type<tc>, window_params = [{transform_indices = @transform_0, window_bounds = array<i64: 1, 32, 128>}, {transform_indices = @transform_1, window_bounds = array<i64: 1, 32, 32>}, {pipeline_mode = #tpu.pipeline_mode<synchronous>, transform_indices = @transform_2, window_bounds = array<i64: 128, 128>}, {pipeline_mode = #tpu.pipeline_mode<synchronous>, transform_indices = @transform_3, window_bounds = array<i64: 128, 128>}, {pipeline_mode = #tpu.pipeline_mode<synchronous>, transform_indices = @transform_4, window_bounds = array<i64: 1, 128>}, {pipeline_mode = #tpu.pipeline_mode<synchronous>, transform_indices = @transform_5, window_bounds = array<i64: 1, 128>}, {pipeline_mode = #tpu.pipeline_mode<synchronous>, transform_indices = @transform_6, window_bounds = array<i64: 1, 128>}, {pipeline_mode = #tpu.pipeline_mode<synchronous>, transform_indices = @transform_7, window_bounds = array<i64: 128, 128>}, {pipeline_mode = #tpu.pipeline_mode<synchronous>, transform_indices = @transform_8, window_bounds = array<i64: 128, 128>}, {pipeline_mode = #tpu.pipeline_mode<synchronous>, transform_indices = @transform_9, window_bounds = array<i64: 1, 128>}, {pipeline_mode = #tpu.pipeline_mode<synchronous>, transform_indices = @transform_10, window_bounds = array<i64: 1, 128>}, {pipeline_mode = #tpu.pipeline_mode<synchronous>, transform_indices = @transform_11, window_bounds = array<i64: 1, 128>}, {pipeline_mode = #tpu.pipeline_mode<synchronous>, transform_indices = @transform_12, window_bounds = array<i64: 128, 128>}, {pipeline_mode = #tpu.pipeline_mode<synchronous>, transform_indices = @transform_13, window_bounds = array<i64: 128, 128>}, {pipeline_mode = #tpu.pipeline_mode<synchronous>, transform_indices = @transform_14, window_bounds = array<i64: 1, 128>}, {pipeline_mode = #tpu.pipeline_mode<synchronous>, transform_indices = @transform_15, window_bounds = array<i64: 1, 128>}, {pipeline_mode = #tpu.pipeline_mode<synchronous>, transform_indices = @transform_16, window_bounds = array<i64: 1, 128>}, {pipeline_mode = #tpu.pipeline_mode<synchronous>, transform_indices = @transform_17, window_bounds = array<i64: 128, 128>}, {pipeline_mode = #tpu.pipeline_mode<synchronous>, transform_indices = @transform_18, window_bounds = array<i64: 128, 128>}, {pipeline_mode = #tpu.pipeline_mode<synchronous>, transform_indices = @transform_19, window_bounds = array<i64: 128, 128>}, {pipeline_mode = #tpu.pipeline_mode<synchronous>, transform_indices = @transform_20, window_bounds = array<i64: 1, 128>}, {transform_indices = @transform_21, window_bounds = array<i64: 1, 32, 128>}]} {
    %c0_i32 = arith.constant 0 : i32
    %0 = arith.cmpi eq, %arg0, %c0_i32 : i32
    %c0_i32_0 = arith.constant 0 : i32
    %1 = arith.cmpi eq, %arg1, %c0_i32_0 : i32
    %2 = arith.andi %0, %1 : i1
    %3 = arith.extui %2 : i1 to i32
    %c0_i32_1 = arith.constant 0 : i32
    %4 = arith.cmpi ne, %3, %c0_i32_1 : i32
    scf.if %4 {
      %cst = arith.constant 0.000000e+00 : f32
      %17 = vector.broadcast %cst : f32 to vector<8x128xf32>
      %c0 = arith.constant 0 : index
      %c0_7 = arith.constant 0 : index
      %18 = vector.load %arg27[%c0, %c0_7] : memref<8x128xf32, #tpu.memory_space<vmem>>, vector<8x128xf32>
      tpu.vector_store %arg27[%c0, %c0_7], %17 {strides = array<i32>} : memref<8x128xf32, #tpu.memory_space<vmem>>, vector<8x128xf32>,
    } else {
    }
    %c0_i32_2 = arith.constant 0 : i32
    %5 = arith.cmpi eq, %arg0, %c0_i32_2 : i32
    %6 = arith.extui %5 : i1 to i32
    %c0_i32_3 = arith.constant 0 : i32
    %7 = arith.cmpi ne, %6, %c0_i32_3 : i32
    scf.if %7 {
      %c0 = arith.constant 0 : index
      %c0_7 = arith.constant 0 : index
      %c0_8 = arith.constant 0 : index
      %17 = vector.load %arg2[%c0, %c0_7, %c0_8] : memref<1x32x128xbf16, #tpu.memory_space<vmem>>, vector<1x32x128xbf16>
      %18 = vector.shape_cast %17 : vector<1x32x128xbf16> to vector<32x128xbf16>
      %c0_9 = arith.constant 0 : index
      %c0_10 = arith.constant 0 : index
      %c0_11 = arith.constant 0 : index
      %19 = vector.load %arg3[%c0_9, %c0_10, %c0_11] : memref<1x32x32xbf16, #tpu.memory_space<vmem>>, vector<1x32x32xbf16>
      %20 = vector.shape_cast %19 : vector<1x32x32xbf16> to vector<32x32xbf16>
      %cst = arith.constant dense<0.000000e+00> : vector<32x128xf32>
      %21 = tpu.matmul %20, %18, %cst {dimension_numbers = #tpu.dot_dimension_numbers<[1], [0], [0], [1], [0, 0, 1, 1], [], []>} : vector<32x32xbf16>, vector<32x128xbf16>, vector<32x128xf32> -> vector<32x128xf32>
      %22 = vector.extract_strided_slice %21 {offsets = [0, 16], sizes = [32, 1], strides = [1, 1]} : vector<32x128xf32> to vector<32x1xf32>
      %cst_12 = arith.constant 1.000000e+00 : f32
      %23 = vector.broadcast %cst_12 : f32 to vector<32x1xf32>
      %24 = arith.maximumf %22, %23 : vector<32x1xf32>
      %cst_13 = arith.constant 1.000000e+00 : f32
      %25 = vector.broadcast %cst_13 : f32 to vector<32x1xf32>
      %26 = arith.divf %25, %24 : vector<32x1xf32>
      %27 = vector.broadcast %26 : vector<32x1xf32> to vector<32x128xf32>
      %28 = arith.mulf %21, %27 : vector<32x128xf32>
      %29 = arith.truncf %28 : vector<32x128xf32> to vector<32x128xbf16>
      %c0_14 = arith.constant 0 : index
      %c0_15 = arith.constant 0 : index
      %30 = vector.load %arg4[%c0_14, %c0_15] : memref<128x128xbf16, #tpu.memory_space<vmem>>, vector<128x128xbf16>
      %cst_16 = arith.constant dense<0.000000e+00> : vector<32x128xf32>
      %31 = tpu.matmul %29, %30, %cst_16 {dimension_numbers = #tpu.dot_dimension_numbers<[1], [0], [0], [1], [0, 0, 1, 1], [], []>} : vector<32x128xbf16>, vector<128x128xbf16>, vector<32x128xf32> -> vector<32x128xf32>
      %c0_17 = arith.constant 0 : index
      %c0_18 = arith.constant 0 : index
      %32 = vector.load %arg5[%c0_17, %c0_18] : memref<128x128xbf16, #tpu.memory_space<vmem>>, vector<128x128xbf16>
      %cst_19 = arith.constant dense<0.000000e+00> : vector<32x128xf32>
      %33 = tpu.matmul %18, %32, %cst_19 {dimension_numbers = #tpu.dot_dimension_numbers<[1], [0], [0], [1], [0, 0, 1, 1], [], []>} : vector<32x128xbf16>, vector<128x128xbf16>, vector<32x128xf32> -> vector<32x128xf32>
      %34 = arith.addf %31, %33 : vector<32x128xf32>
      %c0_20 = arith.constant 0 : index
      %c0_21 = arith.constant 0 : index
      %35 = vector.load %arg6[%c0_20, %c0_21] : memref<1x128xf32, #tpu.memory_space<vmem>>, vector<1x128xf32>
      %36 = vector.broadcast %35 : vector<1x128xf32> to vector<32x128xf32>
      %37 = arith.addf %34, %36 : vector<32x128xf32>
      %cst_22 = arith.constant 0.000000e+00 : f32
      %38 = vector.broadcast %cst_22 : f32 to vector<32x128xf32>
      %39 = arith.maximumf %37, %38 : vector<32x128xf32>
      %40 = arith.index_cast %arg1 : i32 to index
      %c0_23 = arith.constant 0 : index
      %c0_24 = arith.constant 0 : index
      %41 = vector.load %arg24[%40, %c0_23, %c0_24] : memref<2x32x128xf32, #tpu.memory_space<vmem>>, vector<1x32x128xf32>
      %42 = vector.shape_cast %41 : vector<1x32x128xf32> to vector<32x128xf32>
      %43 = vector.shape_cast %39 : vector<32x128xf32> to vector<1x32x128xf32>
      tpu.vector_store %arg24[%40, %c0_23, %c0_24], %43 {strides = array<i32>} : memref<2x32x128xf32, #tpu.memory_space<vmem>>, vector<1x32x128xf32>,
      %c0_25 = arith.constant 0 : index
      %c0_26 = arith.constant 0 : index
      %44 = vector.load %arg27[%c0_25, %c0_26] : memref<8x128xf32, #tpu.memory_space<vmem>>, vector<1x128xf32>
      %cst_27 = arith.constant dense<0.000000e+00> : vector<128xf32>
      %45 = vector.multi_reduction <add>, %39, %cst_27 [0] : vector<32x128xf32> to vector<128xf32>
      %46 = vector.shape_cast %45 : vector<128xf32> to vector<1x128xf32>
      %47 = arith.addf %44, %46 : vector<1x128xf32>
      %c0_28 = arith.constant 0 : index
      %c0_29 = arith.constant 0 : index
      %48 = vector.load %arg27[%c0_28, %c0_29] : memref<8x128xf32, #tpu.memory_space<vmem>>, vector<1x128xf32>
      tpu.vector_store %arg27[%c0_28, %c0_29], %47 {strides = array<i32>} : memref<8x128xf32, #tpu.memory_space<vmem>>, vector<1x128xf32>,
      %c1 = arith.constant 1 : index
      %c0_30 = arith.constant 0 : index
      %49 = vector.load %arg27[%c1, %c0_30] : memref<8x128xf32, #tpu.memory_space<vmem>>, vector<1x128xf32>
      %50 = arith.mulf %39, %39 : vector<32x128xf32>
      %cst_31 = arith.constant dense<0.000000e+00> : vector<128xf32>
      %51 = vector.multi_reduction <add>, %50, %cst_31 [0] : vector<32x128xf32> to vector<128xf32>
      %52 = vector.shape_cast %51 : vector<128xf32> to vector<1x128xf32>
      %53 = arith.addf %49, %52 : vector<1x128xf32>
      %c1_32 = arith.constant 1 : index
      %c0_33 = arith.constant 0 : index
      %54 = vector.load %arg27[%c1_32, %c0_33] : memref<8x128xf32, #tpu.memory_space<vmem>>, vector<1x128xf32>
      tpu.vector_store %arg27[%c1_32, %c0_33], %53 {strides = array<i32>} : memref<8x128xf32, #tpu.memory_space<vmem>>, vector<1x128xf32>,
    } else {
    }
    %c1_i32 = arith.constant 1 : i32
    %8 = arith.cmpi eq, %arg0, %c1_i32 : i32
    %9 = arith.extui %8 : i1 to i32
    %c0_i32_4 = arith.constant 0 : i32
    %10 = arith.cmpi ne, %9, %c0_i32_4 : i32
    scf.if %10 {
      %17 = arith.index_cast %arg1 : i32 to index
      %c0 = arith.constant 0 : index
      %c0_7 = arith.constant 0 : index
      %18 = vector.load %arg24[%17, %c0, %c0_7] : memref<2x32x128xf32, #tpu.memory_space<vmem>>, vector<1x32x128xf32>
      %19 = vector.shape_cast %18 : vector<1x32x128xf32> to vector<32x128xf32>
      %c0_8 = arith.constant 0 : index
      %c0_9 = arith.constant 0 : index
      %20 = vector.load %arg27[%c0_8, %c0_9] : memref<8x128xf32, #tpu.memory_space<vmem>>, vector<1x128xf32>
      %cst = arith.constant 1.562500e-02 : f32
      %21 = vector.broadcast %cst : f32 to vector<1x128xf32>
      %22 = arith.mulf %20, %21 : vector<1x128xf32>
      %c1 = arith.constant 1 : index
      %c0_10 = arith.constant 0 : index
      %23 = vector.load %arg27[%c1, %c0_10] : memref<8x128xf32, #tpu.memory_space<vmem>>, vector<1x128xf32>
      %cst_11 = arith.constant 1.562500e-02 : f32
      %24 = vector.broadcast %cst_11 : f32 to vector<1x128xf32>
      %25 = arith.mulf %23, %24 : vector<1x128xf32>
      %26 = arith.mulf %22, %22 : vector<1x128xf32>
      %27 = arith.subf %25, %26 : vector<1x128xf32>
      %cst_12 = arith.constant 0.000000e+00 : f32
      %28 = vector.broadcast %cst_12 : f32 to vector<1x128xf32>
      %29 = arith.maximumf %27, %28 : vector<1x128xf32>
      %cst_13 = arith.constant 9.99999974E-6 : f32
      %30 = vector.broadcast %cst_13 : f32 to vector<1x128xf32>
      %31 = arith.addf %29, %30 : vector<1x128xf32>
      %32 = math.rsqrt %31 : vector<1x128xf32>
      %33 = vector.broadcast %22 : vector<1x128xf32> to vector<32x128xf32>
      %34 = arith.subf %19, %33 : vector<32x128xf32>
      %35 = vector.broadcast %32 : vector<1x128xf32> to vector<32x128xf32>
      %36 = arith.mulf %34, %35 : vector<32x128xf32>
      %c0_14 = arith.constant 0 : index
      %c0_15 = arith.constant 0 : index
      %37 = vector.load %arg7[%c0_14, %c0_15] : memref<1x128xf32, #tpu.memory_space<vmem>>, vector<1x128xf32>
      %38 = vector.broadcast %37 : vector<1x128xf32> to vector<32x128xf32>
      %39 = arith.mulf %36, %38 : vector<32x128xf32>
      %c0_16 = arith.constant 0 : index
      %c0_17 = arith.constant 0 : index
      %40 = vector.load %arg8[%c0_16, %c0_17] : memref<1x128xf32, #tpu.memory_space<vmem>>, vector<1x128xf32>
      %41 = vector.broadcast %40 : vector<1x128xf32> to vector<32x128xf32>
      %42 = arith.addf %39, %41 : vector<32x128xf32>
      %43 = arith.index_cast %arg1 : i32 to index
      %c0_18 = arith.constant 0 : index
      %c0_19 = arith.constant 0 : index
      %44 = vector.load %arg24[%43, %c0_18, %c0_19] : memref<2x32x128xf32, #tpu.memory_space<vmem>>, vector<1x32x128xf32>
      %45 = vector.shape_cast %44 : vector<1x32x128xf32> to vector<32x128xf32>
      %46 = vector.shape_cast %42 : vector<32x128xf32> to vector<1x32x128xf32>
      tpu.vector_store %arg24[%43, %c0_18, %c0_19], %46 {strides = array<i32>} : memref<2x32x128xf32, #tpu.memory_space<vmem>>, vector<1x32x128xf32>,
      %47 = arith.truncf %42 : vector<32x128xf32> to vector<32x128xbf16>
      %48 = tpu.iota {dimensions = array<i32: 1>} : vector<32x128xi32>
      %c32_i32 = arith.constant 32 : i32
      %49 = vector.broadcast %c32_i32 : i32 to vector<32x128xi32>
      %50 = arith.cmpi eq, %48, %49 : vector<32x128xi32>
      %cst_20 = arith.constant 1.000000e+00 : bf16
      %51 = vector.broadcast %cst_20 : bf16 to vector<32x128xbf16>
      %52 = arith.select %50, %51, %47 : vector<32x128xi1>, vector<32x128xbf16>
      %c0_21 = arith.constant 0 : index
      %c0_22 = arith.constant 0 : index
      %c0_23 = arith.constant 0 : index
      %53 = vector.load %arg3[%c0_21, %c0_22, %c0_23] : memref<1x32x32xbf16, #tpu.memory_space<vmem>>, vector<1x32x32xbf16>
      %54 = vector.shape_cast %53 : vector<1x32x32xbf16> to vector<32x32xbf16>
      %cst_24 = arith.constant dense<0.000000e+00> : vector<32x128xf32>
      %55 = tpu.matmul %54, %52, %cst_24 {dimension_numbers = #tpu.dot_dimension_numbers<[1], [0], [0], [1], [0, 0, 1, 1], [], []>} : vector<32x32xbf16>, vector<32x128xbf16>, vector<32x128xf32> -> vector<32x128xf32>
      %56 = vector.extract_strided_slice %55 {offsets = [0, 32], sizes = [32, 1], strides = [1, 1]} : vector<32x128xf32> to vector<32x1xf32>
      %cst_25 = arith.constant 1.000000e+00 : f32
      %57 = vector.broadcast %cst_25 : f32 to vector<32x1xf32>
      %58 = arith.maximumf %56, %57 : vector<32x1xf32>
      %cst_26 = arith.constant 1.000000e+00 : f32
      %59 = vector.broadcast %cst_26 : f32 to vector<32x1xf32>
      %60 = arith.divf %59, %58 : vector<32x1xf32>
      %61 = vector.broadcast %60 : vector<32x1xf32> to vector<32x128xf32>
      %62 = arith.mulf %55, %61 : vector<32x128xf32>
      %63 = arith.truncf %62 : vector<32x128xf32> to vector<32x128xbf16>
      %c0_27 = arith.constant 0 : index
      %c0_28 = arith.constant 0 : index
      %64 = vector.load %arg9[%c0_27, %c0_28] : memref<128x128xbf16, #tpu.memory_space<vmem>>, vector<128x128xbf16>
      %cst_29 = arith.constant dense<0.000000e+00> : vector<32x128xf32>
      %65 = tpu.matmul %63, %64, %cst_29 {dimension_numbers = #tpu.dot_dimension_numbers<[1], [0], [0], [1], [0, 0, 1, 1], [], []>} : vector<32x128xbf16>, vector<128x128xbf16>, vector<32x128xf32> -> vector<32x128xf32>
      %c0_30 = arith.constant 0 : index
      %c0_31 = arith.constant 0 : index
      %66 = vector.load %arg10[%c0_30, %c0_31] : memref<128x128xbf16, #tpu.memory_space<vmem>>, vector<128x128xbf16>
      %cst_32 = arith.constant dense<0.000000e+00> : vector<32x128xf32>
      %67 = tpu.matmul %52, %66, %cst_32 {dimension_numbers = #tpu.dot_dimension_numbers<[1], [0], [0], [1], [0, 0, 1, 1], [], []>} : vector<32x128xbf16>, vector<128x128xbf16>, vector<32x128xf32> -> vector<32x128xf32>
      %68 = arith.addf %65, %67 : vector<32x128xf32>
      %c0_33 = arith.constant 0 : index
      %c0_34 = arith.constant 0 : index
      %69 = vector.load %arg11[%c0_33, %c0_34] : memref<1x128xf32, #tpu.memory_space<vmem>>, vector<1x128xf32>
      %70 = vector.broadcast %69 : vector<1x128xf32> to vector<32x128xf32>
      %71 = arith.addf %68, %70 : vector<32x128xf32>
      %cst_35 = arith.constant 0.000000e+00 : f32
      %72 = vector.broadcast %cst_35 : f32 to vector<32x128xf32>
      %73 = arith.maximumf %71, %72 : vector<32x128xf32>
      %74 = arith.index_cast %arg1 : i32 to index
      %c0_36 = arith.constant 0 : index
      %c0_37 = arith.constant 0 : index
      %75 = vector.load %arg25[%74, %c0_36, %c0_37] : memref<2x32x128xf32, #tpu.memory_space<vmem>>, vector<1x32x128xf32>
      %76 = vector.shape_cast %75 : vector<1x32x128xf32> to vector<32x128xf32>
      %77 = vector.shape_cast %73 : vector<32x128xf32> to vector<1x32x128xf32>
      tpu.vector_store %arg25[%74, %c0_36, %c0_37], %77 {strides = array<i32>} : memref<2x32x128xf32, #tpu.memory_space<vmem>>, vector<1x32x128xf32>,
      %c2 = arith.constant 2 : index
      %c0_38 = arith.constant 0 : index
      %78 = vector.load %arg27[%c2, %c0_38] : memref<8x128xf32, #tpu.memory_space<vmem>>, vector<1x128xf32>
      %cst_39 = arith.constant dense<0.000000e+00> : vector<128xf32>
      %79 = vector.multi_reduction <add>, %73, %cst_39 [0] : vector<32x128xf32> to vector<128xf32>
      %80 = vector.shape_cast %79 : vector<128xf32> to vector<1x128xf32>
      %81 = arith.addf %78, %80 : vector<1x128xf32>
      %c2_40 = arith.constant 2 : index
      %c0_41 = arith.constant 0 : index
      %82 = vector.load %arg27[%c2_40, %c0_41] : memref<8x128xf32, #tpu.memory_space<vmem>>, vector<1x128xf32>
      tpu.vector_store %arg27[%c2_40, %c0_41], %81 {strides = array<i32>} : memref<8x128xf32, #tpu.memory_space<vmem>>, vector<1x128xf32>,
      %c3 = arith.constant 3 : index
      %c0_42 = arith.constant 0 : index
      %83 = vector.load %arg27[%c3, %c0_42] : memref<8x128xf32, #tpu.memory_space<vmem>>, vector<1x128xf32>
      %84 = arith.mulf %73, %73 : vector<32x128xf32>
      %cst_43 = arith.constant dense<0.000000e+00> : vector<128xf32>
      %85 = vector.multi_reduction <add>, %84, %cst_43 [0] : vector<32x128xf32> to vector<128xf32>
      %86 = vector.shape_cast %85 : vector<128xf32> to vector<1x128xf32>
      %87 = arith.addf %83, %86 : vector<1x128xf32>
      %c3_44 = arith.constant 3 : index
      %c0_45 = arith.constant 0 : index
      %88 = vector.load %arg27[%c3_44, %c0_45] : memref<8x128xf32, #tpu.memory_space<vmem>>, vector<1x128xf32>
      tpu.vector_store %arg27[%c3_44, %c0_45], %87 {strides = array<i32>} : memref<8x128xf32, #tpu.memory_space<vmem>>, vector<1x128xf32>,
    } else {
    }
    %c2_i32 = arith.constant 2 : i32
    %11 = arith.cmpi eq, %arg0, %c2_i32 : i32
    %12 = arith.extui %11 : i1 to i32
    %c0_i32_5 = arith.constant 0 : i32
    %13 = arith.cmpi ne, %12, %c0_i32_5 : i32
    scf.if %13 {
      %17 = arith.index_cast %arg1 : i32 to index
      %c0 = arith.constant 0 : index
      %c0_7 = arith.constant 0 : index
      %18 = vector.load %arg25[%17, %c0, %c0_7] : memref<2x32x128xf32, #tpu.memory_space<vmem>>, vector<1x32x128xf32>
      %19 = vector.shape_cast %18 : vector<1x32x128xf32> to vector<32x128xf32>
      %c2 = arith.constant 2 : index
      %c0_8 = arith.constant 0 : index
      %20 = vector.load %arg27[%c2, %c0_8] : memref<8x128xf32, #tpu.memory_space<vmem>>, vector<1x128xf32>
      %cst = arith.constant 1.562500e-02 : f32
      %21 = vector.broadcast %cst : f32 to vector<1x128xf32>
      %22 = arith.mulf %20, %21 : vector<1x128xf32>
      %c3 = arith.constant 3 : index
      %c0_9 = arith.constant 0 : index
      %23 = vector.load %arg27[%c3, %c0_9] : memref<8x128xf32, #tpu.memory_space<vmem>>, vector<1x128xf32>
      %cst_10 = arith.constant 1.562500e-02 : f32
      %24 = vector.broadcast %cst_10 : f32 to vector<1x128xf32>
      %25 = arith.mulf %23, %24 : vector<1x128xf32>
      %26 = arith.mulf %22, %22 : vector<1x128xf32>
      %27 = arith.subf %25, %26 : vector<1x128xf32>
      %cst_11 = arith.constant 0.000000e+00 : f32
      %28 = vector.broadcast %cst_11 : f32 to vector<1x128xf32>
      %29 = arith.maximumf %27, %28 : vector<1x128xf32>
      %cst_12 = arith.constant 9.99999974E-6 : f32
      %30 = vector.broadcast %cst_12 : f32 to vector<1x128xf32>
      %31 = arith.addf %29, %30 : vector<1x128xf32>
      %32 = math.rsqrt %31 : vector<1x128xf32>
      %33 = vector.broadcast %22 : vector<1x128xf32> to vector<32x128xf32>
      %34 = arith.subf %19, %33 : vector<32x128xf32>
      %35 = vector.broadcast %32 : vector<1x128xf32> to vector<32x128xf32>
      %36 = arith.mulf %34, %35 : vector<32x128xf32>
      %c0_13 = arith.constant 0 : index
      %c0_14 = arith.constant 0 : index
      %37 = vector.load %arg12[%c0_13, %c0_14] : memref<1x128xf32, #tpu.memory_space<vmem>>, vector<1x128xf32>
      %38 = vector.broadcast %37 : vector<1x128xf32> to vector<32x128xf32>
      %39 = arith.mulf %36, %38 : vector<32x128xf32>
      %c0_15 = arith.constant 0 : index
      %c0_16 = arith.constant 0 : index
      %40 = vector.load %arg13[%c0_15, %c0_16] : memref<1x128xf32, #tpu.memory_space<vmem>>, vector<1x128xf32>
      %41 = vector.broadcast %40 : vector<1x128xf32> to vector<32x128xf32>
      %42 = arith.addf %39, %41 : vector<32x128xf32>
      %43 = arith.index_cast %arg1 : i32 to index
      %c0_17 = arith.constant 0 : index
      %c0_18 = arith.constant 0 : index
      %44 = vector.load %arg25[%43, %c0_17, %c0_18] : memref<2x32x128xf32, #tpu.memory_space<vmem>>, vector<1x32x128xf32>
      %45 = vector.shape_cast %44 : vector<1x32x128xf32> to vector<32x128xf32>
      %46 = vector.shape_cast %42 : vector<32x128xf32> to vector<1x32x128xf32>
      tpu.vector_store %arg25[%43, %c0_17, %c0_18], %46 {strides = array<i32>} : memref<2x32x128xf32, #tpu.memory_space<vmem>>, vector<1x32x128xf32>,
      %47 = arith.truncf %42 : vector<32x128xf32> to vector<32x128xbf16>
      %48 = tpu.iota {dimensions = array<i32: 1>} : vector<32x128xi32>
      %c32_i32 = arith.constant 32 : i32
      %49 = vector.broadcast %c32_i32 : i32 to vector<32x128xi32>
      %50 = arith.cmpi eq, %48, %49 : vector<32x128xi32>
      %cst_19 = arith.constant 1.000000e+00 : bf16
      %51 = vector.broadcast %cst_19 : bf16 to vector<32x128xbf16>
      %52 = arith.select %50, %51, %47 : vector<32x128xi1>, vector<32x128xbf16>
      %c0_20 = arith.constant 0 : index
      %c0_21 = arith.constant 0 : index
      %c0_22 = arith.constant 0 : index
      %53 = vector.load %arg3[%c0_20, %c0_21, %c0_22] : memref<1x32x32xbf16, #tpu.memory_space<vmem>>, vector<1x32x32xbf16>
      %54 = vector.shape_cast %53 : vector<1x32x32xbf16> to vector<32x32xbf16>
      %cst_23 = arith.constant dense<0.000000e+00> : vector<32x128xf32>
      %55 = tpu.matmul %54, %52, %cst_23 {dimension_numbers = #tpu.dot_dimension_numbers<[1], [0], [0], [1], [0, 0, 1, 1], [], []>} : vector<32x32xbf16>, vector<32x128xbf16>, vector<32x128xf32> -> vector<32x128xf32>
      %56 = vector.extract_strided_slice %55 {offsets = [0, 32], sizes = [32, 1], strides = [1, 1]} : vector<32x128xf32> to vector<32x1xf32>
      %cst_24 = arith.constant 1.000000e+00 : f32
      %57 = vector.broadcast %cst_24 : f32 to vector<32x1xf32>
      %58 = arith.maximumf %56, %57 : vector<32x1xf32>
      %cst_25 = arith.constant 1.000000e+00 : f32
      %59 = vector.broadcast %cst_25 : f32 to vector<32x1xf32>
      %60 = arith.divf %59, %58 : vector<32x1xf32>
      %61 = vector.broadcast %60 : vector<32x1xf32> to vector<32x128xf32>
      %62 = arith.mulf %55, %61 : vector<32x128xf32>
      %63 = arith.truncf %62 : vector<32x128xf32> to vector<32x128xbf16>
      %c0_26 = arith.constant 0 : index
      %c0_27 = arith.constant 0 : index
      %64 = vector.load %arg14[%c0_26, %c0_27] : memref<128x128xbf16, #tpu.memory_space<vmem>>, vector<128x128xbf16>
      %cst_28 = arith.constant dense<0.000000e+00> : vector<32x128xf32>
      %65 = tpu.matmul %63, %64, %cst_28 {dimension_numbers = #tpu.dot_dimension_numbers<[1], [0], [0], [1], [0, 0, 1, 1], [], []>} : vector<32x128xbf16>, vector<128x128xbf16>, vector<32x128xf32> -> vector<32x128xf32>
      %c0_29 = arith.constant 0 : index
      %c0_30 = arith.constant 0 : index
      %66 = vector.load %arg15[%c0_29, %c0_30] : memref<128x128xbf16, #tpu.memory_space<vmem>>, vector<128x128xbf16>
      %cst_31 = arith.constant dense<0.000000e+00> : vector<32x128xf32>
      %67 = tpu.matmul %52, %66, %cst_31 {dimension_numbers = #tpu.dot_dimension_numbers<[1], [0], [0], [1], [0, 0, 1, 1], [], []>} : vector<32x128xbf16>, vector<128x128xbf16>, vector<32x128xf32> -> vector<32x128xf32>
      %68 = arith.addf %65, %67 : vector<32x128xf32>
      %c0_32 = arith.constant 0 : index
      %c0_33 = arith.constant 0 : index
      %69 = vector.load %arg16[%c0_32, %c0_33] : memref<1x128xf32, #tpu.memory_space<vmem>>, vector<1x128xf32>
      %70 = vector.broadcast %69 : vector<1x128xf32> to vector<32x128xf32>
      %71 = arith.addf %68, %70 : vector<32x128xf32>
      %cst_34 = arith.constant 0.000000e+00 : f32
      %72 = vector.broadcast %cst_34 : f32 to vector<32x128xf32>
      %73 = arith.maximumf %71, %72 : vector<32x128xf32>
      %74 = arith.index_cast %arg1 : i32 to index
      %c0_35 = arith.constant 0 : index
      %c0_36 = arith.constant 0 : index
      %75 = vector.load %arg26[%74, %c0_35, %c0_36] : memref<2x32x128xf32, #tpu.memory_space<vmem>>, vector<1x32x128xf32>
      %76 = vector.shape_cast %75 : vector<1x32x128xf32> to vector<32x128xf32>
      %77 = vector.shape_cast %73 : vector<32x128xf32> to vector<1x32x128xf32>
      tpu.vector_store %arg26[%74, %c0_35, %c0_36], %77 {strides = array<i32>} : memref<2x32x128xf32, #tpu.memory_space<vmem>>, vector<1x32x128xf32>,
      %c4 = arith.constant 4 : index
      %c0_37 = arith.constant 0 : index
      %78 = vector.load %arg27[%c4, %c0_37] : memref<8x128xf32, #tpu.memory_space<vmem>>, vector<1x128xf32>
      %cst_38 = arith.constant dense<0.000000e+00> : vector<128xf32>
      %79 = vector.multi_reduction <add>, %73, %cst_38 [0] : vector<32x128xf32> to vector<128xf32>
      %80 = vector.shape_cast %79 : vector<128xf32> to vector<1x128xf32>
      %81 = arith.addf %78, %80 : vector<1x128xf32>
      %c4_39 = arith.constant 4 : index
      %c0_40 = arith.constant 0 : index
      %82 = vector.load %arg27[%c4_39, %c0_40] : memref<8x128xf32, #tpu.memory_space<vmem>>, vector<1x128xf32>
      tpu.vector_store %arg27[%c4_39, %c0_40], %81 {strides = array<i32>} : memref<8x128xf32, #tpu.memory_space<vmem>>, vector<1x128xf32>,
      %c5 = arith.constant 5 : index
      %c0_41 = arith.constant 0 : index
      %83 = vector.load %arg27[%c5, %c0_41] : memref<8x128xf32, #tpu.memory_space<vmem>>, vector<1x128xf32>
      %84 = arith.mulf %73, %73 : vector<32x128xf32>
      %cst_42 = arith.constant dense<0.000000e+00> : vector<128xf32>
      %85 = vector.multi_reduction <add>, %84, %cst_42 [0] : vector<32x128xf32> to vector<128xf32>
      %86 = vector.shape_cast %85 : vector<128xf32> to vector<1x128xf32>
      %87 = arith.addf %83, %86 : vector<1x128xf32>
      %c5_43 = arith.constant 5 : index
      %c0_44 = arith.constant 0 : index
      %88 = vector.load %arg27[%c5_43, %c0_44] : memref<8x128xf32, #tpu.memory_space<vmem>>, vector<1x128xf32>
      tpu.vector_store %arg27[%c5_43, %c0_44], %87 {strides = array<i32>} : memref<8x128xf32, #tpu.memory_space<vmem>>, vector<1x128xf32>,
    } else {
    }
    %c3_i32 = arith.constant 3 : i32
    %14 = arith.cmpi eq, %arg0, %c3_i32 : i32
    %15 = arith.extui %14 : i1 to i32
    %c0_i32_6 = arith.constant 0 : i32
    %16 = arith.cmpi ne, %15, %c0_i32_6 : i32
    scf.if %16 {
      %17 = arith.index_cast %arg1 : i32 to index
      %c0 = arith.constant 0 : index
      %c0_7 = arith.constant 0 : index
      %18 = vector.load %arg24[%17, %c0, %c0_7] : memref<2x32x128xf32, #tpu.memory_space<vmem>>, vector<1x32x128xf32>
      %19 = vector.shape_cast %18 : vector<1x32x128xf32> to vector<32x128xf32>
      %20 = arith.truncf %19 : vector<32x128xf32> to vector<32x128xbf16>
      %21 = arith.index_cast %arg1 : i32 to index
      %c0_8 = arith.constant 0 : index
      %c0_9 = arith.constant 0 : index
      %22 = vector.load %arg25[%21, %c0_8, %c0_9] : memref<2x32x128xf32, #tpu.memory_space<vmem>>, vector<1x32x128xf32>
      %23 = vector.shape_cast %22 : vector<1x32x128xf32> to vector<32x128xf32>
      %24 = arith.truncf %23 : vector<32x128xf32> to vector<32x128xbf16>
      %25 = arith.index_cast %arg1 : i32 to index
      %c0_10 = arith.constant 0 : index
      %c0_11 = arith.constant 0 : index
      %26 = vector.load %arg26[%25, %c0_10, %c0_11] : memref<2x32x128xf32, #tpu.memory_space<vmem>>, vector<1x32x128xf32>
      %27 = vector.shape_cast %26 : vector<1x32x128xf32> to vector<32x128xf32>
      %c4 = arith.constant 4 : index
      %c0_12 = arith.constant 0 : index
      %28 = vector.load %arg27[%c4, %c0_12] : memref<8x128xf32, #tpu.memory_space<vmem>>, vector<1x128xf32>
      %cst = arith.constant 1.562500e-02 : f32
      %29 = vector.broadcast %cst : f32 to vector<1x128xf32>
      %30 = arith.mulf %28, %29 : vector<1x128xf32>
      %c5 = arith.constant 5 : index
      %c0_13 = arith.constant 0 : index
      %31 = vector.load %arg27[%c5, %c0_13] : memref<8x128xf32, #tpu.memory_space<vmem>>, vector<1x128xf32>
      %cst_14 = arith.constant 1.562500e-02 : f32
      %32 = vector.broadcast %cst_14 : f32 to vector<1x128xf32>
      %33 = arith.mulf %31, %32 : vector<1x128xf32>
      %34 = arith.mulf %30, %30 : vector<1x128xf32>
      %35 = arith.subf %33, %34 : vector<1x128xf32>
      %cst_15 = arith.constant 0.000000e+00 : f32
      %36 = vector.broadcast %cst_15 : f32 to vector<1x128xf32>
      %37 = arith.maximumf %35, %36 : vector<1x128xf32>
      %cst_16 = arith.constant 9.99999974E-6 : f32
      %38 = vector.broadcast %cst_16 : f32 to vector<1x128xf32>
      %39 = arith.addf %37, %38 : vector<1x128xf32>
      %40 = math.rsqrt %39 : vector<1x128xf32>
      %41 = vector.broadcast %30 : vector<1x128xf32> to vector<32x128xf32>
      %42 = arith.subf %27, %41 : vector<32x128xf32>
      %43 = vector.broadcast %40 : vector<1x128xf32> to vector<32x128xf32>
      %44 = arith.mulf %42, %43 : vector<32x128xf32>
      %c0_17 = arith.constant 0 : index
      %c0_18 = arith.constant 0 : index
      %45 = vector.load %arg17[%c0_17, %c0_18] : memref<1x128xf32, #tpu.memory_space<vmem>>, vector<1x128xf32>
      %46 = vector.broadcast %45 : vector<1x128xf32> to vector<32x128xf32>
      %47 = arith.mulf %44, %46 : vector<32x128xf32>
      %c0_19 = arith.constant 0 : index
      %c0_20 = arith.constant 0 : index
      %48 = vector.load %arg18[%c0_19, %c0_20] : memref<1x128xf32, #tpu.memory_space<vmem>>, vector<1x128xf32>
      %49 = vector.broadcast %48 : vector<1x128xf32> to vector<32x128xf32>
      %50 = arith.addf %47, %49 : vector<32x128xf32>
      %51 = arith.truncf %50 : vector<32x128xf32> to vector<32x128xbf16>
      %c0_21 = arith.constant 0 : index
      %c0_22 = arith.constant 0 : index
      %52 = vector.load %arg19[%c0_21, %c0_22] : memref<128x128xbf16, #tpu.memory_space<vmem>>, vector<128x128xbf16>
      %cst_23 = arith.constant dense<0.000000e+00> : vector<32x128xf32>
      %53 = tpu.matmul %20, %52, %cst_23 {dimension_numbers = #tpu.dot_dimension_numbers<[1], [0], [0], [1], [0, 0, 1, 1], [], []>} : vector<32x128xbf16>, vector<128x128xbf16>, vector<32x128xf32> -> vector<32x128xf32>
      %c0_24 = arith.constant 0 : index
      %c0_25 = arith.constant 0 : index
      %54 = vector.load %arg20[%c0_24, %c0_25] : memref<128x128xbf16, #tpu.memory_space<vmem>>, vector<128x128xbf16>
      %cst_26 = arith.constant dense<0.000000e+00> : vector<32x128xf32>
      %55 = tpu.matmul %24, %54, %cst_26 {dimension_numbers = #tpu.dot_dimension_numbers<[1], [0], [0], [1], [0, 0, 1, 1], [], []>} : vector<32x128xbf16>, vector<128x128xbf16>, vector<32x128xf32> -> vector<32x128xf32>
      %56 = arith.addf %53, %55 : vector<32x128xf32>
      %c0_27 = arith.constant 0 : index
      %c0_28 = arith.constant 0 : index
      %57 = vector.load %arg21[%c0_27, %c0_28] : memref<128x128xbf16, #tpu.memory_space<vmem>>, vector<128x128xbf16>
      %cst_29 = arith.constant dense<0.000000e+00> : vector<32x128xf32>
      %58 = tpu.matmul %51, %57, %cst_29 {dimension_numbers = #tpu.dot_dimension_numbers<[1], [0], [0], [1], [0, 0, 1, 1], [], []>} : vector<32x128xbf16>, vector<128x128xbf16>, vector<32x128xf32> -> vector<32x128xf32>
      %59 = arith.addf %56, %58 : vector<32x128xf32>
      %c0_30 = arith.constant 0 : index
      %c0_31 = arith.constant 0 : index
      %60 = vector.load %arg22[%c0_30, %c0_31] : memref<1x128xf32, #tpu.memory_space<vmem>>, vector<1x128xf32>
      %61 = vector.broadcast %60 : vector<1x128xf32> to vector<32x128xf32>
      %62 = arith.addf %59, %61 : vector<32x128xf32>
      %cst_32 = arith.constant 0.000000e+00 : f32
      %63 = vector.broadcast %cst_32 : f32 to vector<32x128xf32>
      %64 = arith.maximumf %62, %63 : vector<32x128xf32>
      %c0_33 = arith.constant 0 : index
      %c0_34 = arith.constant 0 : index
      %c0_35 = arith.constant 0 : index
      %65 = vector.load %arg23[%c0_33, %c0_34, %c0_35] : memref<1x32x128xf32, #tpu.memory_space<vmem>>, vector<1x32x128xf32>
      %66 = vector.shape_cast %65 : vector<1x32x128xf32> to vector<32x128xf32>
      %67 = vector.shape_cast %64 : vector<32x128xf32> to vector<1x32x128xf32>
      tpu.vector_store %arg23[%c0_33, %c0_34, %c0_35], %67 {strides = array<i32>} : memref<1x32x128xf32, #tpu.memory_space<vmem>>, vector<1x32x128xf32>,
    } else {
    }
    return
  }
  func.func @transform_0(%arg0: i32, %arg1: i32) -> (i32, i32, i32) {
    %c0_i32 = arith.constant 0 : i32
    %0 = arith.cmpi eq, %arg0, %c0_i32 : i32
    %c1_i32 = arith.constant 1 : i32
    %1 = arith.select %0, %arg1, %c1_i32 : i32
    %c0_i32_0 = arith.constant 0 : i32
    %c0_i32_1 = arith.constant 0 : i32
    %c0_i32_2 = arith.constant 0 : i32
    return %1, %c0_i32_0, %c0_i32_1 : i32, i32, i32
  }
  func.func @transform_1(%arg0: i32, %arg1: i32) -> (i32, i32, i32) {
    %c3_i32 = arith.constant 3 : i32
    %0 = arith.cmpi eq, %arg0, %c3_i32 : i32
    %c1_i32 = arith.constant 1 : i32
    %1 = arith.select %0, %c1_i32, %arg1 : i32
    %c0_i32 = arith.constant 0 : i32
    %c0_i32_0 = arith.constant 0 : i32
    %c0_i32_1 = arith.constant 0 : i32
    return %1, %c0_i32, %c0_i32_0 : i32, i32, i32
  }
  func.func @transform_2(%arg0: i32, %arg1: i32) -> (i32, i32) {
    %c0_i32 = arith.constant 0 : i32
    %c0_i32_0 = arith.constant 0 : i32
    %c0_i32_1 = arith.constant 0 : i32
    return %c0_i32, %c0_i32_0 : i32, i32
  }
  func.func @transform_3(%arg0: i32, %arg1: i32) -> (i32, i32) {
    %c0_i32 = arith.constant 0 : i32
    %c0_i32_0 = arith.constant 0 : i32
    %c0_i32_1 = arith.constant 0 : i32
    return %c0_i32, %c0_i32_0 : i32, i32
  }
  func.func @transform_4(%arg0: i32, %arg1: i32) -> (i32, i32) {
    %c0_i32 = arith.constant 0 : i32
    %c0_i32_0 = arith.constant 0 : i32
    %c0_i32_1 = arith.constant 0 : i32
    return %c0_i32, %c0_i32_0 : i32, i32
  }
  func.func @transform_5(%arg0: i32, %arg1: i32) -> (i32, i32) {
    %c0_i32 = arith.constant 0 : i32
    %c0_i32_0 = arith.constant 0 : i32
    %c0_i32_1 = arith.constant 0 : i32
    return %c0_i32, %c0_i32_0 : i32, i32
  }
  func.func @transform_6(%arg0: i32, %arg1: i32) -> (i32, i32) {
    %c0_i32 = arith.constant 0 : i32
    %c0_i32_0 = arith.constant 0 : i32
    %c0_i32_1 = arith.constant 0 : i32
    return %c0_i32, %c0_i32_0 : i32, i32
  }
  func.func @transform_7(%arg0: i32, %arg1: i32) -> (i32, i32) {
    %c0_i32 = arith.constant 0 : i32
    %c0_i32_0 = arith.constant 0 : i32
    %c0_i32_1 = arith.constant 0 : i32
    return %c0_i32, %c0_i32_0 : i32, i32
  }
  func.func @transform_8(%arg0: i32, %arg1: i32) -> (i32, i32) {
    %c0_i32 = arith.constant 0 : i32
    %c0_i32_0 = arith.constant 0 : i32
    %c0_i32_1 = arith.constant 0 : i32
    return %c0_i32, %c0_i32_0 : i32, i32
  }
  func.func @transform_9(%arg0: i32, %arg1: i32) -> (i32, i32) {
    %c0_i32 = arith.constant 0 : i32
    %c0_i32_0 = arith.constant 0 : i32
    %c0_i32_1 = arith.constant 0 : i32
    return %c0_i32, %c0_i32_0 : i32, i32
  }
  func.func @transform_10(%arg0: i32, %arg1: i32) -> (i32, i32) {
    %c0_i32 = arith.constant 0 : i32
    %c0_i32_0 = arith.constant 0 : i32
    %c0_i32_1 = arith.constant 0 : i32
    return %c0_i32, %c0_i32_0 : i32, i32
  }
  func.func @transform_11(%arg0: i32, %arg1: i32) -> (i32, i32) {
    %c0_i32 = arith.constant 0 : i32
    %c0_i32_0 = arith.constant 0 : i32
    %c0_i32_1 = arith.constant 0 : i32
    return %c0_i32, %c0_i32_0 : i32, i32
  }
  func.func @transform_12(%arg0: i32, %arg1: i32) -> (i32, i32) {
    %c0_i32 = arith.constant 0 : i32
    %c0_i32_0 = arith.constant 0 : i32
    %c0_i32_1 = arith.constant 0 : i32
    return %c0_i32, %c0_i32_0 : i32, i32
  }
  func.func @transform_13(%arg0: i32, %arg1: i32) -> (i32, i32) {
    %c0_i32 = arith.constant 0 : i32
    %c0_i32_0 = arith.constant 0 : i32
    %c0_i32_1 = arith.constant 0 : i32
    return %c0_i32, %c0_i32_0 : i32, i32
  }
  func.func @transform_14(%arg0: i32, %arg1: i32) -> (i32, i32) {
    %c0_i32 = arith.constant 0 : i32
    %c0_i32_0 = arith.constant 0 : i32
    %c0_i32_1 = arith.constant 0 : i32
    return %c0_i32, %c0_i32_0 : i32, i32
  }
  func.func @transform_15(%arg0: i32, %arg1: i32) -> (i32, i32) {
    %c0_i32 = arith.constant 0 : i32
    %c0_i32_0 = arith.constant 0 : i32
    %c0_i32_1 = arith.constant 0 : i32
    return %c0_i32, %c0_i32_0 : i32, i32
  }
  func.func @transform_16(%arg0: i32, %arg1: i32) -> (i32, i32) {
    %c0_i32 = arith.constant 0 : i32
    %c0_i32_0 = arith.constant 0 : i32
    %c0_i32_1 = arith.constant 0 : i32
    return %c0_i32, %c0_i32_0 : i32, i32
  }
  func.func @transform_17(%arg0: i32, %arg1: i32) -> (i32, i32) {
    %c0_i32 = arith.constant 0 : i32
    %c0_i32_0 = arith.constant 0 : i32
    %c0_i32_1 = arith.constant 0 : i32
    return %c0_i32, %c0_i32_0 : i32, i32
  }
  func.func @transform_18(%arg0: i32, %arg1: i32) -> (i32, i32) {
    %c0_i32 = arith.constant 0 : i32
    %c0_i32_0 = arith.constant 0 : i32
    %c0_i32_1 = arith.constant 0 : i32
    return %c0_i32, %c0_i32_0 : i32, i32
  }
  func.func @transform_19(%arg0: i32, %arg1: i32) -> (i32, i32) {
    %c0_i32 = arith.constant 0 : i32
    %c0_i32_0 = arith.constant 0 : i32
    %c0_i32_1 = arith.constant 0 : i32
    return %c0_i32, %c0_i32_0 : i32, i32
  }
  func.func @transform_20(%arg0: i32, %arg1: i32) -> (i32, i32) {
    %c0_i32 = arith.constant 0 : i32
    %c0_i32_0 = arith.constant 0 : i32
    %c0_i32_1 = arith.constant 0 : i32
    return %c0_i32, %c0_i32_0 : i32, i32
  }
  func.func @transform_21(%arg0: i32, %arg1: i32) -> (i32, i32, i32) {
    %c3_i32 = arith.constant 3 : i32
    %0 = arith.cmpi eq, %arg0, %c3_i32 : i32
    %c0_i32 = arith.constant 0 : i32
    %1 = arith.select %0, %arg1, %c0_i32 : i32
    %c0_i32_0 = arith.constant 0 : i32
    %c0_i32_1 = arith.constant 0 : i32
    %c0_i32_2 = arith.constant 0 : i32
    return %1, %c0_i32_0, %c0_i32_1 : i32, i32, i32
  }
}

</mosaic_0001>

<llo_original>
// kernel: tpu_custom_call.1
$region0: #{tpu_custom_call.1}
  #allocation0 [shape = 'u32[]', space=smem, size = 0x4, offset = 0x4, fixed_abs, tag = 'smem constant byte address 0x4 - core index']
  #allocation1 [shape = 'u32[72,128]{1,0:T(1,128)}', space=vmem, size = 0x9000, scoped, tag = 'internal scratch']
  #allocation2 [shape = 'f32[2,32,128]{2,1,0:T(8,128)}', space=vmem, size = 0x8000, scoped, tag = 'scratch operand']
  #allocation3 [shape = 'f32[2,32,128]{2,1,0:T(8,128)}', space=vmem, size = 0x8000, scoped, tag = 'scratch operand']
  #allocation4 [shape = 'f32[2,32,128]{2,1,0:T(8,128)}', space=vmem, size = 0x8000, scoped, tag = 'scratch operand']
  #allocation5 [shape = 'f32[8,128]{1,0:T(8,128)}', space=vmem, size = 0x1000, scoped, tag = 'scratch operand']
  %s0 = inlined_call_operand.hbm [shape: bf16[2,32,128], index: 0, kind: input, shape index: {}]
  %s1 = inlined_call_operand.hbm [shape: bf16[2,32,32], index: 1, kind: input, shape index: {}]
  %s2 = inlined_call_operand.hbm [shape: bf16[128,128], index: 2, kind: input, shape index: {}]
  %s3 = inlined_call_operand.hbm [shape: bf16[128,128], index: 3, kind: input, shape index: {}]
  %s4 = inlined_call_operand.vmem [shape: f32[1,128], index: 4, kind: input, shape index: {}]
  %s5 = inlined_call_operand.vmem [shape: f32[1,128], index: 5, kind: input, shape index: {}]
  %s6 = inlined_call_operand.vmem [shape: f32[1,128], index: 6, kind: input, shape index: {}]
  %s7 = inlined_call_operand.hbm [shape: bf16[128,128], index: 7, kind: input, shape index: {}]
  %s8 = inlined_call_operand.hbm [shape: bf16[128,128], index: 8, kind: input, shape index: {}]
  %s9 = inlined_call_operand.vmem [shape: f32[1,128], index: 9, kind: input, shape index: {}]
  %s10 = inlined_call_operand.vmem [shape: f32[1,128], index: 10, kind: input, shape index: {}]
  %s11 = inlined_call_operand.vmem [shape: f32[1,128], index: 11, kind: input, shape index: {}]
  %s12 = inlined_call_operand.hbm [shape: bf16[128,128], index: 12, kind: input, shape index: {}]
  %s13 = inlined_call_operand.hbm [shape: bf16[128,128], index: 13, kind: input, shape index: {}]
  %s14 = inlined_call_operand.vmem [shape: f32[1,128], index: 14, kind: input, shape index: {}]
  %s15 = inlined_call_operand.vmem [shape: f32[1,128], index: 15, kind: input, shape index: {}]
  %s16 = inlined_call_operand.vmem [shape: f32[1,128], index: 16, kind: input, shape index: {}]
  %s17 = inlined_call_operand.hbm [shape: bf16[128,128], index: 17, kind: input, shape index: {}]
  %s18 = inlined_call_operand.hbm [shape: bf16[128,128], index: 18, kind: input, shape index: {}]
  %s19 = inlined_call_operand.hbm [shape: bf16[128,128], index: 19, kind: input, shape index: {}]
  %s20 = inlined_call_operand.vmem [shape: f32[1,128], index: 20, kind: input, shape index: {}]
  %s21 = inlined_call_operand.hbm [shape: f32[2,32,128], index: 21, kind: output, shape index: {}]
  %s22 = sld [smem:[#allocation0]]
  $region181: #{tpu_custom_call.1} parent=0
    _
  %s24 = ssub.s32 1, %s22
  %s25 = scalar_select 0, %s24, %s22
  $region1: #{tpu_custom_call.1} parent=0
    #allocation6 [shape = 'u8[16384]{0}', space=vmem, size = 0x4000, scoped, tag = 'input window, operand 0']
    #allocation7 [shape = 's32[2]{0}', space=sflag, size = 0x8, scoped, tag = 'scoped memory for tpu_custom_call.1']
    #allocation8 [shape = 's32[2]{0}', space=sflag, size = 0x8, scoped, tag = 'scoped memory for tpu_custom_call.1']
    #allocation9 [shape = 'u8[16384]{0}', space=vmem, size = 0x4000, scoped, tag = 'input window, operand 1']
    #allocation10 [shape = 's32[2]{0}', space=sflag, size = 0x8, scoped, tag = 'scoped memory for tpu_custom_call.1']
    #allocation11 [shape = 'u8[32768]{0}', space=vmem, size = 0x8000, scoped, tag = 'input window, operand 2, single buffered']
    #allocation12 [shape = 'u8[32768]{0}', space=vmem, size = 0x8000, scoped, tag = 'input window, operand 3, single buffered']
    #allocation13 [shape = 's32[1]{0}', space=sflag, size = 0x4, scoped, tag = 'scoped memory for tpu_custom_call.1']
    #allocation14 [shape = 'u8[32768]{0}', space=vmem, size = 0x8000, scoped, tag = 'input window, operand 7, single buffered']
    #allocation15 [shape = 'u8[32768]{0}', space=vmem, size = 0x8000, scoped, tag = 'input window, operand 8, single buffered']
    #allocation16 [shape = 's32[1]{0}', space=sflag, size = 0x4, scoped, tag = 'scoped memory for tpu_custom_call.1']
    #allocation17 [shape = 'u8[32768]{0}', space=vmem, size = 0x8000, scoped, tag = 'input window, operand 12, single buffered']
    #allocation18 [shape = 'u8[32768]{0}', space=vmem, size = 0x8000, scoped, tag = 'input window, operand 13, single buffered']
    #allocation19 [shape = 's32[1]{0}', space=sflag, size = 0x4, scoped, tag = 'scoped memory for tpu_custom_call.1']
    #allocation20 [shape = 'u8[32768]{0}', space=vmem, size = 0x8000, scoped, tag = 'input window, operand 17, single buffered']
    #allocation21 [shape = 'u8[32768]{0}', space=vmem, size = 0x8000, scoped, tag = 'input window, operand 18, single buffered']
    #allocation22 [shape = 's32[1]{0}', space=sflag, size = 0x4, scoped, tag = 'scoped memory for tpu_custom_call.1']
    #allocation23 [shape = 'u8[32768]{0}', space=vmem, size = 0x8000, scoped, tag = 'input window, operand 19, single buffered']
    #allocation24 [shape = 'u8[32768]{0}', space=vmem, size = 0x8000, scoped, tag = 'output window, operand 0']
    %26 = vsyncpa [#allocation7], 0
    %s27 = scalar_lea.sflag [#allocation7], 1
    %28 = vsyncpa %s27, 0
    %29 = vsyncpa [#allocation10], 0
    %s30 = scalar_lea.sflag [#allocation10], 1
    %31 = vsyncpa %s30, 0
    %32 = vsyncpa [#allocation13], 0
    %33 = vsyncpa [#allocation16], 0
    %34 = vsyncpa [#allocation19], 0
    %35 = vsyncpa [#allocation22], 0
    %36 = vsyncpa [#allocation8], 0
    %s37 = scalar_lea.sflag [#allocation8], 1
    %38 = vsyncpa %s37, 0
    loop: start=0, step=1, limit=10
    $region2: #{tpu_custom_call.1} parent=1 // loop_pre_header
      _
    $region3: #{tpu_custom_call.1} parent=1 // loop_header
      %s40 = sphi 0, %s44
      %p41 = scmp.ge.s32.totalorder %s40, 10
      %s47 = sphi 0, %s59
      %s48 = sphi 0, %s55
      %s49 = sphi 0, %s47
      %s50 = sphi 0, %s48
      %s51 = sphi 0, %s49
      %s52 = sphi 0, %s50
      %s66 = sphi 0, %s68
      %s69 = sphi 0, %s66
      %s70 = sphi 0, %s69
      %s86 = sphi 0, %s70
      %s96 = sphi 0, %s98
      %s99 = sphi 0, %s96
      %s100 = sphi 0, %s99
      %s116 = sphi 0, %s100
      %s120 = sphi 0, %s120
      %s122 = sphi 0, %s120
      %s123 = sphi 0, %s122
      %s137 = sphi 0, %s123
      %s141 = sphi 0, %s141
      %s143 = sphi 0, %s141
      %s144 = sphi 0, %s143
      %s158 = sphi 0, %s144
      %s162 = sphi 0, %s162
      %s164 = sphi 0, %s162
      %s165 = sphi 0, %s164
      %s179 = sphi 0, %s165
      %s183 = sphi 0, %s183
      %s185 = sphi 0, %s183
      %s186 = sphi 0, %s185
      %s200 = sphi 0, %s186
      %s204 = sphi 0, %s204
      %s206 = sphi 0, %s204
      %s207 = sphi 0, %s206
      %s221 = sphi 0, %s207
      %s225 = sphi 0, %s225
      %s227 = sphi 0, %s225
      %s228 = sphi 0, %s227
      %s242 = sphi 0, %s228
      %s246 = sphi 0, %s246
      %s248 = sphi 0, %s246
      %s249 = sphi 0, %s248
      %s263 = sphi 0, %s249
      %s267 = sphi 0, %s267
      %s269 = sphi 0, %s267
      %s270 = sphi 0, %s269
      %s284 = sphi 0, %s270
      %s288 = sphi 0, %s288
      %s290 = sphi 0, %s288
      %s291 = sphi 0, %s290
      %s305 = sphi 0, %s291
      %s309 = sphi 0, %s309
      %s311 = sphi 0, %s309
      %s312 = sphi 0, %s311
      %s326 = sphi 0, %s312
      %s330 = sphi 0, %s330
      %s332 = sphi 0, %s330
      %s333 = sphi 0, %s332
      %s347 = sphi 0, %s333
      %s351 = sphi 0, %s351
      %s353 = sphi 0, %s351
      %s354 = sphi 0, %s353
      %s368 = sphi 0, %s354
      %s372 = sphi 0, %s372
      %s374 = sphi 0, %s372
      %s375 = sphi 0, %s374
      %s389 = sphi 0, %s375
      %s393 = sphi 0, %s393
      %s395 = sphi 0, %s393
      %s396 = sphi 0, %s395
      %s410 = sphi 0, %s396
      %s414 = sphi 0, %s414
      %s416 = sphi 0, %s414
      %s417 = sphi 0, %s416
      %s431 = sphi 0, %s417
      %s435 = sphi 0, %s435
      %s437 = sphi 0, %s435
      %s438 = sphi 0, %s437
      %s452 = sphi 0, %s438
      %s456 = sphi 0, %s456
      %s458 = sphi 0, %s456
      %s459 = sphi 0, %s458
      %s473 = sphi 0, %s459
      %s477 = sphi 0, %s477
      %s479 = sphi 0, %s477
      %s480 = sphi 0, %s479
      %s494 = sphi 0, %s480
      %s498 = sphi 0, %s498
      %s500 = sphi 0, %s498
      %s501 = sphi 0, %s500
      %s515 = sphi 0, %s501
      %s525 = sphi 0, %s527
      %s528 = sphi 0, %s525
      %s529 = sphi 0, %s528
      %s545 = sphi 0, %s529
    $region4: #{tpu_custom_call.1} parent=1 // loop_header_branch
      %43 = sbr.rel (%p41) target = $region8
    $region5: #{tpu_custom_call.1} parent=1 // loop_body
      %s45 = ssub.s32 %s40, 1
      %s46 = ssub.s32 %s40, 2
      %s53 = sadd.s32 1, %s48
      %p54 = scmp.ge.s32.totalorder %s53, 2
      %s55 = scalar_select %p54, 0, %s53
      %s56 = sadd.s32 1, %s47
      %s57 = scalar_select %p54, %s56, %s47
      %p58 = scmp.ge.s32.totalorder %s57, 4
      %s59 = scalar_select %p58, 0, %s57
      %p60 = scmp.eq.s32.totalorder %s47, 0
      %s61 = scalar_select %p60, %s48, 1
      %p62 = scmp.eq.s32.totalorder %s59, 0
      %s63 = scalar_select %p62, %s55, 1
      %s64 = ssub.s32 %s61, %s63
      %p65 = scmp.eq.s32.totalorder %s64, 0
      %s67 = sadd.s32 %s66, 1
      %s68 = scalar_select %p65, %s66, %s67
      %p71 = pneg %p65
      %p72 = scmp.eq.s32.totalorder %s40, 7
      %p73 = por %p71, %p72
      %p74 = scmp.ne.s32.totalorder %s66, %s69
      %p75 = scmp.eq.s32.totalorder %s40, 0
      %p76 = por %p74, %p75
      %p77 = scmp.ne.s32.totalorder %s66, %s69
      %p78 = scmp.eq.s32.totalorder %s45, 7
      %p79 = por %p77, %p78
      %p80 = scmp.ne.s32.totalorder %s69, %s70
      %p81 = scmp.eq.s32.totalorder %s45, 0
      %p82 = por %p80, %p81
      %p83 = scmp.ne.s32.totalorder %s69, %s70
      %p84 = scmp.eq.s32.totalorder %s46, 7
      %p85 = por %p83, %p84
      %p87 = scmp.ne.s32.totalorder %s70, %s86
      %p88 = scmp.eq.s32.totalorder %s46, 0
      %p89 = por %p87, %p88
      %p90 = scmp.eq.s32.totalorder %s47, 3
      %s91 = scalar_select %p90, 1, %s48
      %p92 = scmp.eq.s32.totalorder %s59, 3
      %s93 = scalar_select %p92, 1, %s55
      %s94 = ssub.s32 %s91, %s93
      %p95 = scmp.eq.s32.totalorder %s94, 0
      %s97 = sadd.s32 %s96, 1
      %s98 = scalar_select %p95, %s96, %s97
      %p101 = pneg %p95
      %p102 = scmp.eq.s32.totalorder %s40, 7
      %p103 = por %p101, %p102
      %p104 = scmp.ne.s32.totalorder %s96, %s99
      %p105 = scmp.eq.s32.totalorder %s40, 0
      %p106 = por %p104, %p105
      %p107 = scmp.ne.s32.totalorder %s96, %s99
      %p108 = scmp.eq.s32.totalorder %s45, 7
      %p109 = por %p107, %p108
      %p110 = scmp.ne.s32.totalorder %s99, %s100
      %p111 = scmp.eq.s32.totalorder %s45, 0
      %p112 = por %p110, %p111
      %p113 = scmp.ne.s32.totalorder %s99, %s100
      %p114 = scmp.eq.s32.totalorder %s46, 7
      %p115 = por %p113, %p114
      %p117 = scmp.ne.s32.totalorder %s100, %s116
      %p118 = scmp.eq.s32.totalorder %s46, 0
      %p119 = por %p117, %p118
      %s121 = sadd.s32 %s120, 1
      %p124 = scmp.eq.s32.totalorder %s40, 7
      %p125 = scmp.ne.s32.totalorder %s120, %s122
      %p126 = scmp.eq.s32.totalorder %s40, 0
      %p127 = por %p125, %p126
      %p128 = scmp.ne.s32.totalorder %s120, %s122
      %p129 = scmp.eq.s32.totalorder %s45, 7
      %p130 = por %p128, %p129
      %p131 = scmp.ne.s32.totalorder %s122, %s123
      %p132 = scmp.eq.s32.totalorder %s45, 0
      %p133 = por %p131, %p132
      %p134 = scmp.ne.s32.totalorder %s122, %s123
      %p135 = scmp.eq.s32.totalorder %s46, 7
      %p136 = por %p134, %p135
      %p138 = scmp.ne.s32.totalorder %s123, %s137
      %p139 = scmp.eq.s32.totalorder %s46, 0
      %p140 = por %p138, %p139
      %s142 = sadd.s32 %s141, 1
      %p145 = scmp.eq.s32.totalorder %s40, 7
      %p146 = scmp.ne.s32.totalorder %s141, %s143
      %p147 = scmp.eq.s32.totalorder %s40, 0
      %p148 = por %p146, %p147
      %p149 = scmp.ne.s32.totalorder %s141, %s143
      %p150 = scmp.eq.s32.totalorder %s45, 7
      %p151 = por %p149, %p150
      %p152 = scmp.ne.s32.totalorder %s143, %s144
      %p153 = scmp.eq.s32.totalorder %s45, 0
      %p154 = por %p152, %p153
      %p155 = scmp.ne.s32.totalorder %s143, %s144
      %p156 = scmp.eq.s32.totalorder %s46, 7
      %p157 = por %p155, %p156
      %p159 = scmp.ne.s32.totalorder %s144, %s158
      %p160 = scmp.eq.s32.totalorder %s46, 0
      %p161 = por %p159, %p160
      %s163 = sadd.s32 %s162, 1
      %p166 = scmp.eq.s32.totalorder %s40, 7
      %p167 = scmp.ne.s32.totalorder %s162, %s164
      %p168 = scmp.eq.s32.totalorder %s40, 0
      %p169 = por %p167, %p168
      %p170 = scmp.ne.s32.totalorder %s162, %s164
      %p171 = scmp.eq.s32.totalorder %s45, 7
      %p172 = por %p170, %p171
      %p173 = scmp.ne.s32.totalorder %s164, %s165
      %p174 = scmp.eq.s32.totalorder %s45, 0
      %p175 = por %p173, %p174
      %p176 = scmp.ne.s32.totalorder %s164, %s165
      %p177 = scmp.eq.s32.totalorder %s46, 7
      %p178 = por %p176, %p177
      %p180 = scmp.ne.s32.totalorder %s165, %s179
      %p181 = scmp.eq.s32.totalorder %s46, 0
      %p182 = por %p180, %p181
      %s184 = sadd.s32 %s183, 1
      %p187 = scmp.eq.s32.totalorder %s40, 7
      %p188 = scmp.ne.s32.totalorder %s183, %s185
      %p189 = scmp.eq.s32.totalorder %s40, 0
      %p190 = por %p188, %p189
      %p191 = scmp.ne.s32.totalorder %s183, %s185
      %p192 = scmp.eq.s32.totalorder %s45, 7
      %p193 = por %p191, %p192
      %p194 = scmp.ne.s32.totalorder %s185, %s186
      %p195 = scmp.eq.s32.totalorder %s45, 0
      %p196 = por %p194, %p195
      %p197 = scmp.ne.s32.totalorder %s185, %s186
      %p198 = scmp.eq.s32.totalorder %s46, 7
      %p199 = por %p197, %p198
      %p201 = scmp.ne.s32.totalorder %s186, %s200
      %p202 = scmp.eq.s32.totalorder %s46, 0
      %p203 = por %p201, %p202
      %s205 = sadd.s32 %s204, 1
      %p208 = scmp.eq.s32.totalorder %s40, 7
      %p209 = scmp.ne.s32.totalorder %s204, %s206
      %p210 = scmp.eq.s32.totalorder %s40, 0
      %p211 = por %p209, %p210
      %p212 = scmp.ne.s32.totalorder %s204, %s206
      %p213 = scmp.eq.s32.totalorder %s45, 7
      %p214 = por %p212, %p213
      %p215 = scmp.ne.s32.totalorder %s206, %s207
      %p216 = scmp.eq.s32.totalorder %s45, 0
      %p217 = por %p215, %p216
      %p218 = scmp.ne.s32.totalorder %s206, %s207
      %p219 = scmp.eq.s32.totalorder %s46, 7
      %p220 = por %p218, %p219
      %p222 = scmp.ne.s32.totalorder %s207, %s221
      %p223 = scmp.eq.s32.totalorder %s46, 0
      %p224 = por %p222, %p223
      %s226 = sadd.s32 %s225, 1
      %p229 = scmp.eq.s32.totalorder %s40, 7
      %p230 = scmp.ne.s32.totalorder %s225, %s227
      %p231 = scmp.eq.s32.totalorder %s40, 0
      %p232 = por %p230, %p231
      %p233 = scmp.ne.s32.totalorder %s225, %s227
      %p234 = scmp.eq.s32.totalorder %s45, 7
      %p235 = por %p233, %p234
      %p236 = scmp.ne.s32.totalorder %s227, %s228
      %p237 = scmp.eq.s32.totalorder %s45, 0
      %p238 = por %p236, %p237
      %p239 = scmp.ne.s32.totalorder %s227, %s228
      %p240 = scmp.eq.s32.totalorder %s46, 7
      %p241 = por %p239, %p240
      %p243 = scmp.ne.s32.totalorder %s228, %s242
      %p244 = scmp.eq.s32.totalorder %s46, 0
      %p245 = por %p243, %p244
      %s247 = sadd.s32 %s246, 1
      %p250 = scmp.eq.s32.totalorder %s40, 7
      %p251 = scmp.ne.s32.totalorder %s246, %s248
      %p252 = scmp.eq.s32.totalorder %s40, 0
      %p253 = por %p251, %p252
      %p254 = scmp.ne.s32.totalorder %s246, %s248
      %p255 = scmp.eq.s32.totalorder %s45, 7
      %p256 = por %p254, %p255
      %p257 = scmp.ne.s32.totalorder %s248, %s249
      %p258 = scmp.eq.s32.totalorder %s45, 0
      %p259 = por %p257, %p258
      %p260 = scmp.ne.s32.totalorder %s248, %s249
      %p261 = scmp.eq.s32.totalorder %s46, 7
      %p262 = por %p260, %p261
      %p264 = scmp.ne.s32.totalorder %s249, %s263
      %p265 = scmp.eq.s32.totalorder %s46, 0
      %p266 = por %p264, %p265
      %s268 = sadd.s32 %s267, 1
      %p271 = scmp.eq.s32.totalorder %s40, 7
      %p272 = scmp.ne.s32.totalorder %s267, %s269
      %p273 = scmp.eq.s32.totalorder %s40, 0
      %p274 = por %p272, %p273
      %p275 = scmp.ne.s32.totalorder %s267, %s269
      %p276 = scmp.eq.s32.totalorder %s45, 7
      %p277 = por %p275, %p276
      %p278 = scmp.ne.s32.totalorder %s269, %s270
      %p279 = scmp.eq.s32.totalorder %s45, 0
      %p280 = por %p278, %p279
      %p281 = scmp.ne.s32.totalorder %s269, %s270
      %p282 = scmp.eq.s32.totalorder %s46, 7
      %p283 = por %p281, %p282
      %p285 = scmp.ne.s32.totalorder %s270, %s284
      %p286 = scmp.eq.s32.totalorder %s46, 0
      %p287 = por %p285, %p286
      %s289 = sadd.s32 %s288, 1
      %p292 = scmp.eq.s32.totalorder %s40, 7
      %p293 = scmp.ne.s32.totalorder %s288, %s290
      %p294 = scmp.eq.s32.totalorder %s40, 0
      %p295 = por %p293, %p294
      %p296 = scmp.ne.s32.totalorder %s288, %s290
      %p297 = scmp.eq.s32.totalorder %s45, 7
      %p298 = por %p296, %p297
      %p299 = scmp.ne.s32.totalorder %s290, %s291
      %p300 = scmp.eq.s32.totalorder %s45, 0
      %p301 = por %p299, %p300
      %p302 = scmp.ne.s32.totalorder %s290, %s291
      %p303 = scmp.eq.s32.totalorder %s46, 7
      %p304 = por %p302, %p303
      %p306 = scmp.ne.s32.totalorder %s291, %s305
      %p307 = scmp.eq.s32.totalorder %s46, 0
      %p308 = por %p306, %p307
      %s310 = sadd.s32 %s309, 1
      %p313 = scmp.eq.s32.totalorder %s40, 7
      %p314 = scmp.ne.s32.totalorder %s309, %s311
      %p315 = scmp.eq.s32.totalorder %s40, 0
      %p316 = por %p314, %p315
      %p317 = scmp.ne.s32.totalorder %s309, %s311
      %p318 = scmp.eq.s32.totalorder %s45, 7
      %p319 = por %p317, %p318
      %p320 = scmp.ne.s32.totalorder %s311, %s312
      %p321 = scmp.eq.s32.totalorder %s45, 0
      %p322 = por %p320, %p321
      %p323 = scmp.ne.s32.totalorder %s311, %s312
      %p324 = scmp.eq.s32.totalorder %s46, 7
      %p325 = por %p323, %p324
      %p327 = scmp.ne.s32.totalorder %s312, %s326
      %p328 = scmp.eq.s32.totalorder %s46, 0
      %p329 = por %p327, %p328
      %s331 = sadd.s32 %s330, 1
      %p334 = scmp.eq.s32.totalorder %s40, 7
      %p335 = scmp.ne.s32.totalorder %s330, %s332
      %p336 = scmp.eq.s32.totalorder %s40, 0
      %p337 = por %p335, %p336
      %p338 = scmp.ne.s32.totalorder %s330, %s332
      %p339 = scmp.eq.s32.totalorder %s45, 7
      %p340 = por %p338, %p339
      %p341 = scmp.ne.s32.totalorder %s332, %s333
      %p342 = scmp.eq.s32.totalorder %s45, 0
      %p343 = por %p341, %p342
      %p344 = scmp.ne.s32.totalorder %s332, %s333
      %p345 = scmp.eq.s32.totalorder %s46, 7
      %p346 = por %p344, %p345
      %p348 = scmp.ne.s32.totalorder %s333, %s347
      %p349 = scmp.eq.s32.totalorder %s46, 0
      %p350 = por %p348, %p349
      %s352 = sadd.s32 %s351, 1
      %p355 = scmp.eq.s32.totalorder %s40, 7
      %p356 = scmp.ne.s32.totalorder %s351, %s353
      %p357 = scmp.eq.s32.totalorder %s40, 0
      %p358 = por %p356, %p357
      %p359 = scmp.ne.s32.totalorder %s351, %s353
      %p360 = scmp.eq.s32.totalorder %s45, 7
      %p361 = por %p359, %p360
      %p362 = scmp.ne.s32.totalorder %s353, %s354
      %p363 = scmp.eq.s32.totalorder %s45, 0
      %p364 = por %p362, %p363
      %p365 = scmp.ne.s32.totalorder %s353, %s354
      %p366 = scmp.eq.s32.totalorder %s46, 7
      %p367 = por %p365, %p366
      %p369 = scmp.ne.s32.totalorder %s354, %s368
      %p370 = scmp.eq.s32.totalorder %s46, 0
      %p371 = por %p369, %p370
      %s373 = sadd.s32 %s372, 1
      %p376 = scmp.eq.s32.totalorder %s40, 7
      %p377 = scmp.ne.s32.totalorder %s372, %s374
      %p378 = scmp.eq.s32.totalorder %s40, 0
      %p379 = por %p377, %p378
      %p380 = scmp.ne.s32.totalorder %s372, %s374
      %p381 = scmp.eq.s32.totalorder %s45, 7
      %p382 = por %p380, %p381
      %p383 = scmp.ne.s32.totalorder %s374, %s375
      %p384 = scmp.eq.s32.totalorder %s45, 0
      %p385 = por %p383, %p384
      %p386 = scmp.ne.s32.totalorder %s374, %s375
      %p387 = scmp.eq.s32.totalorder %s46, 7
      %p388 = por %p386, %p387
      %p390 = scmp.ne.s32.totalorder %s375, %s389
      %p391 = scmp.eq.s32.totalorder %s46, 0
      %p392 = por %p390, %p391
      %s394 = sadd.s32 %s393, 1
      %p397 = scmp.eq.s32.totalorder %s40, 7
      %p398 = scmp.ne.s32.totalorder %s393, %s395
      %p399 = scmp.eq.s32.totalorder %s40, 0
      %p400 = por %p398, %p399
      %p401 = scmp.ne.s32.totalorder %s393, %s395
      %p402 = scmp.eq.s32.totalorder %s45, 7
      %p403 = por %p401, %p402
      %p404 = scmp.ne.s32.totalorder %s395, %s396
      %p405 = scmp.eq.s32.totalorder %s45, 0
      %p406 = por %p404, %p405
      %p407 = scmp.ne.s32.totalorder %s395, %s396
      %p408 = scmp.eq.s32.totalorder %s46, 7
      %p409 = por %p407, %p408
      %p411 = scmp.ne.s32.totalorder %s396, %s410
      %p412 = scmp.eq.s32.totalorder %s46, 0
      %p413 = por %p411, %p412
      %s415 = sadd.s32 %s414, 1
      %p418 = scmp.eq.s32.totalorder %s40, 7
      %p419 = scmp.ne.s32.totalorder %s414, %s416
      %p420 = scmp.eq.s32.totalorder %s40, 0
      %p421 = por %p419, %p420
      %p422 = scmp.ne.s32.totalorder %s414, %s416
      %p423 = scmp.eq.s32.totalorder %s45, 7
      %p424 = por %p422, %p423
      %p425 = scmp.ne.s32.totalorder %s416, %s417
      %p426 = scmp.eq.s32.totalorder %s45, 0
      %p427 = por %p425, %p426
      %p428 = scmp.ne.s32.totalorder %s416, %s417
      %p429 = scmp.eq.s32.totalorder %s46, 7
      %p430 = por %p428, %p429
      %p432 = scmp.ne.s32.totalorder %s417, %s431
      %p433 = scmp.eq.s32.totalorder %s46, 0
      %p434 = por %p432, %p433
      %s436 = sadd.s32 %s435, 1
      %p439 = scmp.eq.s32.totalorder %s40, 7
      %p440 = scmp.ne.s32.totalorder %s435, %s437
      %p441 = scmp.eq.s32.totalorder %s40, 0
      %p442 = por %p440, %p441
      %p443 = scmp.ne.s32.totalorder %s435, %s437
      %p444 = scmp.eq.s32.totalorder %s45, 7
      %p445 = por %p443, %p444
      %p446 = scmp.ne.s32.totalorder %s437, %s438
      %p447 = scmp.eq.s32.totalorder %s45, 0
      %p448 = por %p446, %p447
      %p449 = scmp.ne.s32.totalorder %s437, %s438
      %p450 = scmp.eq.s32.totalorder %s46, 7
      %p451 = por %p449, %p450
      %p453 = scmp.ne.s32.totalorder %s438, %s452
      %p454 = scmp.eq.s32.totalorder %s46, 0
      %p455 = por %p453, %p454
      %s457 = sadd.s32 %s456, 1
      %p460 = scmp.eq.s32.totalorder %s40, 7
      %p461 = scmp.ne.s32.totalorder %s456, %s458
      %p462 = scmp.eq.s32.totalorder %s40, 0
      %p463 = por %p461, %p462
      %p464 = scmp.ne.s32.totalorder %s456, %s458
      %p465 = scmp.eq.s32.totalorder %s45, 7
      %p466 = por %p464, %p465
      %p467 = scmp.ne.s32.totalorder %s458, %s459
      %p468 = scmp.eq.s32.totalorder %s45, 0
      %p469 = por %p467, %p468
      %p470 = scmp.ne.s32.totalorder %s458, %s459
      %p471 = scmp.eq.s32.totalorder %s46, 7
      %p472 = por %p470, %p471
      %p474 = scmp.ne.s32.totalorder %s459, %s473
      %p475 = scmp.eq.s32.totalorder %s46, 0
      %p476 = por %p474, %p475
      %s478 = sadd.s32 %s477, 1
      %p481 = scmp.eq.s32.totalorder %s40, 7
      %p482 = scmp.ne.s32.totalorder %s477, %s479
      %p483 = scmp.eq.s32.totalorder %s40, 0
      %p484 = por %p482, %p483
      %p485 = scmp.ne.s32.totalorder %s477, %s479
      %p486 = scmp.eq.s32.totalorder %s45, 7
      %p487 = por %p485, %p486
      %p488 = scmp.ne.s32.totalorder %s479, %s480
      %p489 = scmp.eq.s32.totalorder %s45, 0
      %p490 = por %p488, %p489
      %p491 = scmp.ne.s32.totalorder %s479, %s480
      %p492 = scmp.eq.s32.totalorder %s46, 7
      %p493 = por %p491, %p492
      %p495 = scmp.ne.s32.totalorder %s480, %s494
      %p496 = scmp.eq.s32.totalorder %s46, 0
      %p497 = por %p495, %p496
      %s499 = sadd.s32 %s498, 1
      %p502 = scmp.eq.s32.totalorder %s40, 7
      %p503 = scmp.ne.s32.totalorder %s498, %s500
      %p504 = scmp.eq.s32.totalorder %s40, 0
      %p505 = por %p503, %p504
      %p506 = scmp.ne.s32.totalorder %s498, %s500
      %p507 = scmp.eq.s32.totalorder %s45, 7
      %p508 = por %p506, %p507
      %p509 = scmp.ne.s32.totalorder %s500, %s501
      %p510 = scmp.eq.s32.totalorder %s45, 0
      %p511 = por %p509, %p510
      %p512 = scmp.ne.s32.totalorder %s500, %s501
      %p513 = scmp.eq.s32.totalorder %s46, 7
      %p514 = por %p512, %p513
      %p516 = scmp.ne.s32.totalorder %s501, %s515
      %p517 = scmp.eq.s32.totalorder %s46, 0
      %p518 = por %p516, %p517
      %p519 = scmp.eq.s32.totalorder %s47, 3
      %s520 = scalar_select %p519, %s48, 0
      %p521 = scmp.eq.s32.totalorder %s59, 3
      %s522 = scalar_select %p521, %s55, 0
      %s523 = ssub.s32 %s520, %s522
      %p524 = scmp.eq.s32.totalorder %s523, 0
      %s526 = sadd.s32 %s525, 1
      %s527 = scalar_select %p524, %s525, %s526
      %p530 = pneg %p524
      %p531 = scmp.eq.s32.totalorder %s40, 7
      %p532 = por %p530, %p531
      %p533 = scmp.ne.s32.totalorder %s525, %s528
      %p534 = scmp.eq.s32.totalorder %s40, 0
      %p535 = por %p533, %p534
      %p536 = scmp.ne.s32.totalorder %s525, %s528
      %p537 = scmp.eq.s32.totalorder %s45, 7
      %p538 = por %p536, %p537
      %p539 = scmp.ne.s32.totalorder %s528, %s529
      %p540 = scmp.eq.s32.totalorder %s45, 0
      %p541 = por %p539, %p540
      %p542 = scmp.ne.s32.totalorder %s528, %s529
      %p543 = scmp.eq.s32.totalorder %s46, 7
      %p544 = por %p542, %p543
      %p546 = scmp.ne.s32.totalorder %s529, %s545
      %p547 = scmp.eq.s32.totalorder %s46, 0
      %p548 = por %p546, %p547
      %p549 = scmp.le.s32.totalorder 1, %s40
      %p550 = scmp.lt.s32.totalorder %s40, 9
      %p551 = pnand %p549, %p550
      %p552 = pneg %p551
      // Predicated region
      $region9: #{tpu_custom_call.1} parent=5 // pred_check
        _
      $region10: #{tpu_custom_call.1} parent=5 // pred_check_branch
        %554 = sbr.rel (%p551) target = $region12
      $region11: #{tpu_custom_call.1} parent=5 // pred_region
        %s555 = ssub.s32 %s40, 1
        // Predicated region
        $region13: #{tpu_custom_call.1} parent=11 // pred_check
          %p556 = pneg %p133
        $region14: #{tpu_custom_call.1} parent=11 // pred_check_branch
          %558 = sbr.rel (%p556) target = $region16
        $region15: #{tpu_custom_call.1} parent=11 // pred_region
          %560 = vsyncadd [#allocation10], 0
          %s561 = sshll.u32 %s2, 4
          %s562 = int_to_ptr.hbm [resolvable:$true] %s561
          %s563 = sshll.u32 [#allocation11], 4
          %s564 = int_to_ptr.vmem [resolvable:$true] %s563
          %569 = dma.hbm_to_vmem [thread:$0]  %s562, 1024, %s564, [#allocation10], 64, 64, 4
        $region16: #{tpu_custom_call.1} parent=11 // pred_fallthru
          _
        // Predicated region
        $region17: #{tpu_custom_call.1} parent=11 // pred_check
          %p570 = pneg %p154
        $region18: #{tpu_custom_call.1} parent=11 // pred_check_branch
          %572 = sbr.rel (%p570) target = $region20
        $region19: #{tpu_custom_call.1} parent=11 // pred_region
          %574 = vsyncadd [#allocation13], 0
          %s575 = sshll.u32 %s3, 4
          %s576 = int_to_ptr.hbm [resolvable:$true] %s575
          %s577 = sshll.u32 [#allocation12], 4
          %s578 = int_to_ptr.vmem [resolvable:$true] %s577
          %583 = dma.hbm_to_vmem [thread:$0]  %s576, 1024, %s578, [#allocation13], 64, 64, 4
        $region20: #{tpu_custom_call.1} parent=11 // pred_fallthru
          _
        // Predicated region
        $region21: #{tpu_custom_call.1} parent=11 // pred_check
          %p584 = pneg %p175
        $region22: #{tpu_custom_call.1} parent=11 // pred_check_branch
          %586 = sbr.rel (%p584) target = $region24
        $region23: #{tpu_custom_call.1} parent=11 // pred_region
          _
        $region24: #{tpu_custom_call.1} parent=11 // pred_fallthru
          _
        // Predicated region
        $region25: #{tpu_custom_call.1} parent=11 // pred_check
          %p587 = pneg %p196
        $region26: #{tpu_custom_call.1} parent=11 // pred_check_branch
          %589 = sbr.rel (%p587) target = $region28
        $region27: #{tpu_custom_call.1} parent=11 // pred_region
          _
        $region28: #{tpu_custom_call.1} parent=11 // pred_fallthru
          _
        // Predicated region
        $region29: #{tpu_custom_call.1} parent=11 // pred_check
          %p590 = pneg %p217
        $region30: #{tpu_custom_call.1} parent=11 // pred_check_branch
          %592 = sbr.rel (%p590) target = $region32
        $region31: #{tpu_custom_call.1} parent=11 // pred_region
          _
        $region32: #{tpu_custom_call.1} parent=11 // pred_fallthru
          _
        // Predicated region
        $region33: #{tpu_custom_call.1} parent=11 // pred_check
          %p593 = pneg %p238
        $region34: #{tpu_custom_call.1} parent=11 // pred_check_branch
          %595 = sbr.rel (%p593) target = $region36
        $region35: #{tpu_custom_call.1} parent=11 // pred_region
          %597 = vsyncadd [#allocation13], 0
          %s598 = sshll.u32 %s7, 4
          %s599 = int_to_ptr.hbm [resolvable:$true] %s598
          %s600 = sshll.u32 [#allocation14], 4
          %s601 = int_to_ptr.vmem [resolvable:$true] %s600
          %606 = dma.hbm_to_vmem [thread:$0]  %s599, 1024, %s601, [#allocation13], 64, 64, 4
        $region36: #{tpu_custom_call.1} parent=11 // pred_fallthru
          _
        // Predicated region
        $region37: #{tpu_custom_call.1} parent=11 // pred_check
          %p607 = pneg %p259
        $region38: #{tpu_custom_call.1} parent=11 // pred_check_branch
          %609 = sbr.rel (%p607) target = $region40
        $region39: #{tpu_custom_call.1} parent=11 // pred_region
          %611 = vsyncadd [#allocation16], 0
          %s612 = sshll.u32 %s8, 4
          %s613 = int_to_ptr.hbm [resolvable:$true] %s612
          %s614 = sshll.u32 [#allocation15], 4
          %s615 = int_to_ptr.vmem [resolvable:$true] %s614
          %620 = dma.hbm_to_vmem [thread:$0]  %s613, 1024, %s615, [#allocation16], 64, 64, 4
        $region40: #{tpu_custom_call.1} parent=11 // pred_fallthru
          _
        // Predicated region
        $region41: #{tpu_custom_call.1} parent=11 // pred_check
          %p621 = pneg %p280
        $region42: #{tpu_custom_call.1} parent=11 // pred_check_branch
          %623 = sbr.rel (%p621) target = $region44
        $region43: #{tpu_custom_call.1} parent=11 // pred_region
          _
        $region44: #{tpu_custom_call.1} parent=11 // pred_fallthru
          _
        // Predicated region
        $region45: #{tpu_custom_call.1} parent=11 // pred_check
          %p624 = pneg %p301
        $region46: #{tpu_custom_call.1} parent=11 // pred_check_branch
          %626 = sbr.rel (%p624) target = $region48
        $region47: #{tpu_custom_call.1} parent=11 // pred_region
          _
        $region48: #{tpu_custom_call.1} parent=11 // pred_fallthru
          _
        // Predicated region
        $region49: #{tpu_custom_call.1} parent=11 // pred_check
          %p627 = pneg %p322
        $region50: #{tpu_custom_call.1} parent=11 // pred_check_branch
          %629 = sbr.rel (%p627) target = $region52
        $region51: #{tpu_custom_call.1} parent=11 // pred_region
          _
        $region52: #{tpu_custom_call.1} parent=11 // pred_fallthru
          _
        // Predicated region
        $region53: #{tpu_custom_call.1} parent=11 // pred_check
          %p630 = pneg %p343
        $region54: #{tpu_custom_call.1} parent=11 // pred_check_branch
          %632 = sbr.rel (%p630) target = $region56
        $region55: #{tpu_custom_call.1} parent=11 // pred_region
          %634 = vsyncadd [#allocation16], 0
          %s635 = sshll.u32 %s12, 4
          %s636 = int_to_ptr.hbm [resolvable:$true] %s635
          %s637 = sshll.u32 [#allocation17], 4
          %s638 = int_to_ptr.vmem [resolvable:$true] %s637
          %643 = dma.hbm_to_vmem [thread:$0]  %s636, 1024, %s638, [#allocation16], 64, 64, 4
        $region56: #{tpu_custom_call.1} parent=11 // pred_fallthru
          _
        // Predicated region
        $region57: #{tpu_custom_call.1} parent=11 // pred_check
          %p644 = pneg %p364
        $region58: #{tpu_custom_call.1} parent=11 // pred_check_branch
          %646 = sbr.rel (%p644) target = $region60
        $region59: #{tpu_custom_call.1} parent=11 // pred_region
          %648 = vsyncadd [#allocation19], 0
          %s649 = sshll.u32 %s13, 4
          %s650 = int_to_ptr.hbm [resolvable:$true] %s649
          %s651 = sshll.u32 [#allocation18], 4
          %s652 = int_to_ptr.vmem [resolvable:$true] %s651
          %657 = dma.hbm_to_vmem [thread:$0]  %s650, 1024, %s652, [#allocation19], 64, 64, 4
        $region60: #{tpu_custom_call.1} parent=11 // pred_fallthru
          _
        // Predicated region
        $region61: #{tpu_custom_call.1} parent=11 // pred_check
          %p658 = pneg %p385
        $region62: #{tpu_custom_call.1} parent=11 // pred_check_branch
          %660 = sbr.rel (%p658) target = $region64
        $region63: #{tpu_custom_call.1} parent=11 // pred_region
          _
        $region64: #{tpu_custom_call.1} parent=11 // pred_fallthru
          _
        // Predicated region
        $region65: #{tpu_custom_call.1} parent=11 // pred_check
          %p661 = pneg %p406
        $region66: #{tpu_custom_call.1} parent=11 // pred_check_branch
          %663 = sbr.rel (%p661) target = $region68
        $region67: #{tpu_custom_call.1} parent=11 // pred_region
          _
        $region68: #{tpu_custom_call.1} parent=11 // pred_fallthru
          _
        // Predicated region
        $region69: #{tpu_custom_call.1} parent=11 // pred_check
          %p664 = pneg %p427
        $region70: #{tpu_custom_call.1} parent=11 // pred_check_branch
          %666 = sbr.rel (%p664) target = $region72
        $region71: #{tpu_custom_call.1} parent=11 // pred_region
          _
        $region72: #{tpu_custom_call.1} parent=11 // pred_fallthru
          _
        // Predicated region
        $region73: #{tpu_custom_call.1} parent=11 // pred_check
          %p667 = pneg %p448
        $region74: #{tpu_custom_call.1} parent=11 // pred_check_branch
          %669 = sbr.rel (%p667) target = $region76
        $region75: #{tpu_custom_call.1} parent=11 // pred_region
          %671 = vsyncadd [#allocation19], 0
          %s672 = sshll.u32 %s17, 4
          %s673 = int_to_ptr.hbm [resolvable:$true] %s672
          %s674 = sshll.u32 [#allocation20], 4
          %s675 = int_to_ptr.vmem [resolvable:$true] %s674
          %680 = dma.hbm_to_vmem [thread:$0]  %s673, 1024, %s675, [#allocation19], 64, 64, 4
        $region76: #{tpu_custom_call.1} parent=11 // pred_fallthru
          _
        // Predicated region
        $region77: #{tpu_custom_call.1} parent=11 // pred_check
          %p681 = pneg %p469
        $region78: #{tpu_custom_call.1} parent=11 // pred_check_branch
          %683 = sbr.rel (%p681) target = $region80
        $region79: #{tpu_custom_call.1} parent=11 // pred_region
          %685 = vsyncadd [#allocation22], 0
          %s686 = sshll.u32 %s18, 4
          %s687 = int_to_ptr.hbm [resolvable:$true] %s686
          %s688 = sshll.u32 [#allocation21], 4
          %s689 = int_to_ptr.vmem [resolvable:$true] %s688
          %694 = dma.hbm_to_vmem [thread:$0]  %s687, 1024, %s689, [#allocation22], 64, 64, 4
        $region80: #{tpu_custom_call.1} parent=11 // pred_fallthru
          _
        // Predicated region
        $region81: #{tpu_custom_call.1} parent=11 // pred_check
          %p695 = pneg %p490
        $region82: #{tpu_custom_call.1} parent=11 // pred_check_branch
          %697 = sbr.rel (%p695) target = $region84
        $region83: #{tpu_custom_call.1} parent=11 // pred_region
          %699 = vsyncadd [#allocation22], 0
          %s700 = sshll.u32 %s19, 4
          %s701 = int_to_ptr.hbm [resolvable:$true] %s700
          %s702 = sshll.u32 [#allocation23], 4
          %s703 = int_to_ptr.vmem [resolvable:$true] %s702
          %708 = dma.hbm_to_vmem [thread:$0]  %s701, 1024, %s703, [#allocation22], 64, 64, 4
        $region84: #{tpu_custom_call.1} parent=11 // pred_fallthru
          _
        // Predicated region
        $region85: #{tpu_custom_call.1} parent=11 // pred_check
          %p709 = pneg %p511
        $region86: #{tpu_custom_call.1} parent=11 // pred_check_branch
          %711 = sbr.rel (%p709) target = $region88
        $region87: #{tpu_custom_call.1} parent=11 // pred_region
          _
        $region88: #{tpu_custom_call.1} parent=11 // pred_fallthru
          _
      $region12: #{tpu_custom_call.1} parent=5 // pred_fallthru
        _
      %p712 = scmp.lt.s32.totalorder %s40, 8
      // Predicated region
      $region89: #{tpu_custom_call.1} parent=5 // pred_check
        %p713 = pneg %p712
      $region90: #{tpu_custom_call.1} parent=5 // pred_check_branch
        %715 = sbr.rel (%p713) target = $region92
      $region91: #{tpu_custom_call.1} parent=5 // pred_region
        // Predicated region
        $region93: #{tpu_custom_call.1} parent=91 // pred_check
          %p716 = pneg %p76
        $region94: #{tpu_custom_call.1} parent=91 // pred_check_branch
          %718 = sbr.rel (%p716) target = $region96
        $region95: #{tpu_custom_call.1} parent=91 // pred_region
          %s719 = sand.u32 %s66, 1
          %s720 = scalar_lea.sflag [#allocation7], %s719
          %s721 = sand.u32 %s66, 1
          %s722 = smul.addr %s721, 16
          %s723 = scalar_lea.vmem [#allocation6], %s722
          %p724 = scmp.eq.s32.totalorder %s47, 0
          %s725 = scalar_select %p724, %s48, 1
          %727 = vsyncadd %s720, 0
          %s728 = smul.addr %s725, 4
          %s729 = smul.addr %s728, 4
          %s730 = scalar_lea.hbm %s0, %s729
          %s731 = sshll.u32 %s730, 4
          %s732 = int_to_ptr.hbm [resolvable:$true] %s731
          %s733 = sshll.u32 %s723, 4
          %s734 = int_to_ptr.vmem [resolvable:$true] %s733
          %739 = dma.hbm_to_vmem [thread:$0]  %s732, 256, %s734, %s720, 64, 64, 4
        $region96: #{tpu_custom_call.1} parent=91 // pred_fallthru
          _
        // Predicated region
        $region97: #{tpu_custom_call.1} parent=91 // pred_check
          %p740 = pneg %p106
        $region98: #{tpu_custom_call.1} parent=91 // pred_check_branch
          %742 = sbr.rel (%p740) target = $region100
        $region99: #{tpu_custom_call.1} parent=91 // pred_region
          %s743 = sand.u32 %s40, 1
          %s744 = scalar_lea.sflag [#allocation10], %s743
          %s745 = sand.u32 %s96, 1
          %s746 = smul.addr %s745, 16
          %s747 = scalar_lea.vmem [#allocation9], %s746
          %p748 = scmp.eq.s32.totalorder %s47, 3
          %s749 = scalar_select %p748, 1, %s48
          %751 = vsyncadd %s744, 0
          %s752 = smul.addr %s749, 4
          %s753 = smul.addr %s752, 4
          %s754 = scalar_lea.hbm %s1, %s753
          %s755 = sshll.u32 %s754, 4
          %s756 = int_to_ptr.hbm [resolvable:$true] %s755
          %s757 = sshll.u32 %s747, 4
          %s758 = int_to_ptr.vmem [resolvable:$true] %s757
          %763 = dma.hbm_to_vmem [thread:$0]  %s756, 256, %s758, %s744, 64, 64, 4
        $region100: #{tpu_custom_call.1} parent=91 // pred_fallthru
          _
      $region92: #{tpu_custom_call.1} parent=5 // pred_fallthru
        _
      %p764 = scmp.le.s32.totalorder 1, %s40
      %p765 = scmp.lt.s32.totalorder %s40, 9
      %p766 = pnand %p764, %p765
      %p767 = pneg %p766
      // Predicated region
      $region101: #{tpu_custom_call.1} parent=5 // pred_check
        _
      $region102: #{tpu_custom_call.1} parent=5 // pred_check_branch
        %769 = sbr.rel (%p766) target = $region104
      $region103: #{tpu_custom_call.1} parent=5 // pred_region
        %s770 = ssub.s32 %s40, 1
        %s771 = sand.u32 %s69, 1
        %s772 = scalar_lea.sflag [#allocation7], %s771
        %s773 = sand.u32 %s69, 1
        %s774 = smul.addr %s773, 16
        %s775 = scalar_lea.vmem [#allocation6], %s774
        // Predicated region
        $region105: #{tpu_custom_call.1} parent=103 // pred_check
          %p776 = pneg %p82
        $region106: #{tpu_custom_call.1} parent=103 // pred_check_branch
          %778 = sbr.rel (%p776) target = $region108
        $region107: #{tpu_custom_call.1} parent=103 // pred_region
          %780 = dma.done %s772, 256
        $region108: #{tpu_custom_call.1} parent=103 // pred_fallthru
          _
        %s781 = sand.u32 %s45, 1
        %s782 = scalar_lea.sflag [#allocation10], %s781
        %s783 = sand.u32 %s99, 1
        %s784 = smul.addr %s783, 16
        %s785 = scalar_lea.vmem [#allocation9], %s784
        // Predicated region
        $region109: #{tpu_custom_call.1} parent=103 // pred_check
          %p786 = pneg %p112
        $region110: #{tpu_custom_call.1} parent=103 // pred_check_branch
          %788 = sbr.rel (%p786) target = $region112
        $region111: #{tpu_custom_call.1} parent=103 // pred_region
          %790 = dma.done %s782, 256
        $region112: #{tpu_custom_call.1} parent=103 // pred_fallthru
          _
        // Predicated region
        $region113: #{tpu_custom_call.1} parent=103 // pred_check
          %p791 = pneg %p133
        $region114: #{tpu_custom_call.1} parent=103 // pred_check_branch
          %793 = sbr.rel (%p791) target = $region116
        $region115: #{tpu_custom_call.1} parent=103 // pred_region
          %795 = dma.done [#allocation10], 1024
        $region116: #{tpu_custom_call.1} parent=103 // pred_fallthru
          _
        // Predicated region
        $region117: #{tpu_custom_call.1} parent=103 // pred_check
          %p796 = pneg %p154
        $region118: #{tpu_custom_call.1} parent=103 // pred_check_branch
          %798 = sbr.rel (%p796) target = $region120
        $region119: #{tpu_custom_call.1} parent=103 // pred_region
          %800 = dma.done [#allocation13], 1024
        $region120: #{tpu_custom_call.1} parent=103 // pred_fallthru
          _
        // Predicated region
        $region121: #{tpu_custom_call.1} parent=103 // pred_check
          %p801 = pneg %p238
        $region122: #{tpu_custom_call.1} parent=103 // pred_check_branch
          %803 = sbr.rel (%p801) target = $region124
        $region123: #{tpu_custom_call.1} parent=103 // pred_region
          %805 = dma.done [#allocation13], 1024
        $region124: #{tpu_custom_call.1} parent=103 // pred_fallthru
          _
        // Predicated region
        $region125: #{tpu_custom_call.1} parent=103 // pred_check
          %p806 = pneg %p259
        $region126: #{tpu_custom_call.1} parent=103 // pred_check_branch
          %808 = sbr.rel (%p806) target = $region128
        $region127: #{tpu_custom_call.1} parent=103 // pred_region
          %810 = dma.done [#allocation16], 1024
        $region128: #{tpu_custom_call.1} parent=103 // pred_fallthru
          _
        // Predicated region
        $region129: #{tpu_custom_call.1} parent=103 // pred_check
          %p811 = pneg %p343
        $region130: #{tpu_custom_call.1} parent=103 // pred_check_branch
          %813 = sbr.rel (%p811) target = $region132
        $region131: #{tpu_custom_call.1} parent=103 // pred_region
          %815 = dma.done [#allocation16], 1024
        $region132: #{tpu_custom_call.1} parent=103 // pred_fallthru
          _
        // Predicated region
        $region133: #{tpu_custom_call.1} parent=103 // pred_check
          %p816 = pneg %p364
        $region134: #{tpu_custom_call.1} parent=103 // pred_check_branch
          %818 = sbr.rel (%p816) target = $region136
        $region135: #{tpu_custom_call.1} parent=103 // pred_region
          %820 = dma.done [#allocation19], 1024
        $region136: #{tpu_custom_call.1} parent=103 // pred_fallthru
          _
        // Predicated region
        $region137: #{tpu_custom_call.1} parent=103 // pred_check
          %p821 = pneg %p448
        $region138: #{tpu_custom_call.1} parent=103 // pred_check_branch
          %823 = sbr.rel (%p821) target = $region140
        $region139: #{tpu_custom_call.1} parent=103 // pred_region
          %825 = dma.done [#allocation19], 1024
        $region140: #{tpu_custom_call.1} parent=103 // pred_fallthru
          _
        // Predicated region
        $region141: #{tpu_custom_call.1} parent=103 // pred_check
          %p826 = pneg %p469
        $region142: #{tpu_custom_call.1} parent=103 // pred_check_branch
          %828 = sbr.rel (%p826) target = $region144
        $region143: #{tpu_custom_call.1} parent=103 // pred_region
          %830 = dma.done [#allocation22], 1024
        $region144: #{tpu_custom_call.1} parent=103 // pred_fallthru
          _
        // Predicated region
        $region145: #{tpu_custom_call.1} parent=103 // pred_check
          %p831 = pneg %p490
        $region146: #{tpu_custom_call.1} parent=103 // pred_check_branch
          %833 = sbr.rel (%p831) target = $region148
        $region147: #{tpu_custom_call.1} parent=103 // pred_region
          %835 = dma.done [#allocation22], 1024
        $region148: #{tpu_custom_call.1} parent=103 // pred_fallthru
          _
        %s836 = sand.u32 %s69, 1
        %s837 = scalar_lea.sflag [#allocation7], %s836
        %s838 = sand.u32 %s69, 1
        %s839 = smul.addr %s838, 16
        %s840 = scalar_lea.vmem [#allocation6], %s839
        %p841 = pneg %p82
        %p842 = pneg %p79
        %s843 = sand.u32 %s45, 1
        %s844 = scalar_lea.sflag [#allocation10], %s843
        %s845 = sand.u32 %s99, 1
        %s846 = smul.addr %s845, 16
        %s847 = scalar_lea.vmem [#allocation9], %s846
        %p848 = pneg %p112
        %p849 = pneg %p109
        %p850 = pneg %p133
        %p851 = pneg %p130
        %p852 = pneg %p154
        %p853 = pneg %p151
        %p854 = pneg %p175
        %p855 = pneg %p172
        %p856 = pneg %p196
        %p857 = pneg %p193
        %p858 = pneg %p217
        %p859 = pneg %p214
        %p860 = pneg %p238
        %p861 = pneg %p235
        %p862 = pneg %p259
        %p863 = pneg %p256
        %p864 = pneg %p280
        %p865 = pneg %p277
        %p866 = pneg %p301
        %p867 = pneg %p298
        %p868 = pneg %p322
        %p869 = pneg %p319
        %p870 = pneg %p343
        %p871 = pneg %p340
        %p872 = pneg %p364
        %p873 = pneg %p361
        %p874 = pneg %p385
        %p875 = pneg %p382
        %p876 = pneg %p406
        %p877 = pneg %p403
        %p878 = pneg %p427
        %p879 = pneg %p424
        %p880 = pneg %p448
        %p881 = pneg %p445
        %p882 = pneg %p469
        %p883 = pneg %p466
        %p884 = pneg %p490
        %p885 = pneg %p487
        %p886 = pneg %p511
        %p887 = pneg %p508
        %p888 = pneg %p541
        %p889 = pneg %p538
        %s890 = sand.u32 %s528, 1
        %s891 = scalar_lea.sflag [#allocation8], %s890
        %s892 = sand.u32 %s528, 1
        %s893 = smul.addr %s892, 32
        %s894 = scalar_lea.vmem [#allocation24], %s893
        %p895 = scmp.eq.s32.totalorder %s49, 0
        %s896 = scalar_select %p895, %s50, 1
        %p897 = scmp.eq.s32.totalorder %s49, 3
        %s898 = scalar_select %p897, 1, %s50
        %p899 = scmp.eq.s32.totalorder %s49, 3
        %s900 = scalar_select %p899, %s50, 0
        %p903 = scmp.eq.s32.totalorder %s49, 0
        %p904 = scmp.eq.s32.totalorder %s50, 0
        %p905 = pnand %p903, %p904
        %p906 = pneg %p905
        // Predicated region
        $region149: #{tpu_custom_call.1} parent=103 // pred_check
          _
        $region150: #{tpu_custom_call.1} parent=103 // pred_check_branch
          %908 = sbr.rel (%p905) target = $region152
        $region151: #{tpu_custom_call.1} parent=103 // pred_region
          %909 = vst [vmem:[#allocation5] sm:$0xff] 0.0
        $region152: #{tpu_custom_call.1} parent=103 // pred_fallthru
          _
        // Predicated region
        $region153: #{tpu_custom_call.1} parent=103 // pred_check
          %p910 = pneg %p903
        $region154: #{tpu_custom_call.1} parent=103 // pred_check_branch
          %912 = sbr.rel (%p910) target = $region156
        $region155: #{tpu_custom_call.1} parent=103 // pred_region
          %v913 = vld [vmem:[%s775] sm:$0xf]
          %v914 = vld [vmem:[%s775 + $0x4] sm:$0xf]
          %v915 = vld [vmem:[%s775 + $0x8] sm:$0xf]
          %v916 = vld [vmem:[%s775 + $0xc] sm:$0xf]
          %v917 = vld [vmem:[%s785] sm:$0xf]
          %v918 = vld [vmem:[%s785 + $0x4] sm:$0xf]
          %v919 = vld [vmem:[%s785 + $0x8] sm:$0xf]
          %v920 = vld [vmem:[%s785 + $0xc] sm:$0xf]
          %v925 = vunpack.c.l.b16 %v917
          %v926 = vunpack.c.l.b16 %v918
          %v927 = vunpack.c.l.b16 %v919
          %v928 = vunpack.c.l.b16 %v920
          %v929 = vpack.c.b16 %v926, %v925
          %v930 = vpack.c.b16 %v928, %v927
          %v935 = vunpack.c.l.b16 %v913
          %v936 = vunpack.c.l.b16 %v914
          %v937 = vunpack.c.l.b16 %v915
          %v938 = vunpack.c.l.b16 %v916
          %v939 = vpack.c.b16 %v936, %v935
          %v940 = vpack.c.b16 %v938, %v937
          %vm943 = vcmask 261120
          %v945 = vsel %vm943, %v929, 0
          %v948 = vsel %vm943, %v930, 0
          %950 = vmatpush.bf16.msra.mxu0 0
          %951 = vmatpush.bf16.msra.mxu0 0
          %952 = vmatpush.bf16.msra.mxu0 0
          %953 = vmatpush.bf16.msra.mxu0 0
          %954 = vmatpush.bf16.msra.mxu0 0
          %955 = vmatpush.bf16.msra.mxu0 0
          %956 = vmatpush.bf16.msra.mxu0 %v940
          %957 = vmatpush.bf16.msra.mxu0 %v939
          %958 = vmatmul.bf16.gmra.mxu0 %v945
          %v959 = vpop.f32.mrf.mxu0
          %v960 = vadd.f32 0.0, %v959
          %v961 = vpop.f32.mrf.mxu0
          %v962 = vadd.f32 0.0, %v961
          %963 = vmatmul.bf16.gmra.mxu0 %v948
          %v964 = vpop.f32.mrf.mxu0
          %v965 = vadd.f32 0.0, %v964
          %v966 = vpop.f32.mrf.mxu0
          %v967 = vadd.f32 0.0, %v966
          %968 = vdwg.mxu0
          %v969 = vmax.f32 %v960, 1.0
          %v970 = vmax.f32 %v962, 1.0
          %v971 = vmax.f32 %v965, 1.0
          %v972 = vmax.f32 %v967, 1.0
          %v973 = vrcp.pop %v969
          %v974 = vmul.f32 %v969, %v973
          %v975 = vsub.f32 1.0, %v974
          %v976 = vmul.f32 %v973, %v975
          %v977 = vadd.f32 %v973, %v976
          %vm978 = vweird.f32 %v969
          %vm979 = vweird.f32 %v973
          %vm980 = vmor %vm978, %vm979
          %v981 = vsel %vm980, %v973, %v977
          %v982 = vand.u32 2147483647, %v969
          %vm983 = vcmp.eq.f32.partialorder %v982, 8.507059e+37
          %v984 = vand.u32 %v969, 2147483648
          %v985 = vor.u32 1.1754944e-38, %v984
          %v986 = vsel %vm983, %v985, %v981
          %v987 = vmul.f32 1.0, %v986
          %v988 = vrcp.pop %v970
          %v989 = vmul.f32 %v970, %v988
          %v990 = vsub.f32 1.0, %v989
          %v991 = vmul.f32 %v988, %v990
          %v992 = vadd.f32 %v988, %v991
          %vm993 = vweird.f32 %v970
          %vm994 = vweird.f32 %v988
          %vm995 = vmor %vm993, %vm994
          %v996 = vsel %vm995, %v988, %v992
          %v997 = vand.u32 2147483647, %v970
          %vm998 = vcmp.eq.f32.partialorder %v997, 8.507059e+37
          %v999 = vand.u32 %v970, 2147483648
          %v1000 = vor.u32 1.1754944e-38, %v999
          %v1001 = vsel %vm998, %v1000, %v996
          %v1002 = vmul.f32 1.0, %v1001
          %v1003 = vrcp.pop %v971
          %v1004 = vmul.f32 %v971, %v1003
          %v1005 = vsub.f32 1.0, %v1004
          %v1006 = vmul.f32 %v1003, %v1005
          %v1007 = vadd.f32 %v1003, %v1006
          %vm1008 = vweird.f32 %v971
          %vm1009 = vweird.f32 %v1003
          %vm1010 = vmor %vm1008, %vm1009
          %v1011 = vsel %vm1010, %v1003, %v1007
          %v1012 = vand.u32 2147483647, %v971
          %vm1013 = vcmp.eq.f32.partialorder %v1012, 8.507059e+37
          %v1014 = vand.u32 %v971, 2147483648
          %v1015 = vor.u32 1.1754944e-38, %v1014
          %v1016 = vsel %vm1013, %v1015, %v1011
          %v1017 = vmul.f32 1.0, %v1016
          %v1018 = vrcp.pop %v972
          %v1019 = vmul.f32 %v972, %v1018
          %v1020 = vsub.f32 1.0, %v1019
          %v1021 = vmul.f32 %v1018, %v1020
          %v1022 = vadd.f32 %v1018, %v1021
          %vm1023 = vweird.f32 %v972
          %vm1024 = vweird.f32 %v1018
          %vm1025 = vmor %vm1023, %vm1024
          %v1026 = vsel %vm1025, %v1018, %v1022
          %v1027 = vand.u32 2147483647, %v972
          %vm1028 = vcmp.eq.f32.partialorder %v1027, 8.507059e+37
          %v1029 = vand.u32 %v972, 2147483648
          %v1030 = vor.u32 1.1754944e-38, %v1029
          %v1031 = vsel %vm1028, %v1030, %v1026
          %v1032 = vmul.f32 1.0, %v1031
          %1034 = vset.pattern.permute.xlu0 16
          %1035 = vperm.xlu0 %1034, %v987
          %v1036 = vpop.permute.xlu0 %1035
          %1039 = vset.pattern.permute.xlu0 16
          %1040 = vperm.xlu0 %1039, %v1002
          %v1041 = vpop.permute.xlu0 %1040
          %1044 = vset.pattern.permute.xlu0 16
          %1045 = vperm.xlu0 %1044, %v1017
          %v1046 = vpop.permute.xlu0 %1045
          %1049 = vset.pattern.permute.xlu0 16
          %1050 = vperm.xlu0 %1049, %v1032
          %v1051 = vpop.permute.xlu0 %1050
          %v1053 = vmul.f32 %v960, %v1036
          %v1054 = vmul.f32 %v962, %v1041
          %v1055 = vmul.f32 %v965, %v1046
          %v1056 = vmul.f32 %v967, %v1051
          %v1057 = vpack.c.bf16 %v1054, %v1053
          %v1058 = vpack.c.bf16 %v1056, %v1055
          %v1059 = vld [vmem:[#allocation11] sm:$0xf]
          %v1060 = vld [vmem:[#allocation11 + $0x4] sm:$0xf]
          %v1061 = vld [vmem:[#allocation11 + $0x8] sm:$0xf]
          %v1062 = vld [vmem:[#allocation11 + $0xc] sm:$0xf]
          %v1063 = vld [vmem:[#allocation11 + $0x10] sm:$0xf]
          %v1064 = vld [vmem:[#allocation11 + $0x14] sm:$0xf]
          %v1065 = vld [vmem:[#allocation11 + $0x18] sm:$0xf]
          %v1066 = vld [vmem:[#allocation11 + $0x1c] sm:$0xf]
          %v1067 = vld [vmem:[#allocation11 + $0x20] sm:$0xf]
          %v1068 = vld [vmem:[#allocation11 + $0x24] sm:$0xf]
          %v1069 = vld [vmem:[#allocation11 + $0x28] sm:$0xf]
          %v1070 = vld [vmem:[#allocation11 + $0x2c] sm:$0xf]
          %v1071 = vld [vmem:[#allocation11 + $0x30] sm:$0xf]
          %v1072 = vld [vmem:[#allocation11 + $0x34] sm:$0xf]
          %v1073 = vld [vmem:[#allocation11 + $0x38] sm:$0xf]
          %v1074 = vld [vmem:[#allocation11 + $0x3c] sm:$0xf]
          %v1075 = vld [vmem:[#allocation12] sm:$0xf]
          %v1076 = vld [vmem:[#allocation12 + $0x4] sm:$0xf]
          %v1077 = vld [vmem:[#allocation12 + $0x8] sm:$0xf]
          %v1078 = vld [vmem:[#allocation12 + $0xc] sm:$0xf]
          %v1079 = vld [vmem:[#allocation12 + $0x10] sm:$0xf]
          %v1080 = vld [vmem:[#allocation12 + $0x14] sm:$0xf]
          %v1081 = vld [vmem:[#allocation12 + $0x18] sm:$0xf]
          %v1082 = vld [vmem:[#allocation12 + $0x1c] sm:$0xf]
          %v1083 = vld [vmem:[#allocation12 + $0x20] sm:$0xf]
          %v1084 = vld [vmem:[#allocation12 + $0x24] sm:$0xf]
          %v1085 = vld [vmem:[#allocation12 + $0x28] sm:$0xf]
          %v1086 = vld [vmem:[#allocation12 + $0x2c] sm:$0xf]
          %v1087 = vld [vmem:[#allocation12 + $0x30] sm:$0xf]
          %v1088 = vld [vmem:[#allocation12 + $0x34] sm:$0xf]
          %v1089 = vld [vmem:[#allocation12 + $0x38] sm:$0xf]
          %v1090 = vld [vmem:[#allocation12 + $0x3c] sm:$0xf]
          %v1107 = vunpack.c.l.b16 %v1075
          %v1108 = vunpack.c.l.b16 %v1076
          %v1109 = vunpack.c.l.b16 %v1077
          %v1110 = vunpack.c.l.b16 %v1078
          %v1111 = vunpack.c.l.b16 %v1079
          %v1112 = vunpack.c.l.b16 %v1080
          %v1113 = vunpack.c.l.b16 %v1081
          %v1114 = vunpack.c.l.b16 %v1082
          %v1115 = vunpack.c.l.b16 %v1083
          %v1116 = vunpack.c.l.b16 %v1084
          %v1117 = vunpack.c.l.b16 %v1085
          %v1118 = vunpack.c.l.b16 %v1086
          %v1119 = vunpack.c.l.b16 %v1087
          %v1120 = vunpack.c.l.b16 %v1088
          %v1121 = vunpack.c.l.b16 %v1089
          %v1122 = vunpack.c.l.b16 %v1090
          %v1123 = vpack.c.b16 %v1108, %v1107
          %v1124 = vpack.c.b16 %v1110, %v1109
          %v1125 = vpack.c.b16 %v1112, %v1111
          %v1126 = vpack.c.b16 %v1114, %v1113
          %v1127 = vpack.c.b16 %v1116, %v1115
          %v1128 = vpack.c.b16 %v1118, %v1117
          %v1129 = vpack.c.b16 %v1120, %v1119
          %v1130 = vpack.c.b16 %v1122, %v1121
          %1139 = vmatpush.bf16.msra.mxu0 %v1130
          %1140 = vmatpush.bf16.msra.mxu0 %v1129
          %1141 = vmatpush.bf16.msra.mxu0 %v1128
          %1142 = vmatpush.bf16.msra.mxu0 %v1127
          %1143 = vmatpush.bf16.msra.mxu0 %v1126
          %1144 = vmatpush.bf16.msra.mxu0 %v1125
          %1145 = vmatpush.bf16.msra.mxu0 %v1124
          %1146 = vmatpush.bf16.msra.mxu0 %v1123
          %1147 = vmatmul.bf16.gmra.mxu0 %v939
          %v1148 = vpop.f32.mrf.mxu0
          %v1149 = vadd.f32 0.0, %v1148
          %v1150 = vpop.f32.mrf.mxu0
          %v1151 = vadd.f32 0.0, %v1150
          %1152 = vmatmul.bf16.gmra.mxu0 %v940
          %v1153 = vpop.f32.mrf.mxu0
          %v1154 = vadd.f32 0.0, %v1153
          %v1155 = vpop.f32.mrf.mxu0
          %v1156 = vadd.f32 0.0, %v1155
          %1157 = vdwg.mxu0
          %v1174 = vunpack.c.l.b16 %v1059
          %v1175 = vunpack.c.l.b16 %v1060
          %v1176 = vunpack.c.l.b16 %v1061
          %v1177 = vunpack.c.l.b16 %v1062
          %v1178 = vunpack.c.l.b16 %v1063
          %v1179 = vunpack.c.l.b16 %v1064
          %v1180 = vunpack.c.l.b16 %v1065
          %v1181 = vunpack.c.l.b16 %v1066
          %v1182 = vunpack.c.l.b16 %v1067
          %v1183 = vunpack.c.l.b16 %v1068
          %v1184 = vunpack.c.l.b16 %v1069
          %v1185 = vunpack.c.l.b16 %v1070
          %v1186 = vunpack.c.l.b16 %v1071
          %v1187 = vunpack.c.l.b16 %v1072
          %v1188 = vunpack.c.l.b16 %v1073
          %v1189 = vunpack.c.l.b16 %v1074
          %v1190 = vpack.c.b16 %v1175, %v1174
          %v1191 = vpack.c.b16 %v1177, %v1176
          %v1192 = vpack.c.b16 %v1179, %v1178
          %v1193 = vpack.c.b16 %v1181, %v1180
          %v1194 = vpack.c.b16 %v1183, %v1182
          %v1195 = vpack.c.b16 %v1185, %v1184
          %v1196 = vpack.c.b16 %v1187, %v1186
          %v1197 = vpack.c.b16 %v1189, %v1188
          %1206 = vmatpush.bf16.msra.mxu0 %v1197
          %1207 = vmatpush.bf16.msra.mxu0 %v1196
          %1208 = vmatpush.bf16.msra.mxu0 %v1195
          %1209 = vmatpush.bf16.msra.mxu0 %v1194
          %1210 = vmatpush.bf16.msra.mxu0 %v1193
          %1211 = vmatpush.bf16.msra.mxu0 %v1192
          %1212 = vmatpush.bf16.msra.mxu0 %v1191
          %1213 = vmatpush.bf16.msra.mxu0 %v1190
          %1214 = vmatmul.bf16.gmra.mxu0 %v1057
          %v1215 = vpop.f32.mrf.mxu0
          %v1216 = vadd.f32 %v1149, %v1215
          %v1217 = vpop.f32.mrf.mxu0
          %v1218 = vadd.f32 %v1151, %v1217
          %1219 = vmatmul.bf16.gmra.mxu0 %v1058
          %v1220 = vpop.f32.mrf.mxu0
          %v1221 = vadd.f32 %v1154, %v1220
          %v1222 = vpop.f32.mrf.mxu0
          %v1223 = vadd.f32 %v1156, %v1222
          %1224 = vdwg.mxu0
          %v1225 = vld [vmem:[%s4] sm:$0x1]
          %v1227 = vperm.slane %v1225, 0
          %v1229 = vadd.f32 %v1216, %v1227
          %v1230 = vadd.f32 %v1218, %v1227
          %v1231 = vadd.f32 %v1221, %v1227
          %v1232 = vadd.f32 %v1223, %v1227
          %v1233 = vmax.f32 %v1229, 0.0
          %v1234 = vmax.f32 %v1230, 0.0
          %v1235 = vmax.f32 %v1231, 0.0
          %v1236 = vmax.f32 %v1232, 0.0
          %s1237 = smul.u32 %s50, 32
          %s1238 = scalar_lea.vmem [#allocation2], %s1237
          %1239 = vst [vmem:[%s1238] sm:$0xff] %v1233
          %1240 = vst [vmem:[%s1238 + $0x8] sm:$0xff] %v1234
          %1241 = vst [vmem:[%s1238 + $0x10] sm:$0xff] %v1235
          %1242 = vst [vmem:[%s1238 + $0x18] sm:$0xff] %v1236
          %v1243 = vld [vmem:[#allocation5] sm:$0x1]
          %v1244 = vadd.f32 %v1233, %v1234
          %v1245 = vadd.f32 %v1244, %v1235
          %v1246 = vadd.f32 %v1245, %v1236
          %v1247 = vrot.slane %v1246, 4
          %v1248 = vadd.f32 %v1246, %v1247
          %v1249 = vrot.slane %v1248, 2
          %v1250 = vadd.f32 %v1248, %v1249
          %v1251 = vrot.slane %v1250, 1
          %v1252 = vadd.f32 %v1250, %v1251
          %v1253 = vadd.f32 %v1243, %v1252
          %1254 = vst [vmem:[#allocation5] sm:$0x1] %v1253
          %v1255 = vld [vmem:[#allocation5 + $0x1] sm:$0x1]
          %v1256 = vmul.f32 %v1233, %v1233
          %v1257 = vmul.f32 %v1234, %v1234
          %v1258 = vmul.f32 %v1235, %v1235
          %v1259 = vmul.f32 %v1236, %v1236
          %v1260 = vadd.f32 %v1256, %v1257
          %v1261 = vadd.f32 %v1260, %v1258
          %v1262 = vadd.f32 %v1261, %v1259
          %v1263 = vrot.slane %v1262, 4
          %v1264 = vadd.f32 %v1262, %v1263
          %v1265 = vrot.slane %v1264, 2
          %v1266 = vadd.f32 %v1264, %v1265
          %v1267 = vrot.slane %v1266, 1
          %v1268 = vadd.f32 %v1266, %v1267
          %v1269 = vadd.f32 %v1255, %v1268
          %1270 = vst [vmem:[#allocation5 + $0x1] sm:$0x1] %v1269
        $region156: #{tpu_custom_call.1} parent=103 // pred_fallthru
          _
        %p1271 = scmp.eq.s32.totalorder %s49, 1
        // Predicated region
        $region157: #{tpu_custom_call.1} parent=103 // pred_check
          %p1272 = pneg %p1271
        $region158: #{tpu_custom_call.1} parent=103 // pred_check_branch
          %1274 = sbr.rel (%p1272) target = $region160
        $region159: #{tpu_custom_call.1} parent=103 // pred_region
          %s1275 = smul.u32 %s50, 32
          %s1276 = scalar_lea.vmem [#allocation2], %s1275
          %v1277 = vld [vmem:[%s1276] sm:$0xff]
          %v1278 = vld [vmem:[%s1276 + $0x8] sm:$0xff]
          %v1279 = vld [vmem:[%s1276 + $0x10] sm:$0xff]
          %v1280 = vld [vmem:[%s1276 + $0x18] sm:$0xff]
          %v1281 = vld [vmem:[#allocation5] sm:$0x1]
          %v1282 = vmul.f32 %v1281, 0.015625
          %v1283 = vld [vmem:[#allocation5 + $0x1] sm:$0x1]
          %v1284 = vmul.f32 %v1283, 0.015625
          %v1285 = vmul.f32 %v1282, %v1282
          %v1286 = vsub.f32 %v1284, %v1285
          %v1287 = vmax.f32 %v1286, 0.0
          %v1288 = vadd.f32 %v1287, 1e-05
          %v1289 = vrsqrt.pop %v1288
          %v1290 = vmul.f32 %v1289, %v1288
          %v1291 = vmul.f32 %v1290, %v1289
          %v1292 = vmul.f32 0.5, %v1291
          %v1293 = vsub.f32 1.5, %v1292
          %v1294 = vmul.f32 %v1289, %v1293
          %vm1295 = vweird.f32 %v1288
          %vm1296 = vweird.f32 %v1289
          %vm1297 = vmor %vm1295, %vm1296
          %v1298 = vsel %vm1297, %v1289, %v1294
          %v1299 = vperm.slane %v1282, 0
          %v1300 = vsub.f32 %v1277, %v1299
          %v1301 = vsub.f32 %v1278, %v1299
          %v1302 = vsub.f32 %v1279, %v1299
          %v1303 = vsub.f32 %v1280, %v1299
          %v1304 = vperm.slane %v1298, 0
          %v1305 = vmul.f32 %v1300, %v1304
          %v1306 = vmul.f32 %v1301, %v1304
          %v1307 = vmul.f32 %v1302, %v1304
          %v1308 = vmul.f32 %v1303, %v1304
          %v1309 = vld [vmem:[%s5] sm:$0x1]
          %v1311 = vperm.slane %v1309, 0
          %v1313 = vmul.f32 %v1305, %v1311
          %v1314 = vmul.f32 %v1306, %v1311
          %v1315 = vmul.f32 %v1307, %v1311
          %v1316 = vmul.f32 %v1308, %v1311
          %v1317 = vld [vmem:[%s6] sm:$0x1]
          %v1319 = vperm.slane %v1317, 0
          %v1321 = vadd.f32 %v1313, %v1319
          %v1322 = vadd.f32 %v1314, %v1319
          %v1323 = vadd.f32 %v1315, %v1319
          %v1324 = vadd.f32 %v1316, %v1319
          %1325 = vst [vmem:[%s1276] sm:$0xff] %v1321
          %1326 = vst [vmem:[%s1276 + $0x8] sm:$0xff] %v1322
          %1327 = vst [vmem:[%s1276 + $0x10] sm:$0xff] %v1323
          %1328 = vst [vmem:[%s1276 + $0x18] sm:$0xff] %v1324
          %v1329 = vpack.c.bf16 %v1321, %v1321
          %v1330 = vpack.c.bf16 %v1322, %v1322
          %v1331 = vpack.c.bf16 %v1323, %v1323
          %v1332 = vpack.c.bf16 %v1324, %v1324
          %v1333 = vlaneseq
          %v1334 = vand.u32 %v1333, 127
          %vm1335 = vcmp.eq.s32.totalorder %v1334, 32
          %vm1336 = vmpackc.low %vm1335, %vm1335
          %v1337 = vsel %vm1336, 1065369472, %v1329
          %v1338 = vsel %vm1336, 1065369472, %v1330
          %v1339 = vsel %vm1336, 1065369472, %v1331
          %v1340 = vsel %vm1336, 1065369472, %v1332
          %v1341 = vld [vmem:[%s785] sm:$0xf]
          %v1342 = vld [vmem:[%s785 + $0x4] sm:$0xf]
          %v1343 = vld [vmem:[%s785 + $0x8] sm:$0xf]
          %v1344 = vld [vmem:[%s785 + $0xc] sm:$0xf]
          %v1349 = vunpack.c.l.b16 %v1341
          %v1350 = vunpack.c.l.b16 %v1342
          %v1351 = vunpack.c.l.b16 %v1343
          %v1352 = vunpack.c.l.b16 %v1344
          %v1353 = vpack.c.b16 %v1350, %v1349
          %v1354 = vpack.c.b16 %v1352, %v1351
          %v1359 = vunpack.c.l.b16 %v1337
          %v1360 = vunpack.c.l.b16 %v1338
          %v1361 = vunpack.c.l.b16 %v1339
          %v1362 = vunpack.c.l.b16 %v1340
          %v1363 = vpack.c.b16 %v1360, %v1359
          %v1364 = vpack.c.b16 %v1362, %v1361
          %vm1367 = vcmask 261120
          %v1369 = vsel %vm1367, %v1353, 0
          %v1372 = vsel %vm1367, %v1354, 0
          %1374 = vmatpush.bf16.msra.mxu0 0
          %1375 = vmatpush.bf16.msra.mxu0 0
          %1376 = vmatpush.bf16.msra.mxu0 0
          %1377 = vmatpush.bf16.msra.mxu0 0
          %1378 = vmatpush.bf16.msra.mxu0 0
          %1379 = vmatpush.bf16.msra.mxu0 0
          %1380 = vmatpush.bf16.msra.mxu0 %v1364
          %1381 = vmatpush.bf16.msra.mxu0 %v1363
          %1382 = vmatmul.bf16.gmra.mxu0 %v1369
          %v1383 = vpop.f32.mrf.mxu0
          %v1384 = vadd.f32 0.0, %v1383
          %v1385 = vpop.f32.mrf.mxu0
          %v1386 = vadd.f32 0.0, %v1385
          %1387 = vmatmul.bf16.gmra.mxu0 %v1372
          %v1388 = vpop.f32.mrf.mxu0
          %v1389 = vadd.f32 0.0, %v1388
          %v1390 = vpop.f32.mrf.mxu0
          %v1391 = vadd.f32 0.0, %v1390
          %1392 = vdwg.mxu0
          %v1393 = vmax.f32 %v1384, 1.0
          %v1394 = vmax.f32 %v1386, 1.0
          %v1395 = vmax.f32 %v1389, 1.0
          %v1396 = vmax.f32 %v1391, 1.0
          %v1397 = vrcp.pop %v1393
          %v1398 = vmul.f32 %v1393, %v1397
          %v1399 = vsub.f32 1.0, %v1398
          %v1400 = vmul.f32 %v1397, %v1399
          %v1401 = vadd.f32 %v1397, %v1400
          %vm1402 = vweird.f32 %v1393
          %vm1403 = vweird.f32 %v1397
          %vm1404 = vmor %vm1402, %vm1403
          %v1405 = vsel %vm1404, %v1397, %v1401
          %v1406 = vand.u32 2147483647, %v1393
          %vm1407 = vcmp.eq.f32.partialorder %v1406, 8.507059e+37
          %v1408 = vand.u32 %v1393, 2147483648
          %v1409 = vor.u32 1.1754944e-38, %v1408
          %v1410 = vsel %vm1407, %v1409, %v1405
          %v1411 = vmul.f32 1.0, %v1410
          %v1412 = vrcp.pop %v1394
          %v1413 = vmul.f32 %v1394, %v1412
          %v1414 = vsub.f32 1.0, %v1413
          %v1415 = vmul.f32 %v1412, %v1414
          %v1416 = vadd.f32 %v1412, %v1415
          %vm1417 = vweird.f32 %v1394
          %vm1418 = vweird.f32 %v1412
          %vm1419 = vmor %vm1417, %vm1418
          %v1420 = vsel %vm1419, %v1412, %v1416
          %v1421 = vand.u32 2147483647, %v1394
          %vm1422 = vcmp.eq.f32.partialorder %v1421, 8.507059e+37
          %v1423 = vand.u32 %v1394, 2147483648
          %v1424 = vor.u32 1.1754944e-38, %v1423
          %v1425 = vsel %vm1422, %v1424, %v1420
          %v1426 = vmul.f32 1.0, %v1425
          %v1427 = vrcp.pop %v1395
          %v1428 = vmul.f32 %v1395, %v1427
          %v1429 = vsub.f32 1.0, %v1428
          %v1430 = vmul.f32 %v1427, %v1429
          %v1431 = vadd.f32 %v1427, %v1430
          %vm1432 = vweird.f32 %v1395
          %vm1433 = vweird.f32 %v1427
          %vm1434 = vmor %vm1432, %vm1433
          %v1435 = vsel %vm1434, %v1427, %v1431
          %v1436 = vand.u32 2147483647, %v1395
          %vm1437 = vcmp.eq.f32.partialorder %v1436, 8.507059e+37
          %v1438 = vand.u32 %v1395, 2147483648
          %v1439 = vor.u32 1.1754944e-38, %v1438
          %v1440 = vsel %vm1437, %v1439, %v1435
          %v1441 = vmul.f32 1.0, %v1440
          %v1442 = vrcp.pop %v1396
          %v1443 = vmul.f32 %v1396, %v1442
          %v1444 = vsub.f32 1.0, %v1443
          %v1445 = vmul.f32 %v1442, %v1444
          %v1446 = vadd.f32 %v1442, %v1445
          %vm1447 = vweird.f32 %v1396
          %vm1448 = vweird.f32 %v1442
          %vm1449 = vmor %vm1447, %vm1448
          %v1450 = vsel %vm1449, %v1442, %v1446
          %v1451 = vand.u32 2147483647, %v1396
          %vm1452 = vcmp.eq.f32.partialorder %v1451, 8.507059e+37
          %v1453 = vand.u32 %v1396, 2147483648
          %v1454 = vor.u32 1.1754944e-38, %v1453
          %v1455 = vsel %vm1452, %v1454, %v1450
          %v1456 = vmul.f32 1.0, %v1455
          %1458 = vset.pattern.permute.xlu0 32
          %1459 = vperm.xlu0 %1458, %v1411
          %v1460 = vpop.permute.xlu0 %1459
          %1463 = vset.pattern.permute.xlu0 32
          %1464 = vperm.xlu0 %1463, %v1426
          %v1465 = vpop.permute.xlu0 %1464
          %1468 = vset.pattern.permute.xlu0 32
          %1469 = vperm.xlu0 %1468, %v1441
          %v1470 = vpop.permute.xlu0 %1469
          %1473 = vset.pattern.permute.xlu0 32
          %1474 = vperm.xlu0 %1473, %v1456
          %v1475 = vpop.permute.xlu0 %1474
          %v1477 = vmul.f32 %v1384, %v1460
          %v1478 = vmul.f32 %v1386, %v1465
          %v1479 = vmul.f32 %v1389, %v1470
          %v1480 = vmul.f32 %v1391, %v1475
          %v1481 = vpack.c.bf16 %v1478, %v1477
          %v1482 = vpack.c.bf16 %v1480, %v1479
          %v1483 = vld [vmem:[#allocation14] sm:$0xf]
          %v1484 = vld [vmem:[#allocation14 + $0x4] sm:$0xf]
          %v1485 = vld [vmem:[#allocation14 + $0x8] sm:$0xf]
          %v1486 = vld [vmem:[#allocation14 + $0xc] sm:$0xf]
          %v1487 = vld [vmem:[#allocation14 + $0x10] sm:$0xf]
          %v1488 = vld [vmem:[#allocation14 + $0x14] sm:$0xf]
          %v1489 = vld [vmem:[#allocation14 + $0x18] sm:$0xf]
          %v1490 = vld [vmem:[#allocation14 + $0x1c] sm:$0xf]
          %v1491 = vld [vmem:[#allocation14 + $0x20] sm:$0xf]
          %v1492 = vld [vmem:[#allocation14 + $0x24] sm:$0xf]
          %v1493 = vld [vmem:[#allocation14 + $0x28] sm:$0xf]
          %v1494 = vld [vmem:[#allocation14 + $0x2c] sm:$0xf]
          %v1495 = vld [vmem:[#allocation14 + $0x30] sm:$0xf]
          %v1496 = vld [vmem:[#allocation14 + $0x34] sm:$0xf]
          %v1497 = vld [vmem:[#allocation14 + $0x38] sm:$0xf]
          %v1498 = vld [vmem:[#allocation14 + $0x3c] sm:$0xf]
          %v1499 = vld [vmem:[#allocation15] sm:$0xf]
          %v1500 = vld [vmem:[#allocation15 + $0x4] sm:$0xf]
          %v1501 = vld [vmem:[#allocation15 + $0x8] sm:$0xf]
          %v1502 = vld [vmem:[#allocation15 + $0xc] sm:$0xf]
          %v1503 = vld [vmem:[#allocation15 + $0x10] sm:$0xf]
          %v1504 = vld [vmem:[#allocation15 + $0x14] sm:$0xf]
          %v1505 = vld [vmem:[#allocation15 + $0x18] sm:$0xf]
          %v1506 = vld [vmem:[#allocation15 + $0x1c] sm:$0xf]
          %v1507 = vld [vmem:[#allocation15 + $0x20] sm:$0xf]
          %v1508 = vld [vmem:[#allocation15 + $0x24] sm:$0xf]
          %v1509 = vld [vmem:[#allocation15 + $0x28] sm:$0xf]
          %v1510 = vld [vmem:[#allocation15 + $0x2c] sm:$0xf]
          %v1511 = vld [vmem:[#allocation15 + $0x30] sm:$0xf]
          %v1512 = vld [vmem:[#allocation15 + $0x34] sm:$0xf]
          %v1513 = vld [vmem:[#allocation15 + $0x38] sm:$0xf]
          %v1514 = vld [vmem:[#allocation15 + $0x3c] sm:$0xf]
          %v1531 = vunpack.c.l.b16 %v1499
          %v1532 = vunpack.c.l.b16 %v1500
          %v1533 = vunpack.c.l.b16 %v1501
          %v1534 = vunpack.c.l.b16 %v1502
          %v1535 = vunpack.c.l.b16 %v1503
          %v1536 = vunpack.c.l.b16 %v1504
          %v1537 = vunpack.c.l.b16 %v1505
          %v1538 = vunpack.c.l.b16 %v1506
          %v1539 = vunpack.c.l.b16 %v1507
          %v1540 = vunpack.c.l.b16 %v1508
          %v1541 = vunpack.c.l.b16 %v1509
          %v1542 = vunpack.c.l.b16 %v1510
          %v1543 = vunpack.c.l.b16 %v1511
          %v1544 = vunpack.c.l.b16 %v1512
          %v1545 = vunpack.c.l.b16 %v1513
          %v1546 = vunpack.c.l.b16 %v1514
          %v1547 = vpack.c.b16 %v1532, %v1531
          %v1548 = vpack.c.b16 %v1534, %v1533
          %v1549 = vpack.c.b16 %v1536, %v1535
          %v1550 = vpack.c.b16 %v1538, %v1537
          %v1551 = vpack.c.b16 %v1540, %v1539
          %v1552 = vpack.c.b16 %v1542, %v1541
          %v1553 = vpack.c.b16 %v1544, %v1543
          %v1554 = vpack.c.b16 %v1546, %v1545
          %1563 = vmatpush.bf16.msra.mxu0 %v1554
          %1564 = vmatpush.bf16.msra.mxu0 %v1553
          %1565 = vmatpush.bf16.msra.mxu0 %v1552
          %1566 = vmatpush.bf16.msra.mxu0 %v1551
          %1567 = vmatpush.bf16.msra.mxu0 %v1550
          %1568 = vmatpush.bf16.msra.mxu0 %v1549
          %1569 = vmatpush.bf16.msra.mxu0 %v1548
          %1570 = vmatpush.bf16.msra.mxu0 %v1547
          %1571 = vmatmul.bf16.gmra.mxu0 %v1363
          %v1572 = vpop.f32.mrf.mxu0
          %v1573 = vadd.f32 0.0, %v1572
          %v1574 = vpop.f32.mrf.mxu0
          %v1575 = vadd.f32 0.0, %v1574
          %1576 = vmatmul.bf16.gmra.mxu0 %v1364
          %v1577 = vpop.f32.mrf.mxu0
          %v1578 = vadd.f32 0.0, %v1577
          %v1579 = vpop.f32.mrf.mxu0
          %v1580 = vadd.f32 0.0, %v1579
          %1581 = vdwg.mxu0
          %v1598 = vunpack.c.l.b16 %v1483
          %v1599 = vunpack.c.l.b16 %v1484
          %v1600 = vunpack.c.l.b16 %v1485
          %v1601 = vunpack.c.l.b16 %v1486
          %v1602 = vunpack.c.l.b16 %v1487
          %v1603 = vunpack.c.l.b16 %v1488
          %v1604 = vunpack.c.l.b16 %v1489
          %v1605 = vunpack.c.l.b16 %v1490
          %v1606 = vunpack.c.l.b16 %v1491
          %v1607 = vunpack.c.l.b16 %v1492
          %v1608 = vunpack.c.l.b16 %v1493
          %v1609 = vunpack.c.l.b16 %v1494
          %v1610 = vunpack.c.l.b16 %v1495
          %v1611 = vunpack.c.l.b16 %v1496
          %v1612 = vunpack.c.l.b16 %v1497
          %v1613 = vunpack.c.l.b16 %v1498
          %v1614 = vpack.c.b16 %v1599, %v1598
          %v1615 = vpack.c.b16 %v1601, %v1600
          %v1616 = vpack.c.b16 %v1603, %v1602
          %v1617 = vpack.c.b16 %v1605, %v1604
          %v1618 = vpack.c.b16 %v1607, %v1606
          %v1619 = vpack.c.b16 %v1609, %v1608
          %v1620 = vpack.c.b16 %v1611, %v1610
          %v1621 = vpack.c.b16 %v1613, %v1612
          %1630 = vmatpush.bf16.msra.mxu0 %v1621
          %1631 = vmatpush.bf16.msra.mxu0 %v1620
          %1632 = vmatpush.bf16.msra.mxu0 %v1619
          %1633 = vmatpush.bf16.msra.mxu0 %v1618
          %1634 = vmatpush.bf16.msra.mxu0 %v1617
          %1635 = vmatpush.bf16.msra.mxu0 %v1616
          %1636 = vmatpush.bf16.msra.mxu0 %v1615
          %1637 = vmatpush.bf16.msra.mxu0 %v1614
          %1638 = vmatmul.bf16.gmra.mxu0 %v1481
          %v1639 = vpop.f32.mrf.mxu0
          %v1640 = vadd.f32 %v1573, %v1639
          %v1641 = vpop.f32.mrf.mxu0
          %v1642 = vadd.f32 %v1575, %v1641
          %1643 = vmatmul.bf16.gmra.mxu0 %v1482
          %v1644 = vpop.f32.mrf.mxu0
          %v1645 = vadd.f32 %v1578, %v1644
          %v1646 = vpop.f32.mrf.mxu0
          %v1647 = vadd.f32 %v1580, %v1646
          %1648 = vdwg.mxu0
          %v1649 = vld [vmem:[%s9] sm:$0x1]
          %v1651 = vperm.slane %v1649, 0
          %v1653 = vadd.f32 %v1640, %v1651
          %v1654 = vadd.f32 %v1642, %v1651
          %v1655 = vadd.f32 %v1645, %v1651
          %v1656 = vadd.f32 %v1647, %v1651
          %v1657 = vmax.f32 %v1653, 0.0
          %v1658 = vmax.f32 %v1654, 0.0
          %v1659 = vmax.f32 %v1655, 0.0
          %v1660 = vmax.f32 %v1656, 0.0
          %s1661 = scalar_lea.vmem [#allocation3], %s1275
          %1662 = vst [vmem:[%s1661] sm:$0xff] %v1657
          %1663 = vst [vmem:[%s1661 + $0x8] sm:$0xff] %v1658
          %1664 = vst [vmem:[%s1661 + $0x10] sm:$0xff] %v1659
          %1665 = vst [vmem:[%s1661 + $0x18] sm:$0xff] %v1660
          %v1666 = vld [vmem:[#allocation5 + $0x2] sm:$0x1]
          %v1667 = vadd.f32 %v1657, %v1658
          %v1668 = vadd.f32 %v1667, %v1659
          %v1669 = vadd.f32 %v1668, %v1660
          %v1670 = vrot.slane %v1669, 4
          %v1671 = vadd.f32 %v1669, %v1670
          %v1672 = vrot.slane %v1671, 2
          %v1673 = vadd.f32 %v1671, %v1672
          %v1674 = vrot.slane %v1673, 1
          %v1675 = vadd.f32 %v1673, %v1674
          %v1676 = vadd.f32 %v1666, %v1675
          %1677 = vst [vmem:[#allocation5 + $0x2] sm:$0x1] %v1676
          %v1678 = vld [vmem:[#allocation5 + $0x3] sm:$0x1]
          %v1679 = vmul.f32 %v1657, %v1657
          %v1680 = vmul.f32 %v1658, %v1658
          %v1681 = vmul.f32 %v1659, %v1659
          %v1682 = vmul.f32 %v1660, %v1660
          %v1683 = vadd.f32 %v1679, %v1680
          %v1684 = vadd.f32 %v1683, %v1681
          %v1685 = vadd.f32 %v1684, %v1682
          %v1686 = vrot.slane %v1685, 4
          %v1687 = vadd.f32 %v1685, %v1686
          %v1688 = vrot.slane %v1687, 2
          %v1689 = vadd.f32 %v1687, %v1688
          %v1690 = vrot.slane %v1689, 1
          %v1691 = vadd.f32 %v1689, %v1690
          %v1692 = vadd.f32 %v1678, %v1691
          %1693 = vst [vmem:[#allocation5 + $0x3] sm:$0x1] %v1692
        $region160: #{tpu_custom_call.1} parent=103 // pred_fallthru
          _
        %p1694 = scmp.eq.s32.totalorder %s49, 2
        // Predicated region
        $region161: #{tpu_custom_call.1} parent=103 // pred_check
          %p1695 = pneg %p1694
        $region162: #{tpu_custom_call.1} parent=103 // pred_check_branch
          %1697 = sbr.rel (%p1695) target = $region164
        $region163: #{tpu_custom_call.1} parent=103 // pred_region
          %s1698 = smul.u32 %s50, 32
          %s1699 = scalar_lea.vmem [#allocation3], %s1698
          %v1700 = vld [vmem:[%s1699] sm:$0xff]
          %v1701 = vld [vmem:[%s1699 + $0x8] sm:$0xff]
          %v1702 = vld [vmem:[%s1699 + $0x10] sm:$0xff]
          %v1703 = vld [vmem:[%s1699 + $0x18] sm:$0xff]
          %v1704 = vld [vmem:[#allocation5 + $0x2] sm:$0x1]
          %v1705 = vmul.f32 %v1704, 0.015625
          %v1706 = vld [vmem:[#allocation5 + $0x3] sm:$0x1]
          %v1707 = vmul.f32 %v1706, 0.015625
          %v1708 = vmul.f32 %v1705, %v1705
          %v1709 = vsub.f32 %v1707, %v1708
          %v1710 = vmax.f32 %v1709, 0.0
          %v1711 = vadd.f32 %v1710, 1e-05
          %v1712 = vrsqrt.pop %v1711
          %v1713 = vmul.f32 %v1712, %v1711
          %v1714 = vmul.f32 %v1713, %v1712
          %v1715 = vmul.f32 0.5, %v1714
          %v1716 = vsub.f32 1.5, %v1715
          %v1717 = vmul.f32 %v1712, %v1716
          %vm1718 = vweird.f32 %v1711
          %vm1719 = vweird.f32 %v1712
          %vm1720 = vmor %vm1718, %vm1719
          %v1721 = vsel %vm1720, %v1712, %v1717
          %v1722 = vperm.slane %v1705, 0
          %v1723 = vsub.f32 %v1700, %v1722
          %v1724 = vsub.f32 %v1701, %v1722
          %v1725 = vsub.f32 %v1702, %v1722
          %v1726 = vsub.f32 %v1703, %v1722
          %v1727 = vperm.slane %v1721, 0
          %v1728 = vmul.f32 %v1723, %v1727
          %v1729 = vmul.f32 %v1724, %v1727
          %v1730 = vmul.f32 %v1725, %v1727
          %v1731 = vmul.f32 %v1726, %v1727
          %v1732 = vld [vmem:[%s10] sm:$0x1]
          %v1734 = vperm.slane %v1732, 0
          %v1736 = vmul.f32 %v1728, %v1734
          %v1737 = vmul.f32 %v1729, %v1734
          %v1738 = vmul.f32 %v1730, %v1734
          %v1739 = vmul.f32 %v1731, %v1734
          %v1740 = vld [vmem:[%s11] sm:$0x1]
          %v1742 = vperm.slane %v1740, 0
          %v1744 = vadd.f32 %v1736, %v1742
          %v1745 = vadd.f32 %v1737, %v1742
          %v1746 = vadd.f32 %v1738, %v1742
          %v1747 = vadd.f32 %v1739, %v1742
          %1748 = vst [vmem:[%s1699] sm:$0xff] %v1744
          %1749 = vst [vmem:[%s1699 + $0x8] sm:$0xff] %v1745
          %1750 = vst [vmem:[%s1699 + $0x10] sm:$0xff] %v1746
          %1751 = vst [vmem:[%s1699 + $0x18] sm:$0xff] %v1747
          %v1752 = vpack.c.bf16 %v1744, %v1744
          %v1753 = vpack.c.bf16 %v1745, %v1745
          %v1754 = vpack.c.bf16 %v1746, %v1746
          %v1755 = vpack.c.bf16 %v1747, %v1747
          %v1756 = vlaneseq
          %v1757 = vand.u32 %v1756, 127
          %vm1758 = vcmp.eq.s32.totalorder %v1757, 32
          %vm1759 = vmpackc.low %vm1758, %vm1758
          %v1760 = vsel %vm1759, 1065369472, %v1752
          %v1761 = vsel %vm1759, 1065369472, %v1753
          %v1762 = vsel %vm1759, 1065369472, %v1754
          %v1763 = vsel %vm1759, 1065369472, %v1755
          %v1764 = vld [vmem:[%s785] sm:$0xf]
          %v1765 = vld [vmem:[%s785 + $0x4] sm:$0xf]
          %v1766 = vld [vmem:[%s785 + $0x8] sm:$0xf]
          %v1767 = vld [vmem:[%s785 + $0xc] sm:$0xf]
          %v1772 = vunpack.c.l.b16 %v1764
          %v1773 = vunpack.c.l.b16 %v1765
          %v1774 = vunpack.c.l.b16 %v1766
          %v1775 = vunpack.c.l.b16 %v1767
          %v1776 = vpack.c.b16 %v1773, %v1772
          %v1777 = vpack.c.b16 %v1775, %v1774
          %v1782 = vunpack.c.l.b16 %v1760
          %v1783 = vunpack.c.l.b16 %v1761
          %v1784 = vunpack.c.l.b16 %v1762
          %v1785 = vunpack.c.l.b16 %v1763
          %v1786 = vpack.c.b16 %v1783, %v1782
          %v1787 = vpack.c.b16 %v1785, %v1784
          %vm1790 = vcmask 261120
          %v1792 = vsel %vm1790, %v1776, 0
          %v1795 = vsel %vm1790, %v1777, 0
          %1797 = vmatpush.bf16.msra.mxu0 0
          %1798 = vmatpush.bf16.msra.mxu0 0
          %1799 = vmatpush.bf16.msra.mxu0 0
          %1800 = vmatpush.bf16.msra.mxu0 0
          %1801 = vmatpush.bf16.msra.mxu0 0
          %1802 = vmatpush.bf16.msra.mxu0 0
          %1803 = vmatpush.bf16.msra.mxu0 %v1787
          %1804 = vmatpush.bf16.msra.mxu0 %v1786
          %1805 = vmatmul.bf16.gmra.mxu0 %v1792
          %v1806 = vpop.f32.mrf.mxu0
          %v1807 = vadd.f32 0.0, %v1806
          %v1808 = vpop.f32.mrf.mxu0
          %v1809 = vadd.f32 0.0, %v1808
          %1810 = vmatmul.bf16.gmra.mxu0 %v1795
          %v1811 = vpop.f32.mrf.mxu0
          %v1812 = vadd.f32 0.0, %v1811
          %v1813 = vpop.f32.mrf.mxu0
          %v1814 = vadd.f32 0.0, %v1813
          %1815 = vdwg.mxu0
          %v1816 = vmax.f32 %v1807, 1.0
          %v1817 = vmax.f32 %v1809, 1.0
          %v1818 = vmax.f32 %v1812, 1.0
          %v1819 = vmax.f32 %v1814, 1.0
          %v1820 = vrcp.pop %v1816
          %v1821 = vmul.f32 %v1816, %v1820
          %v1822 = vsub.f32 1.0, %v1821
          %v1823 = vmul.f32 %v1820, %v1822
          %v1824 = vadd.f32 %v1820, %v1823
          %vm1825 = vweird.f32 %v1816
          %vm1826 = vweird.f32 %v1820
          %vm1827 = vmor %vm1825, %vm1826
          %v1828 = vsel %vm1827, %v1820, %v1824
          %v1829 = vand.u32 2147483647, %v1816
          %vm1830 = vcmp.eq.f32.partialorder %v1829, 8.507059e+37
          %v1831 = vand.u32 %v1816, 2147483648
          %v1832 = vor.u32 1.1754944e-38, %v1831
          %v1833 = vsel %vm1830, %v1832, %v1828
          %v1834 = vmul.f32 1.0, %v1833
          %v1835 = vrcp.pop %v1817
          %v1836 = vmul.f32 %v1817, %v1835
          %v1837 = vsub.f32 1.0, %v1836
          %v1838 = vmul.f32 %v1835, %v1837
          %v1839 = vadd.f32 %v1835, %v1838
          %vm1840 = vweird.f32 %v1817
          %vm1841 = vweird.f32 %v1835
          %vm1842 = vmor %vm1840, %vm1841
          %v1843 = vsel %vm1842, %v1835, %v1839
          %v1844 = vand.u32 2147483647, %v1817
          %vm1845 = vcmp.eq.f32.partialorder %v1844, 8.507059e+37
          %v1846 = vand.u32 %v1817, 2147483648
          %v1847 = vor.u32 1.1754944e-38, %v1846
          %v1848 = vsel %vm1845, %v1847, %v1843
          %v1849 = vmul.f32 1.0, %v1848
          %v1850 = vrcp.pop %v1818
          %v1851 = vmul.f32 %v1818, %v1850
          %v1852 = vsub.f32 1.0, %v1851
          %v1853 = vmul.f32 %v1850, %v1852
          %v1854 = vadd.f32 %v1850, %v1853
          %vm1855 = vweird.f32 %v1818
          %vm1856 = vweird.f32 %v1850
          %vm1857 = vmor %vm1855, %vm1856
          %v1858 = vsel %vm1857, %v1850, %v1854
          %v1859 = vand.u32 2147483647, %v1818
          %vm1860 = vcmp.eq.f32.partialorder %v1859, 8.507059e+37
          %v1861 = vand.u32 %v1818, 2147483648
          %v1862 = vor.u32 1.1754944e-38, %v1861
          %v1863 = vsel %vm1860, %v1862, %v1858
          %v1864 = vmul.f32 1.0, %v1863
          %v1865 = vrcp.pop %v1819
          %v1866 = vmul.f32 %v1819, %v1865
          %v1867 = vsub.f32 1.0, %v1866
          %v1868 = vmul.f32 %v1865, %v1867
          %v1869 = vadd.f32 %v1865, %v1868
          %vm1870 = vweird.f32 %v1819
          %vm1871 = vweird.f32 %v1865
          %vm1872 = vmor %vm1870, %vm1871
          %v1873 = vsel %vm1872, %v1865, %v1869
          %v1874 = vand.u32 2147483647, %v1819
          %vm1875 = vcmp.eq.f32.partialorder %v1874, 8.507059e+37
          %v1876 = vand.u32 %v1819, 2147483648
          %v1877 = vor.u32 1.1754944e-38, %v1876
          %v1878 = vsel %vm1875, %v1877, %v1873
          %v1879 = vmul.f32 1.0, %v1878
          %1881 = vset.pattern.permute.xlu0 32
          %1882 = vperm.xlu0 %1881, %v1834
          %v1883 = vpop.permute.xlu0 %1882
          %1886 = vset.pattern.permute.xlu0 32
          %1887 = vperm.xlu0 %1886, %v1849
          %v1888 = vpop.permute.xlu0 %1887
          %1891 = vset.pattern.permute.xlu0 32
          %1892 = vperm.xlu0 %1891, %v1864
          %v1893 = vpop.permute.xlu0 %1892
          %1896 = vset.pattern.permute.xlu0 32
          %1897 = vperm.xlu0 %1896, %v1879
          %v1898 = vpop.permute.xlu0 %1897
          %v1900 = vmul.f32 %v1807, %v1883
          %v1901 = vmul.f32 %v1809, %v1888
          %v1902 = vmul.f32 %v1812, %v1893
          %v1903 = vmul.f32 %v1814, %v1898
          %v1904 = vpack.c.bf16 %v1901, %v1900
          %v1905 = vpack.c.bf16 %v1903, %v1902
          %v1906 = vld [vmem:[#allocation17] sm:$0xf]
          %v1907 = vld [vmem:[#allocation17 + $0x4] sm:$0xf]
          %v1908 = vld [vmem:[#allocation17 + $0x8] sm:$0xf]
          %v1909 = vld [vmem:[#allocation17 + $0xc] sm:$0xf]
          %v1910 = vld [vmem:[#allocation17 + $0x10] sm:$0xf]
          %v1911 = vld [vmem:[#allocation17 + $0x14] sm:$0xf]
          %v1912 = vld [vmem:[#allocation17 + $0x18] sm:$0xf]
          %v1913 = vld [vmem:[#allocation17 + $0x1c] sm:$0xf]
          %v1914 = vld [vmem:[#allocation17 + $0x20] sm:$0xf]
          %v1915 = vld [vmem:[#allocation17 + $0x24] sm:$0xf]
          %v1916 = vld [vmem:[#allocation17 + $0x28] sm:$0xf]
          %v1917 = vld [vmem:[#allocation17 + $0x2c] sm:$0xf]
          %v1918 = vld [vmem:[#allocation17 + $0x30] sm:$0xf]
          %v1919 = vld [vmem:[#allocation17 + $0x34] sm:$0xf]
          %v1920 = vld [vmem:[#allocation17 + $0x38] sm:$0xf]
          %v1921 = vld [vmem:[#allocation17 + $0x3c] sm:$0xf]
          %v1922 = vld [vmem:[#allocation18] sm:$0xf]
          %v1923 = vld [vmem:[#allocation18 + $0x4] sm:$0xf]
          %v1924 = vld [vmem:[#allocation18 + $0x8] sm:$0xf]
          %v1925 = vld [vmem:[#allocation18 + $0xc] sm:$0xf]
          %v1926 = vld [vmem:[#allocation18 + $0x10] sm:$0xf]
          %v1927 = vld [vmem:[#allocation18 + $0x14] sm:$0xf]
          %v1928 = vld [vmem:[#allocation18 + $0x18] sm:$0xf]
          %v1929 = vld [vmem:[#allocation18 + $0x1c] sm:$0xf]
          %v1930 = vld [vmem:[#allocation18 + $0x20] sm:$0xf]
          %v1931 = vld [vmem:[#allocation18 + $0x24] sm:$0xf]
          %v1932 = vld [vmem:[#allocation18 + $0x28] sm:$0xf]
          %v1933 = vld [vmem:[#allocation18 + $0x2c] sm:$0xf]
          %v1934 = vld [vmem:[#allocation18 + $0x30] sm:$0xf]
          %v1935 = vld [vmem:[#allocation18 + $0x34] sm:$0xf]
          %v1936 = vld [vmem:[#allocation18 + $0x38] sm:$0xf]
          %v1937 = vld [vmem:[#allocation18 + $0x3c] sm:$0xf]
          %v1954 = vunpack.c.l.b16 %v1922
          %v1955 = vunpack.c.l.b16 %v1923
          %v1956 = vunpack.c.l.b16 %v1924
          %v1957 = vunpack.c.l.b16 %v1925
          %v1958 = vunpack.c.l.b16 %v1926
          %v1959 = vunpack.c.l.b16 %v1927
          %v1960 = vunpack.c.l.b16 %v1928
          %v1961 = vunpack.c.l.b16 %v1929
          %v1962 = vunpack.c.l.b16 %v1930
          %v1963 = vunpack.c.l.b16 %v1931
          %v1964 = vunpack.c.l.b16 %v1932
          %v1965 = vunpack.c.l.b16 %v1933
          %v1966 = vunpack.c.l.b16 %v1934
          %v1967 = vunpack.c.l.b16 %v1935
          %v1968 = vunpack.c.l.b16 %v1936
          %v1969 = vunpack.c.l.b16 %v1937
          %v1970 = vpack.c.b16 %v1955, %v1954
          %v1971 = vpack.c.b16 %v1957, %v1956
          %v1972 = vpack.c.b16 %v1959, %v1958
          %v1973 = vpack.c.b16 %v1961, %v1960
          %v1974 = vpack.c.b16 %v1963, %v1962
          %v1975 = vpack.c.b16 %v1965, %v1964
          %v1976 = vpack.c.b16 %v1967, %v1966
          %v1977 = vpack.c.b16 %v1969, %v1968
          %1986 = vmatpush.bf16.msra.mxu0 %v1977
          %1987 = vmatpush.bf16.msra.mxu0 %v1976
          %1988 = vmatpush.bf16.msra.mxu0 %v1975
          %1989 = vmatpush.bf16.msra.mxu0 %v1974
          %1990 = vmatpush.bf16.msra.mxu0 %v1973
          %1991 = vmatpush.bf16.msra.mxu0 %v1972
          %1992 = vmatpush.bf16.msra.mxu0 %v1971
          %1993 = vmatpush.bf16.msra.mxu0 %v1970
          %1994 = vmatmul.bf16.gmra.mxu0 %v1786
          %v1995 = vpop.f32.mrf.mxu0
          %v1996 = vadd.f32 0.0, %v1995
          %v1997 = vpop.f32.mrf.mxu0
          %v1998 = vadd.f32 0.0, %v1997
          %1999 = vmatmul.bf16.gmra.mxu0 %v1787
          %v2000 = vpop.f32.mrf.mxu0
          %v2001 = vadd.f32 0.0, %v2000
          %v2002 = vpop.f32.mrf.mxu0
          %v2003 = vadd.f32 0.0, %v2002
          %2004 = vdwg.mxu0
          %v2021 = vunpack.c.l.b16 %v1906
          %v2022 = vunpack.c.l.b16 %v1907
          %v2023 = vunpack.c.l.b16 %v1908
          %v2024 = vunpack.c.l.b16 %v1909
          %v2025 = vunpack.c.l.b16 %v1910
          %v2026 = vunpack.c.l.b16 %v1911
          %v2027 = vunpack.c.l.b16 %v1912
          %v2028 = vunpack.c.l.b16 %v1913
          %v2029 = vunpack.c.l.b16 %v1914
          %v2030 = vunpack.c.l.b16 %v1915
          %v2031 = vunpack.c.l.b16 %v1916
          %v2032 = vunpack.c.l.b16 %v1917
          %v2033 = vunpack.c.l.b16 %v1918
          %v2034 = vunpack.c.l.b16 %v1919
          %v2035 = vunpack.c.l.b16 %v1920
          %v2036 = vunpack.c.l.b16 %v1921
          %v2037 = vpack.c.b16 %v2022, %v2021
          %v2038 = vpack.c.b16 %v2024, %v2023
          %v2039 = vpack.c.b16 %v2026, %v2025
          %v2040 = vpack.c.b16 %v2028, %v2027
          %v2041 = vpack.c.b16 %v2030, %v2029
          %v2042 = vpack.c.b16 %v2032, %v2031
          %v2043 = vpack.c.b16 %v2034, %v2033
          %v2044 = vpack.c.b16 %v2036, %v2035
          %2053 = vmatpush.bf16.msra.mxu0 %v2044
          %2054 = vmatpush.bf16.msra.mxu0 %v2043
          %2055 = vmatpush.bf16.msra.mxu0 %v2042
          %2056 = vmatpush.bf16.msra.mxu0 %v2041
          %2057 = vmatpush.bf16.msra.mxu0 %v2040
          %2058 = vmatpush.bf16.msra.mxu0 %v2039
          %2059 = vmatpush.bf16.msra.mxu0 %v2038
          %2060 = vmatpush.bf16.msra.mxu0 %v2037
          %2061 = vmatmul.bf16.gmra.mxu0 %v1904
          %v2062 = vpop.f32.mrf.mxu0
          %v2063 = vadd.f32 %v1996, %v2062
          %v2064 = vpop.f32.mrf.mxu0
          %v2065 = vadd.f32 %v1998, %v2064
          %2066 = vmatmul.bf16.gmra.mxu0 %v1905
          %v2067 = vpop.f32.mrf.mxu0
          %v2068 = vadd.f32 %v2001, %v2067
          %v2069 = vpop.f32.mrf.mxu0
          %v2070 = vadd.f32 %v2003, %v2069
          %2071 = vdwg.mxu0
          %v2072 = vld [vmem:[%s14] sm:$0x1]
          %v2074 = vperm.slane %v2072, 0
          %v2076 = vadd.f32 %v2063, %v2074
          %v2077 = vadd.f32 %v2065, %v2074
          %v2078 = vadd.f32 %v2068, %v2074
          %v2079 = vadd.f32 %v2070, %v2074
          %v2080 = vmax.f32 %v2076, 0.0
          %v2081 = vmax.f32 %v2077, 0.0
          %v2082 = vmax.f32 %v2078, 0.0
          %v2083 = vmax.f32 %v2079, 0.0
          %s2084 = scalar_lea.vmem [#allocation4], %s1698
          %2085 = vst [vmem:[%s2084] sm:$0xff] %v2080
          %2086 = vst [vmem:[%s2084 + $0x8] sm:$0xff] %v2081
          %2087 = vst [vmem:[%s2084 + $0x10] sm:$0xff] %v2082
          %2088 = vst [vmem:[%s2084 + $0x18] sm:$0xff] %v2083
          %v2089 = vld [vmem:[#allocation5 + $0x4] sm:$0x1]
          %v2090 = vadd.f32 %v2080, %v2081
          %v2091 = vadd.f32 %v2090, %v2082
          %v2092 = vadd.f32 %v2091, %v2083
          %v2093 = vrot.slane %v2092, 4
          %v2094 = vadd.f32 %v2092, %v2093
          %v2095 = vrot.slane %v2094, 2
          %v2096 = vadd.f32 %v2094, %v2095
          %v2097 = vrot.slane %v2096, 1
          %v2098 = vadd.f32 %v2096, %v2097
          %v2099 = vadd.f32 %v2089, %v2098
          %2100 = vst [vmem:[#allocation5 + $0x4] sm:$0x1] %v2099
          %v2101 = vld [vmem:[#allocation5 + $0x5] sm:$0x1]
          %v2102 = vmul.f32 %v2080, %v2080
          %v2103 = vmul.f32 %v2081, %v2081
          %v2104 = vmul.f32 %v2082, %v2082
          %v2105 = vmul.f32 %v2083, %v2083
          %v2106 = vadd.f32 %v2102, %v2103
          %v2107 = vadd.f32 %v2106, %v2104
          %v2108 = vadd.f32 %v2107, %v2105
          %v2109 = vrot.slane %v2108, 4
          %v2110 = vadd.f32 %v2108, %v2109
          %v2111 = vrot.slane %v2110, 2
          %v2112 = vadd.f32 %v2110, %v2111
          %v2113 = vrot.slane %v2112, 1
          %v2114 = vadd.f32 %v2112, %v2113
          %v2115 = vadd.f32 %v2101, %v2114
          %2116 = vst [vmem:[#allocation5 + $0x5] sm:$0x1] %v2115
        $region164: #{tpu_custom_call.1} parent=103 // pred_fallthru
          _
        %p2117 = scmp.eq.s32.totalorder %s49, 3
        // Predicated region
        $region165: #{tpu_custom_call.1} parent=103 // pred_check
          %p2118 = pneg %p2117
        $region166: #{tpu_custom_call.1} parent=103 // pred_check_branch
          %2120 = sbr.rel (%p2118) target = $region168
        $region167: #{tpu_custom_call.1} parent=103 // pred_region
          %s2121 = smul.u32 %s50, 32
          %s2122 = scalar_lea.vmem [#allocation2], %s2121
          %v2123 = vld [vmem:[%s2122] sm:$0xff]
          %v2124 = vld [vmem:[%s2122 + $0x8] sm:$0xff]
          %v2125 = vld [vmem:[%s2122 + $0x10] sm:$0xff]
          %v2126 = vld [vmem:[%s2122 + $0x18] sm:$0xff]
          %v2127 = vpack.c.bf16 %v2124, %v2123
          %v2128 = vpack.c.bf16 %v2126, %v2125
          %s2129 = scalar_lea.vmem [#allocation3], %s2121
          %v2130 = vld [vmem:[%s2129] sm:$0xff]
          %v2131 = vld [vmem:[%s2129 + $0x8] sm:$0xff]
          %v2132 = vld [vmem:[%s2129 + $0x10] sm:$0xff]
          %v2133 = vld [vmem:[%s2129 + $0x18] sm:$0xff]
          %v2134 = vpack.c.bf16 %v2131, %v2130
          %v2135 = vpack.c.bf16 %v2133, %v2132
          %s2136 = scalar_lea.vmem [#allocation4], %s2121
          %v2137 = vld [vmem:[%s2136] sm:$0xff]
          %v2138 = vld [vmem:[%s2136 + $0x8] sm:$0xff]
          %v2139 = vld [vmem:[%s2136 + $0x10] sm:$0xff]
          %v2140 = vld [vmem:[%s2136 + $0x18] sm:$0xff]
          %v2141 = vld [vmem:[#allocation5 + $0x4] sm:$0x1]
          %v2142 = vmul.f32 %v2141, 0.015625
          %v2143 = vld [vmem:[#allocation5 + $0x5] sm:$0x1]
          %v2144 = vmul.f32 %v2143, 0.015625
          %v2145 = vmul.f32 %v2142, %v2142
          %v2146 = vsub.f32 %v2144, %v2145
          %v2147 = vmax.f32 %v2146, 0.0
          %v2148 = vadd.f32 %v2147, 1e-05
          %v2149 = vrsqrt.pop %v2148
          %v2150 = vmul.f32 %v2149, %v2148
          %v2151 = vmul.f32 %v2150, %v2149
          %v2152 = vmul.f32 0.5, %v2151
          %v2153 = vsub.f32 1.5, %v2152
          %v2154 = vmul.f32 %v2149, %v2153
          %vm2155 = vweird.f32 %v2148
          %vm2156 = vweird.f32 %v2149
          %vm2157 = vmor %vm2155, %vm2156
          %v2158 = vsel %vm2157, %v2149, %v2154
          %v2159 = vperm.slane %v2142, 0
          %v2160 = vsub.f32 %v2137, %v2159
          %v2161 = vsub.f32 %v2138, %v2159
          %v2162 = vsub.f32 %v2139, %v2159
          %v2163 = vsub.f32 %v2140, %v2159
          %v2164 = vperm.slane %v2158, 0
          %v2165 = vmul.f32 %v2160, %v2164
          %v2166 = vmul.f32 %v2161, %v2164
          %v2167 = vmul.f32 %v2162, %v2164
          %v2168 = vmul.f32 %v2163, %v2164
          %v2169 = vld [vmem:[%s15] sm:$0x1]
          %v2171 = vperm.slane %v2169, 0
          %v2173 = vmul.f32 %v2165, %v2171
          %v2174 = vmul.f32 %v2166, %v2171
          %v2175 = vmul.f32 %v2167, %v2171
          %v2176 = vmul.f32 %v2168, %v2171
          %v2177 = vld [vmem:[%s16] sm:$0x1]
          %v2179 = vperm.slane %v2177, 0
          %v2181 = vadd.f32 %v2173, %v2179
          %v2182 = vadd.f32 %v2174, %v2179
          %v2183 = vadd.f32 %v2175, %v2179
          %v2184 = vadd.f32 %v2176, %v2179
          %v2185 = vpack.c.bf16 %v2182, %v2181
          %v2186 = vpack.c.bf16 %v2184, %v2183
          %v2187 = vld [vmem:[#allocation20] sm:$0xf]
          %v2188 = vld [vmem:[#allocation20 + $0x4] sm:$0xf]
          %v2189 = vld [vmem:[#allocation20 + $0x8] sm:$0xf]
          %v2190 = vld [vmem:[#allocation20 + $0xc] sm:$0xf]
          %v2191 = vld [vmem:[#allocation20 + $0x10] sm:$0xf]
          %v2192 = vld [vmem:[#allocation20 + $0x14] sm:$0xf]
          %v2193 = vld [vmem:[#allocation20 + $0x18] sm:$0xf]
          %v2194 = vld [vmem:[#allocation20 + $0x1c] sm:$0xf]
          %v2195 = vld [vmem:[#allocation20 + $0x20] sm:$0xf]
          %v2196 = vld [vmem:[#allocation20 + $0x24] sm:$0xf]
          %v2197 = vld [vmem:[#allocation20 + $0x28] sm:$0xf]
          %v2198 = vld [vmem:[#allocation20 + $0x2c] sm:$0xf]
          %v2199 = vld [vmem:[#allocation20 + $0x30] sm:$0xf]
          %v2200 = vld [vmem:[#allocation20 + $0x34] sm:$0xf]
          %v2201 = vld [vmem:[#allocation20 + $0x38] sm:$0xf]
          %v2202 = vld [vmem:[#allocation20 + $0x3c] sm:$0xf]
          %v2203 = vld [vmem:[#allocation21] sm:$0xf]
          %v2204 = vld [vmem:[#allocation21 + $0x4] sm:$0xf]
          %v2205 = vld [vmem:[#allocation21 + $0x8] sm:$0xf]
          %v2206 = vld [vmem:[#allocation21 + $0xc] sm:$0xf]
          %v2207 = vld [vmem:[#allocation21 + $0x10] sm:$0xf]
          %v2208 = vld [vmem:[#allocation21 + $0x14] sm:$0xf]
          %v2209 = vld [vmem:[#allocation21 + $0x18] sm:$0xf]
          %v2210 = vld [vmem:[#allocation21 + $0x1c] sm:$0xf]
          %v2211 = vld [vmem:[#allocation21 + $0x20] sm:$0xf]
          %v2212 = vld [vmem:[#allocation21 + $0x24] sm:$0xf]
          %v2213 = vld [vmem:[#allocation21 + $0x28] sm:$0xf]
          %v2214 = vld [vmem:[#allocation21 + $0x2c] sm:$0xf]
          %v2215 = vld [vmem:[#allocation21 + $0x30] sm:$0xf]
          %v2216 = vld [vmem:[#allocation21 + $0x34] sm:$0xf]
          %v2217 = vld [vmem:[#allocation21 + $0x38] sm:$0xf]
          %v2218 = vld [vmem:[#allocation21 + $0x3c] sm:$0xf]
          %v2235 = vunpack.c.l.b16 %v2203
          %v2236 = vunpack.c.l.b16 %v2204
          %v2237 = vunpack.c.l.b16 %v2205
          %v2238 = vunpack.c.l.b16 %v2206
          %v2239 = vunpack.c.l.b16 %v2207
          %v2240 = vunpack.c.l.b16 %v2208
          %v2241 = vunpack.c.l.b16 %v2209
          %v2242 = vunpack.c.l.b16 %v2210
          %v2243 = vunpack.c.l.b16 %v2211
          %v2244 = vunpack.c.l.b16 %v2212
          %v2245 = vunpack.c.l.b16 %v2213
          %v2246 = vunpack.c.l.b16 %v2214
          %v2247 = vunpack.c.l.b16 %v2215
          %v2248 = vunpack.c.l.b16 %v2216
          %v2249 = vunpack.c.l.b16 %v2217
          %v2250 = vunpack.c.l.b16 %v2218
          %v2251 = vpack.c.b16 %v2236, %v2235
          %v2252 = vpack.c.b16 %v2238, %v2237
          %v2253 = vpack.c.b16 %v2240, %v2239
          %v2254 = vpack.c.b16 %v2242, %v2241
          %v2255 = vpack.c.b16 %v2244, %v2243
          %v2256 = vpack.c.b16 %v2246, %v2245
          %v2257 = vpack.c.b16 %v2248, %v2247
          %v2258 = vpack.c.b16 %v2250, %v2249
          %2267 = vmatpush.bf16.msra.mxu0 %v2258
          %2268 = vmatpush.bf16.msra.mxu0 %v2257
          %2269 = vmatpush.bf16.msra.mxu0 %v2256
          %2270 = vmatpush.bf16.msra.mxu0 %v2255
          %2271 = vmatpush.bf16.msra.mxu0 %v2254
          %2272 = vmatpush.bf16.msra.mxu0 %v2253
          %2273 = vmatpush.bf16.msra.mxu0 %v2252
          %2274 = vmatpush.bf16.msra.mxu0 %v2251
          %2275 = vmatmul.bf16.gmra.mxu0 %v2134
          %v2276 = vpop.f32.mrf.mxu0
          %v2277 = vadd.f32 0.0, %v2276
          %v2278 = vpop.f32.mrf.mxu0
          %v2279 = vadd.f32 0.0, %v2278
          %2280 = vmatmul.bf16.gmra.mxu0 %v2135
          %v2281 = vpop.f32.mrf.mxu0
          %v2282 = vadd.f32 0.0, %v2281
          %v2283 = vpop.f32.mrf.mxu0
          %v2284 = vadd.f32 0.0, %v2283
          %2285 = vdwg.mxu0
          %v2302 = vunpack.c.l.b16 %v2187
          %v2303 = vunpack.c.l.b16 %v2188
          %v2304 = vunpack.c.l.b16 %v2189
          %v2305 = vunpack.c.l.b16 %v2190
          %v2306 = vunpack.c.l.b16 %v2191
          %v2307 = vunpack.c.l.b16 %v2192
          %v2308 = vunpack.c.l.b16 %v2193
          %v2309 = vunpack.c.l.b16 %v2194
          %v2310 = vunpack.c.l.b16 %v2195
          %v2311 = vunpack.c.l.b16 %v2196
          %v2312 = vunpack.c.l.b16 %v2197
          %v2313 = vunpack.c.l.b16 %v2198
          %v2314 = vunpack.c.l.b16 %v2199
          %v2315 = vunpack.c.l.b16 %v2200
          %v2316 = vunpack.c.l.b16 %v2201
          %v2317 = vunpack.c.l.b16 %v2202
          %v2318 = vpack.c.b16 %v2303, %v2302
          %v2319 = vpack.c.b16 %v2305, %v2304
          %v2320 = vpack.c.b16 %v2307, %v2306
          %v2321 = vpack.c.b16 %v2309, %v2308
          %v2322 = vpack.c.b16 %v2311, %v2310
          %v2323 = vpack.c.b16 %v2313, %v2312
          %v2324 = vpack.c.b16 %v2315, %v2314
          %v2325 = vpack.c.b16 %v2317, %v2316
          %2334 = vmatpush.bf16.msra.mxu0 %v2325
          %2335 = vmatpush.bf16.msra.mxu0 %v2324
          %2336 = vmatpush.bf16.msra.mxu0 %v2323
          %2337 = vmatpush.bf16.msra.mxu0 %v2322
          %2338 = vmatpush.bf16.msra.mxu0 %v2321
          %2339 = vmatpush.bf16.msra.mxu0 %v2320
          %2340 = vmatpush.bf16.msra.mxu0 %v2319
          %2341 = vmatpush.bf16.msra.mxu0 %v2318
          %2342 = vmatmul.bf16.gmra.mxu0 %v2127
          %v2343 = vpop.f32.mrf.mxu0
          %v2344 = vadd.f32 %v2277, %v2343
          %v2345 = vpop.f32.mrf.mxu0
          %v2346 = vadd.f32 %v2279, %v2345
          %2347 = vmatmul.bf16.gmra.mxu0 %v2128
          %v2348 = vpop.f32.mrf.mxu0
          %v2349 = vadd.f32 %v2282, %v2348
          %v2350 = vpop.f32.mrf.mxu0
          %v2351 = vadd.f32 %v2284, %v2350
          %2352 = vdwg.mxu0
          %v2353 = vld [vmem:[#allocation23] sm:$0xf]
          %v2354 = vld [vmem:[#allocation23 + $0x4] sm:$0xf]
          %v2355 = vld [vmem:[#allocation23 + $0x8] sm:$0xf]
          %v2356 = vld [vmem:[#allocation23 + $0xc] sm:$0xf]
          %v2357 = vld [vmem:[#allocation23 + $0x10] sm:$0xf]
          %v2358 = vld [vmem:[#allocation23 + $0x14] sm:$0xf]
          %v2359 = vld [vmem:[#allocation23 + $0x18] sm:$0xf]
          %v2360 = vld [vmem:[#allocation23 + $0x1c] sm:$0xf]
          %v2361 = vld [vmem:[#allocation23 + $0x20] sm:$0xf]
          %v2362 = vld [vmem:[#allocation23 + $0x24] sm:$0xf]
          %v2363 = vld [vmem:[#allocation23 + $0x28] sm:$0xf]
          %v2364 = vld [vmem:[#allocation23 + $0x2c] sm:$0xf]
          %v2365 = vld [vmem:[#allocation23 + $0x30] sm:$0xf]
          %v2366 = vld [vmem:[#allocation23 + $0x34] sm:$0xf]
          %v2367 = vld [vmem:[#allocation23 + $0x38] sm:$0xf]
          %v2368 = vld [vmem:[#allocation23 + $0x3c] sm:$0xf]
          %v2385 = vunpack.c.l.b16 %v2353
          %v2386 = vunpack.c.l.b16 %v2354
          %v2387 = vunpack.c.l.b16 %v2355
          %v2388 = vunpack.c.l.b16 %v2356
          %v2389 = vunpack.c.l.b16 %v2357
          %v2390 = vunpack.c.l.b16 %v2358
          %v2391 = vunpack.c.l.b16 %v2359
          %v2392 = vunpack.c.l.b16 %v2360
          %v2393 = vunpack.c.l.b16 %v2361
          %v2394 = vunpack.c.l.b16 %v2362
          %v2395 = vunpack.c.l.b16 %v2363
          %v2396 = vunpack.c.l.b16 %v2364
          %v2397 = vunpack.c.l.b16 %v2365
          %v2398 = vunpack.c.l.b16 %v2366
          %v2399 = vunpack.c.l.b16 %v2367
          %v2400 = vunpack.c.l.b16 %v2368
          %v2401 = vpack.c.b16 %v2386, %v2385
          %v2402 = vpack.c.b16 %v2388, %v2387
          %v2403 = vpack.c.b16 %v2390, %v2389
          %v2404 = vpack.c.b16 %v2392, %v2391
          %v2405 = vpack.c.b16 %v2394, %v2393
          %v2406 = vpack.c.b16 %v2396, %v2395
          %v2407 = vpack.c.b16 %v2398, %v2397
          %v2408 = vpack.c.b16 %v2400, %v2399
          %2417 = vmatpush.bf16.msra.mxu0 %v2408
          %2418 = vmatpush.bf16.msra.mxu0 %v2407
          %2419 = vmatpush.bf16.msra.mxu0 %v2406
          %2420 = vmatpush.bf16.msra.mxu0 %v2405
          %2421 = vmatpush.bf16.msra.mxu0 %v2404
          %2422 = vmatpush.bf16.msra.mxu0 %v2403
          %2423 = vmatpush.bf16.msra.mxu0 %v2402
          %2424 = vmatpush.bf16.msra.mxu0 %v2401
          %2425 = vmatmul.bf16.gmra.mxu0 %v2185
          %v2426 = vpop.f32.mrf.mxu0
          %v2427 = vadd.f32 0.0, %v2426
          %v2428 = vpop.f32.mrf.mxu0
          %v2429 = vadd.f32 0.0, %v2428
          %2430 = vmatmul.bf16.gmra.mxu0 %v2186
          %v2431 = vpop.f32.mrf.mxu0
          %v2432 = vadd.f32 0.0, %v2431
          %v2433 = vpop.f32.mrf.mxu0
          %v2434 = vadd.f32 0.0, %v2433
          %2435 = vdwg.mxu0
          %v2436 = vadd.f32 %v2344, %v2427
          %v2437 = vadd.f32 %v2346, %v2429
          %v2438 = vadd.f32 %v2349, %v2432
          %v2439 = vadd.f32 %v2351, %v2434
          %v2440 = vld [vmem:[%s20] sm:$0x1]
          %v2442 = vperm.slane %v2440, 0
          %v2444 = vadd.f32 %v2436, %v2442
          %v2445 = vadd.f32 %v2437, %v2442
          %v2446 = vadd.f32 %v2438, %v2442
          %v2447 = vadd.f32 %v2439, %v2442
          %v2448 = vmax.f32 %v2444, 0.0
          %v2449 = vmax.f32 %v2445, 0.0
          %v2450 = vmax.f32 %v2446, 0.0
          %v2451 = vmax.f32 %v2447, 0.0
          %2452 = vst [vmem:[%s894] sm:$0xff] %v2448
          %2453 = vst [vmem:[%s894 + $0x8] sm:$0xff] %v2449
          %2454 = vst [vmem:[%s894 + $0x10] sm:$0xff] %v2450
          %2455 = vst [vmem:[%s894 + $0x18] sm:$0xff] %v2451
        $region168: #{tpu_custom_call.1} parent=103 // pred_fallthru
          _
        %s2456 = sand.u32 %s528, 1
        %s2457 = scalar_lea.sflag [#allocation8], %s2456
        %s2458 = sand.u32 %s528, 1
        %s2459 = smul.addr %s2458, 32
        %s2460 = scalar_lea.vmem [#allocation24], %s2459
        // Predicated region
        $region169: #{tpu_custom_call.1} parent=103 // pred_check
          %p2461 = pneg %p538
        $region170: #{tpu_custom_call.1} parent=103 // pred_check_branch
          %2463 = sbr.rel (%p2461) target = $region172
        $region171: #{tpu_custom_call.1} parent=103 // pred_region
          %p2464 = scmp.eq.s32.totalorder %s49, 3
          %s2465 = scalar_select %p2464, %s50, 0
          %2467 = vsyncadd %s2457, 0
          %s2468 = smul.addr %s2465, 4
          %s2469 = smul.addr %s2468, 8
          %s2470 = scalar_lea.hbm %s21, %s2469
          %s2471 = sshll.u32 %s2460, 4
          %s2472 = int_to_ptr.vmem [resolvable:$true] %s2471
          %s2473 = sshll.u32 %s2470, 4
          %s2474 = int_to_ptr.hbm [resolvable:$true] %s2473
          %2479 = dma.vmem_to_hbm [thread:$0]  %s2472, 512, %s2474, %s2457, 128, 128, 8
        $region172: #{tpu_custom_call.1} parent=103 // pred_fallthru
          _
      $region104: #{tpu_custom_call.1} parent=5 // pred_fallthru
        _
      %p2480 = scmp.le.s32.totalorder 2, %s40
      // Predicated region
      $region173: #{tpu_custom_call.1} parent=5 // pred_check
        %p2481 = pneg %p2480
      $region174: #{tpu_custom_call.1} parent=5 // pred_check_branch
        %2483 = sbr.rel (%p2481) target = $region176
      $region175: #{tpu_custom_call.1} parent=5 // pred_region
        %s2484 = ssub.s32 %s40, 2
        // Predicated region
        $region177: #{tpu_custom_call.1} parent=175 // pred_check
          %p2485 = pneg %p544
        $region178: #{tpu_custom_call.1} parent=175 // pred_check_branch
          %2487 = sbr.rel (%p2485) target = $region180
        $region179: #{tpu_custom_call.1} parent=175 // pred_region
          %s2488 = sand.u32 %s529, 1
          %s2489 = scalar_lea.sflag [#allocation8], %s2488
          %s2490 = sand.u32 %s529, 1
          %s2491 = smul.addr %s2490, 32
          %s2492 = scalar_lea.vmem [#allocation24], %s2491
          %2494 = dma.done %s2489, 512
        $region180: #{tpu_custom_call.1} parent=175 // pred_fallthru
          _
      $region176: #{tpu_custom_call.1} parent=5 // pred_fallthru
        _
    $region6: #{tpu_custom_call.1} parent=1 // loop_footer
      %s44 = sadd.s32 1, %s40
    $region7: #{tpu_custom_call.1} parent=1 // loop_footer_branch
      %39 = sbr.rel target = $region3
    $region8: #{tpu_custom_call.1} parent=1 // loop_exit
      _
    %2495 = vsyncpa [#allocation7], 1
    %s2496 = scalar_lea.sflag [#allocation7], 1
    %2497 = vsyncpa %s2496, 1
    %2498 = vsyncpa [#allocation10], 1
    %s2499 = scalar_lea.sflag [#allocation10], 1
    %2500 = vsyncpa %s2499, 1
    %2501 = vsyncpa [#allocation13], 1
    %2502 = vsyncpa [#allocation16], 1
    %2503 = vsyncpa [#allocation19], 1
    %2504 = vsyncpa [#allocation22], 1
    %2505 = vsyncpa [#allocation8], 1
    %s2506 = scalar_lea.sflag [#allocation8], 1
    %2507 = vsyncpa %s2506, 1

</llo_original>
